<compile_context>
chip_gen: v6e
topology: v6e:2x2x1
jax: 0.10.0
libtpu: 0.0.40
codegen_flags: <defaults>
</compile_context>

<pallas_src>
import math

import jax
import jax.numpy as jnp
from jax.experimental import pallas as pl
from jax.experimental.pallas import tpu as pltpu

# ---- problem sizes (small, consistent with the module's forward) -------------
N, T, S, D = 2, 8, 16, 32      # batch, tgt len, memory len, input_dim
H = 4                          # num_heads
DH = D // H                    # head dim
FF = 64                        # dim_feedforward (small for the test)
EPS = 1e-5                     # nn.LayerNorm default eps
NT, NS = N * T, N * S
NEG = jnp.float32(-1e30)       # additive mask value

assert D % H == 0

# ---- packed constant-slab layout ----------------------------------------------
# One (CONST_ROWS, CONST_COLS) f32 slab holds every weight, bias, LayerNorm
# vector and both attention masks -> 3 pallas_call inputs total.
BIAS_COL = 64                  # feature-major projection biases live in col 64

# feature-major projections (stored (out, in), consumed as W @ act^T):
FM_W = {"s_qkv": (0, 3 * D), "c_q": (96, D), "c_kv": (128, 2 * D)}
# token-major projections (stored transposed, (in, out)):
TM_W = {"s_o": (192, D, D), "c_o": (224, D, D),
        "f_1": (256, D, FF), "f_2": (288, FF, D)}
# single-row vectors (token-major biases + LayerNorm gamma/beta):
VEC = {"s_o": (352, D), "c_o": (353, D), "f_1": (354, FF), "f_2": (355, D),
       "g1": (356, D), "be1": (357, D), "g2": (358, D), "be2": (359, D),
       "g3": (360, D), "be3": (361, D)}
MASK_SELF_ROW = 368            # rows 368:384, cols 0:NT  -> (NT, NT)
MASK_CROSS_ROW = 384           # rows 384:400, cols 0:NS  -> (NT, NS)
CONST_ROWS, CONST_COLS = 400, 65


# ---- Pallas kernel -------------------------------------------------------------
def decoder_layer_kernel(x_ref, mem_ref, c_ref, out_ref):
    # x_ref: (NT, D) token-major targets, mem_ref: (NS, D) encoder memory,
    # c_ref: (CONST_ROWS, CONST_COLS) packed params/masks, out_ref: (NT, D).
    x0 = x_ref[...]
    mem = mem_ref[...]

    scale = jnp.float32(1.0 / math.sqrt(DH))
    inv_d = jnp.float32(1.0 / D)
    ones_d = jnp.ones((D, 1), jnp.float32)     # MXU reduction vector for LN

    mask_self = c_ref[MASK_SELF_ROW:MASK_SELF_ROW + NT, 0:NT]      # (NT, NT)
    mask_cross = c_ref[MASK_CROSS_ROW:MASK_CROSS_ROW + NT, 0:NS]   # (NT, NS)

    def vec(name):
        row, width = VEC[name]
        return c_ref[row:row + 1, 0:width]                         # (1, width)

    def proj_fm(name, act):
        # Feature-major projection: (out, in) x (L, in) -> (out, L).
        # trans-B dot_general, so the token-major activation needs no transpose.
        off, rows = FM_W[name]
        w = c_ref[off:off + rows, 0:D]
        b = c_ref[off:off + rows, BIAS_COL:BIAS_COL + 1]           # (rows, 1)
        return jnp.einsum("oi,ti->ot", w, act,
                          preferred_element_type=jnp.float32) + b

    def proj_tm(name, act):
        # Token-major projection: (L, in) @ (in, out) + (1, out).
        off, rows, cols = TM_W[name]
        w = c_ref[off:off + rows, 0:cols]
        return jnp.dot(act, w, preferred_element_type=jnp.float32) + vec(name)

    def layernorm(z, gname, bname):
        # One-pass stats on the MXU: sum(z) and sum(z*z) via (L,D)@(D,1) dots.
        s1 = jnp.dot(z, ones_d, preferred_element_type=jnp.float32)
        s2 = jnp.dot(z * z, ones_d, preferred_element_type=jnp.float32)
        mu = s1 * inv_d
        var = s2 * inv_d - mu * mu
        zn = (z - mu) * jax.lax.rsqrt(var + EPS)
        return zn * vec(gname) + vec(bname)

    def attention(qT, kT, vT, mask):
        # qT: (D, Lq), kT/vT: (D, Lk) feature-major; mask: (Lq, Lk) additive.
        lq, lk = qT.shape[-1], kT.shape[-1]
        q3 = qT.reshape(H, DH, lq)             # free sublane re-tile
        k3 = kT.reshape(H, DH, lk)
        v3 = vT.reshape(H, DH, lk)
        qh = jnp.transpose(q3, (0, 2, 1))      # (H, Lq, DH) - tiny XLU transpose
        s = jnp.einsum("hqd,hdk->hqk", qh, k3,
                       preferred_element_type=jnp.float32) * scale + mask
        m = jnp.max(s, axis=-1, keepdims=True)
        e = jnp.exp(s - m)
        p = e * pl.reciprocal(jnp.sum(e, axis=-1, keepdims=True), approx=True)
        o3 = jnp.einsum("hdk,hqk->hdq", v3, p,
                        preferred_element_type=jnp.float32)        # (H, DH, Lq)
        return o3.reshape(D, lq).T             # (Lq, D) token-major

    # 1) masked self-attention + residual + norm1 -------------------------------
    qkv = proj_fm("s_qkv", x0)                               # (3D, NT) fused QKV
    attn = attention(qkv[0:D], qkv[D:2 * D], qkv[2 * D:3 * D], mask_self)
    x1 = layernorm(x0 + proj_tm("s_o", attn), "g1", "be1")   # (NT, D)

    # 2) cross-attention over encoder memory + residual + norm2 -----------------
    q2 = proj_fm("c_q", x1)                                  # (D, NT)
    kv2 = proj_fm("c_kv", mem)                               # (2D, NS) fused K/V
    attn = attention(q2, kv2[0:D], kv2[D:2 * D], mask_cross)
    x2 = layernorm(x1 + proj_tm("c_o", attn), "g2", "be2")

    # 3) feed-forward (Linear -> ReLU -> Linear) + residual + norm3 -------------
    hid = jnp.maximum(proj_tm("f_1", x2), 0.0)               # (NT, FF)
    x3 = layernorm(x2 + proj_tm("f_2", hid), "g3", "be3")

    out_ref[...] = x3                                        # lane-dense (NT, D)


# ---- constant-slab packing (done ONCE, outside the jitted forward) -------------
def build_const_slab(params, tgt_mask):
    c = jnp.zeros((CONST_ROWS, CONST_COLS), jnp.float32)

    def put(c, r0, c0, mat):
        return c.at[r0:r0 + mat.shape[0], c0:c0 + mat.shape[1]].set(mat)

    # feature-major weights (out, in) + their bias columns
    fm_vals = {
        "s_qkv": (jnp.concatenate([params['s_wq'], params['s_wk'],
                                   params['s_wv']], axis=0),
                  jnp.concatenate([params['s_bq'], params['s_bk'],
                                   params['s_bv']])),
        "c_q": (params['c_wq'], params['c_bq']),
        "c_kv": (jnp.concatenate([params['c_wk'], params['c_wv']], axis=0),
                 jnp.concatenate([params['c_bk'], params['c_bv']])),
    }
    for name, (w, b) in fm_vals.items():
        off, _ = FM_W[name]
        c = put(c, off, 0, w)
        c = put(c, off, BIAS_COL, b[:, None])

    # token-major weights, stored transposed (in, out)
    tm_vals = {"s_o": params['s_wo'].T, "c_o": params['c_wo'].T,
               "f_1": params['f_w1'].T, "f_2": params['f_w2'].T}
    for name, wt in tm_vals.items():
        off, _, _ = TM_W[name]
        c = put(c, off, 0, wt)

    # single-row vectors (biases + LayerNorm params)
    vec_vals = {"s_o": params['s_bo'], "c_o": params['c_bo'],
                "f_1": params['f_b1'], "f_2": params['f_b2'],
                "g1": params['g1'], "be1": params['be1'],
                "g2": params['g2'], "be2": params['be2'],
                "g3": params['g3'], "be3": params['be3']}
    for name, v in vec_vals.items():
        row, _ = VEC[name]
        c = put(c, row, 0, v[None, :])

    # additive masks: causal + block-diagonal (self), block-diagonal (cross)
    bt = jnp.arange(NT) // T
    bs = jnp.arange(NS) // S
    allow_self = (bt[:, None] == bt[None, :]) & jnp.tile(tgt_mask != 0, (N, N))
    allow_cross = bt[:, None] == bs[None, :]
    mask_self = jnp.where(allow_self, 0.0, NEG).astype(jnp.float32)
    mask_cross = jnp.where(allow_cross, 0.0, NEG).astype(jnp.float32)
    c = put(c, MASK_SELF_ROW, 0, mask_self)
    c = put(c, MASK_CROSS_ROW, 0, mask_cross)
    return c


# ---- jitted forward: only reshapes + one pallas_call ----------------------------
@jax.jit
def decoder_layer_forward(tgt, memory, const_slab):
    x = tgt.reshape(NT, D)          # plain reshape: no XLA transpose kernels
    mem = memory.reshape(NS, D)
    vmem = pl.BlockSpec(memory_space=pltpu.MemorySpace.VMEM)
    out = pl.pallas_call(
        decoder_layer_kernel,
        out_shape=jax.ShapeDtypeStruct((NT, D), jnp.float32),
        in_specs=[vmem, vmem, vmem],
        out_specs=vmem,
    )(x, mem, const_slab)
    return out.reshape(N, T, D)


# ---- pure-JAX reference (PyTorch semantics) -------------------------------------
def _ref_ln(x, g, b):
    mu = jnp.mean(x, axis=-1, keepdims=True)
    var = jnp.mean((x - mu) ** 2, axis=-1, keepdims=True)
    return (x - mu) * jax.lax.rsqrt(var + EPS) * g + b


def _ref_mha(x_q, x_kv, wq, bq, wk, bk, wv, bv, wo, bo, mask_bias=None):
    q = x_q @ wq.T + bq
    k = x_kv @ wk.T + bk
    v = x_kv @ wv.T + bv
    Tq, Tk = x_q.shape[0], x_kv.shape[0]
    qh = q.reshape(Tq, H, DH).transpose(1, 0, 2)
    kh = k.reshape(Tk, H, DH).transpose(1, 0, 2)
    vh = v.reshape(Tk, H, DH).transpose(1, 0, 2)
    s = jnp.einsum('hqd,hkd->hqk', qh, kh) / math.sqrt(DH)
    if mask_bias is not None:
        s = s + mask_bias
    s_max = jnp.max(s, axis=-1, keepdims=True)
    e = jnp.exp(s - s_max)
    p = e / jnp.sum(e, axis=-1, keepdims=True)
    o = jnp.einsum('hqk,hkd->hqd', p, vh).transpose(1, 0, 2).reshape(Tq, D)
    return o @ wo.T + bo


def _ref_decoder_layer(x, mem, tgt_mask, p):
    mask_bias = jnp.where(tgt_mask == 0, jnp.float32(-1e30), jnp.float32(0.0))
    t2 = _ref_mha(x, x, p['s_wq'], p['s_bq'], p['s_wk'], p['s_bk'],
                  p['s_wv'], p['s_bv'], p['s_wo'], p['s_bo'], mask_bias)
    x = _ref_ln(x + t2, p['g1'], p['be1'])
    t2 = _ref_mha(x, mem, p['c_wq'], p['c_bq'], p['c_wk'], p['c_bk'],
                  p['c_wv'], p['c_bv'], p['c_wo'], p['c_bo'], None)
    x = _ref_ln(x + t2, p['g2'], p['be2'])
    h = jnp.maximum(x @ p['f_w1'].T + p['f_b1'], 0.0)
    t2 = h @ p['f_w2'].T + p['f_b2']
    x = _ref_ln(x + t2, p['g3'], p['be3'])
    return x


# ---- deterministic parameter init (PyTorch (out, in) weight layout) ------------
def init_params(key):
    keys = jax.random.split(key, 20)
    it = iter(range(20))

    def lin(out_f, in_f):
        w = jax.random.normal(keys[next(it)], (out_f, in_f), jnp.float32) * 0.05
        b = jax.random.normal(keys[next(it)], (out_f,), jnp.float32) * 0.01
        return w, b

    p = {}
    p['s_wq'], p['s_bq'] = lin(D, D)
    p['s_wk'], p['s_bk'] = lin(D, D)
    p['s_wv'], p['s_bv'] = lin(D, D)
    p['s_wo'], p['s_bo'] = lin(D, D)
    p['c_wq'], p['c_bq'] = lin(D, D)
    p['c_wk'], p['c_bk'] = lin(D, D)
    p['c_wv'], p['c_bv'] = lin(D, D)
    p['c_wo'], p['c_bo'] = lin(D, D)
    p['f_w1'], p['f_b1'] = lin(FF, D)
    p['f_w2'], p['f_b2'] = lin(D, FF)
    for i in (1, 2, 3):
        p[f'g{i}'] = jnp.ones((D,), jnp.float32)
        p[f'be{i}'] = jnp.zeros((D,), jnp.float32)
    return p


if __name__ == "__main__":
    key = jax.random.PRNGKey(0)
    k_tgt, k_mem, k_par = jax.random.split(key, 3)

    tgt = jax.random.normal(k_tgt, (N, T, D), jnp.float32)
    memory = jax.random.normal(k_mem, (N, S, D), jnp.float32)
    # causal target mask (T, T): 1 = attend, 0 = masked
    tgt_mask = jnp.tril(jnp.ones((T, T), jnp.float32))

    params = init_params(k_par)
    const_slab = build_const_slab(params, tgt_mask)   # built once, reused

    out = decoder_layer_forward(tgt, memory, const_slab)
    out = jax.block_until_ready(out)

    ref = jax.vmap(lambda x, m: _ref_decoder_layer(x, m, tgt_mask, params))(
        tgt, memory)
    ref = jax.block_until_ready(ref)

    assert out.shape == (N, T, D)
    assert not bool(jnp.any(jnp.isnan(out)))
    assert bool(jnp.allclose(out, ref, atol=2e-2, rtol=2e-2))

    print("KERNEL_OK")
</pallas_src>

<mosaic_0001>
module attributes {stable_mosaic.version = 11 : i64} {
  func.func @decoder_layer_kernel(%arg0: memref<16x32xf32, #tpu.memory_space<vmem>>, %arg1: memref<32x32xf32, #tpu.memory_space<vmem>>, %arg2: memref<400x65xf32, #tpu.memory_space<vmem>>, %arg3: memref<16x32xf32, #tpu.memory_space<vmem>>) attributes {dimension_semantics = [], scalar_prefetch = 0 : i64, scratch_operands = 0 : i64, tpu.core_type = #tpu.core_type<tc>} {
    %c0 = arith.constant 0 : index
    %c0_0 = arith.constant 0 : index
    %0 = vector.load %arg0[%c0, %c0_0] : memref<16x32xf32, #tpu.memory_space<vmem>>, vector<16x32xf32>
    %c0_1 = arith.constant 0 : index
    %c0_2 = arith.constant 0 : index
    %1 = vector.load %arg1[%c0_1, %c0_2] : memref<32x32xf32, #tpu.memory_space<vmem>>, vector<32x32xf32>
    %cst = arith.constant 1.000000e+00 : f32
    %2 = vector.broadcast %cst : f32 to vector<32x1xf32>
    %c368 = arith.constant 368 : index
    %c0_3 = arith.constant 0 : index
    %3 = vector.load %arg2[%c368, %c0_3] : memref<400x65xf32, #tpu.memory_space<vmem>>, vector<16x16xf32>
    %c384 = arith.constant 384 : index
    %c0_4 = arith.constant 0 : index
    %4 = vector.load %arg2[%c384, %c0_4] : memref<400x65xf32, #tpu.memory_space<vmem>>, vector<16x32xf32>
    %c0_5 = arith.constant 0 : index
    %c0_6 = arith.constant 0 : index
    %5 = vector.load %arg2[%c0_5, %c0_6] : memref<400x65xf32, #tpu.memory_space<vmem>>, vector<96x32xf32>
    %c0_7 = arith.constant 0 : index
    %c64 = arith.constant 64 : index
    %6 = vector.load %arg2[%c0_7, %c64] : memref<400x65xf32, #tpu.memory_space<vmem>>, vector<96x1xf32>
    "tpu.trace_start"() <{level = 10 : i32, message = "oi,ti->ot"}> : () -> ()
    %cst_8 = arith.constant dense<0.000000e+00> : vector<96x16xf32>
    %7 = tpu.matmul %5, %0, %cst_8 {dimension_numbers = #tpu.dot_dimension_numbers<[1], [1], [0], [0], [0, 0, 1, 0], [], []>} : vector<96x32xf32>, vector<16x32xf32>, vector<96x16xf32> -> vector<96x16xf32>
    "tpu.trace_stop"() : () -> ()
    %8 = vector.broadcast %6 : vector<96x1xf32> to vector<96x16xf32>
    %9 = arith.addf %7, %8 : vector<96x16xf32>
    %10 = vector.extract_strided_slice %9 {offsets = [0, 0], sizes = [32, 16], strides = [1, 1]} : vector<96x16xf32> to vector<32x16xf32>
    %11 = vector.extract_strided_slice %9 {offsets = [32, 0], sizes = [32, 16], strides = [1, 1]} : vector<96x16xf32> to vector<32x16xf32>
    %12 = vector.extract_strided_slice %9 {offsets = [64, 0], sizes = [32, 16], strides = [1, 1]} : vector<96x16xf32> to vector<32x16xf32>
    %13 = vector.shape_cast %10 : vector<32x16xf32> to vector<4x8x16xf32>
    %14 = vector.shape_cast %11 : vector<32x16xf32> to vector<4x8x16xf32>
    %15 = vector.shape_cast %12 : vector<32x16xf32> to vector<4x8x16xf32>
    %16 = tpu.transpose %13, [0, 2, 1] : vector<4x8x16xf32> -> vector<4x16x8xf32>
    "tpu.trace_start"() <{level = 10 : i32, message = "hqd,hdk->hqk"}> : () -> ()
    %cst_9 = arith.constant dense<0.000000e+00> : vector<4x16x16xf32>
    %17 = tpu.matmul %16, %14, %cst_9 {dimension_numbers = #tpu.dot_dimension_numbers<[2], [1], [1], [2], [0, 0, 0, 1, 1, 2], [0], [0]>} : vector<4x16x8xf32>, vector<4x8x16xf32>, vector<4x16x16xf32> -> vector<4x16x16xf32>
    "tpu.trace_stop"() : () -> ()
    %cst_10 = arith.constant 0.353553385 : f32
    %18 = vector.broadcast %cst_10 : f32 to vector<4x16x16xf32>
    %19 = arith.mulf %17, %18 : vector<4x16x16xf32>
    %20 = vector.shape_cast %3 : vector<16x16xf32> to vector<1x16x16xf32>
    %21 = vector.broadcast %20 : vector<1x16x16xf32> to vector<4x16x16xf32>
    %22 = arith.addf %19, %21 : vector<4x16x16xf32>
    %cst_11 = arith.constant dense<0xFF800000> : vector<4x16xf32>
    %23 = vector.multi_reduction <maximumf>, %22, %cst_11 [2] : vector<4x16x16xf32> to vector<4x16xf32>
    %24 = vector.shape_cast %23 : vector<4x16xf32> to vector<4x16x1xf32>
    %25 = vector.broadcast %24 : vector<4x16x1xf32> to vector<4x16x16xf32>
    %26 = arith.subf %22, %25 : vector<4x16x16xf32>
    %27 = math.exp %26 : vector<4x16x16xf32>
    %cst_12 = arith.constant dense<0.000000e+00> : vector<4x16xf32>
    %28 = vector.multi_reduction <add>, %27, %cst_12 [2] : vector<4x16x16xf32> to vector<4x16xf32>
    %29 = vector.shape_cast %28 : vector<4x16xf32> to vector<4x16x1xf32>
    %30 = tpu.reciprocal %29 {approx = true} : vector<4x16x1xf32> -> vector<4x16x1xf32>
    %31 = vector.broadcast %30 : vector<4x16x1xf32> to vector<4x16x16xf32>
    %32 = arith.mulf %27, %31 : vector<4x16x16xf32>
    "tpu.trace_start"() <{level = 10 : i32, message = "hdk,hqk->hdq"}> : () -> ()
    %cst_13 = arith.constant dense<0.000000e+00> : vector<4x8x16xf32>
    %33 = tpu.matmul %15, %32, %cst_13 {dimension_numbers = #tpu.dot_dimension_numbers<[2], [2], [1], [1], [0, 0, 0, 1, 1, 1], [0], [0]>} : vector<4x8x16xf32>, vector<4x16x16xf32>, vector<4x8x16xf32> -> vector<4x8x16xf32>
    "tpu.trace_stop"() : () -> ()
    %34 = vector.shape_cast %33 : vector<4x8x16xf32> to vector<32x16xf32>
    %35 = tpu.transpose %34, [1, 0] : vector<32x16xf32> -> vector<16x32xf32>
    %c192 = arith.constant 192 : index
    %c0_14 = arith.constant 0 : index
    %36 = vector.load %arg2[%c192, %c0_14] : memref<400x65xf32, #tpu.memory_space<vmem>>, vector<32x32xf32>
    %cst_15 = arith.constant dense<0.000000e+00> : vector<16x32xf32>
    %37 = tpu.matmul %35, %36, %cst_15 {dimension_numbers = #tpu.dot_dimension_numbers<[1], [0], [0], [1], [0, 0, 1, 1], [], []>} : vector<16x32xf32>, vector<32x32xf32>, vector<16x32xf32> -> vector<16x32xf32>
    %c352 = arith.constant 352 : index
    %c0_16 = arith.constant 0 : index
    %38 = vector.load %arg2[%c352, %c0_16] : memref<400x65xf32, #tpu.memory_space<vmem>>, vector<1x32xf32>
    %39 = vector.broadcast %38 : vector<1x32xf32> to vector<16x32xf32>
    %40 = arith.addf %37, %39 : vector<16x32xf32>
    %41 = arith.addf %0, %40 : vector<16x32xf32>
    %cst_17 = arith.constant dense<0.000000e+00> : vector<16x1xf32>
    %42 = tpu.matmul %41, %2, %cst_17 {dimension_numbers = #tpu.dot_dimension_numbers<[1], [0], [0], [1], [0, 0, 1, 1], [], []>} : vector<16x32xf32>, vector<32x1xf32>, vector<16x1xf32> -> vector<16x1xf32>
    %43 = arith.mulf %41, %41 : vector<16x32xf32>
    %cst_18 = arith.constant dense<0.000000e+00> : vector<16x1xf32>
    %44 = tpu.matmul %43, %2, %cst_18 {dimension_numbers = #tpu.dot_dimension_numbers<[1], [0], [0], [1], [0, 0, 1, 1], [], []>} : vector<16x32xf32>, vector<32x1xf32>, vector<16x1xf32> -> vector<16x1xf32>
    %cst_19 = arith.constant 3.125000e-02 : f32
    %45 = vector.broadcast %cst_19 : f32 to vector<16x1xf32>
    %46 = arith.mulf %42, %45 : vector<16x1xf32>
    %cst_20 = arith.constant 3.125000e-02 : f32
    %47 = vector.broadcast %cst_20 : f32 to vector<16x1xf32>
    %48 = arith.mulf %44, %47 : vector<16x1xf32>
    %49 = arith.mulf %46, %46 : vector<16x1xf32>
    %50 = arith.subf %48, %49 : vector<16x1xf32>
    %51 = vector.broadcast %46 : vector<16x1xf32> to vector<16x32xf32>
    %52 = arith.subf %41, %51 : vector<16x32xf32>
    %cst_21 = arith.constant 9.99999974E-6 : f32
    %53 = vector.broadcast %cst_21 : f32 to vector<16x1xf32>
    %54 = arith.addf %50, %53 : vector<16x1xf32>
    %55 = math.rsqrt %54 : vector<16x1xf32>
    %56 = vector.broadcast %55 : vector<16x1xf32> to vector<16x32xf32>
    %57 = arith.mulf %52, %56 : vector<16x32xf32>
    %c356 = arith.constant 356 : index
    %c0_22 = arith.constant 0 : index
    %58 = vector.load %arg2[%c356, %c0_22] : memref<400x65xf32, #tpu.memory_space<vmem>>, vector<1x32xf32>
    %59 = vector.broadcast %58 : vector<1x32xf32> to vector<16x32xf32>
    %60 = arith.mulf %57, %59 : vector<16x32xf32>
    %c357 = arith.constant 357 : index
    %c0_23 = arith.constant 0 : index
    %61 = vector.load %arg2[%c357, %c0_23] : memref<400x65xf32, #tpu.memory_space<vmem>>, vector<1x32xf32>
    %62 = vector.broadcast %61 : vector<1x32xf32> to vector<16x32xf32>
    %63 = arith.addf %60, %62 : vector<16x32xf32>
    %c96 = arith.constant 96 : index
    %c0_24 = arith.constant 0 : index
    %64 = vector.load %arg2[%c96, %c0_24] : memref<400x65xf32, #tpu.memory_space<vmem>>, vector<32x32xf32>
    %c96_25 = arith.constant 96 : index
    %c64_26 = arith.constant 64 : index
    %65 = vector.load %arg2[%c96_25, %c64_26] : memref<400x65xf32, #tpu.memory_space<vmem>>, vector<32x1xf32>
    "tpu.trace_start"() <{level = 10 : i32, message = "oi,ti->ot"}> : () -> ()
    %cst_27 = arith.constant dense<0.000000e+00> : vector<32x16xf32>
    %66 = tpu.matmul %64, %63, %cst_27 {dimension_numbers = #tpu.dot_dimension_numbers<[1], [1], [0], [0], [0, 0, 1, 0], [], []>} : vector<32x32xf32>, vector<16x32xf32>, vector<32x16xf32> -> vector<32x16xf32>
    "tpu.trace_stop"() : () -> ()
    %67 = vector.broadcast %65 : vector<32x1xf32> to vector<32x16xf32>
    %68 = arith.addf %66, %67 : vector<32x16xf32>
    %c128 = arith.constant 128 : index
    %c0_28 = arith.constant 0 : index
    %69 = vector.load %arg2[%c128, %c0_28] : memref<400x65xf32, #tpu.memory_space<vmem>>, vector<64x32xf32>
    %c128_29 = arith.constant 128 : index
    %c64_30 = arith.constant 64 : index
    %70 = vector.load %arg2[%c128_29, %c64_30] : memref<400x65xf32, #tpu.memory_space<vmem>>, vector<64x1xf32>
    "tpu.trace_start"() <{level = 10 : i32, message = "oi,ti->ot"}> : () -> ()
    %cst_31 = arith.constant dense<0.000000e+00> : vector<64x32xf32>
    %71 = tpu.matmul %69, %1, %cst_31 {dimension_numbers = #tpu.dot_dimension_numbers<[1], [1], [0], [0], [0, 0, 1, 0], [], []>} : vector<64x32xf32>, vector<32x32xf32>, vector<64x32xf32> -> vector<64x32xf32>
    "tpu.trace_stop"() : () -> ()
    %72 = vector.broadcast %70 : vector<64x1xf32> to vector<64x32xf32>
    %73 = arith.addf %71, %72 : vector<64x32xf32>
    %74 = vector.extract_strided_slice %73 {offsets = [0, 0], sizes = [32, 32], strides = [1, 1]} : vector<64x32xf32> to vector<32x32xf32>
    %75 = vector.extract_strided_slice %73 {offsets = [32, 0], sizes = [32, 32], strides = [1, 1]} : vector<64x32xf32> to vector<32x32xf32>
    %76 = vector.shape_cast %68 : vector<32x16xf32> to vector<4x8x16xf32>
    %77 = vector.shape_cast %74 : vector<32x32xf32> to vector<4x8x32xf32>
    %78 = vector.shape_cast %75 : vector<32x32xf32> to vector<4x8x32xf32>
    %79 = tpu.transpose %76, [0, 2, 1] : vector<4x8x16xf32> -> vector<4x16x8xf32>
    "tpu.trace_start"() <{level = 10 : i32, message = "hqd,hdk->hqk"}> : () -> ()
    %cst_32 = arith.constant dense<0.000000e+00> : vector<4x16x32xf32>
    %80 = tpu.matmul %79, %77, %cst_32 {dimension_numbers = #tpu.dot_dimension_numbers<[2], [1], [1], [2], [0, 0, 0, 1, 1, 2], [0], [0]>} : vector<4x16x8xf32>, vector<4x8x32xf32>, vector<4x16x32xf32> -> vector<4x16x32xf32>
    "tpu.trace_stop"() : () -> ()
    %cst_33 = arith.constant 0.353553385 : f32
    %81 = vector.broadcast %cst_33 : f32 to vector<4x16x32xf32>
    %82 = arith.mulf %80, %81 : vector<4x16x32xf32>
    %83 = vector.shape_cast %4 : vector<16x32xf32> to vector<1x16x32xf32>
    %84 = vector.broadcast %83 : vector<1x16x32xf32> to vector<4x16x32xf32>
    %85 = arith.addf %82, %84 : vector<4x16x32xf32>
    %cst_34 = arith.constant dense<0xFF800000> : vector<4x16xf32>
    %86 = vector.multi_reduction <maximumf>, %85, %cst_34 [2] : vector<4x16x32xf32> to vector<4x16xf32>
    %87 = vector.shape_cast %86 : vector<4x16xf32> to vector<4x16x1xf32>
    %88 = vector.broadcast %87 : vector<4x16x1xf32> to vector<4x16x32xf32>
    %89 = arith.subf %85, %88 : vector<4x16x32xf32>
    %90 = math.exp %89 : vector<4x16x32xf32>
    %cst_35 = arith.constant dense<0.000000e+00> : vector<4x16xf32>
    %91 = vector.multi_reduction <add>, %90, %cst_35 [2] : vector<4x16x32xf32> to vector<4x16xf32>
    %92 = vector.shape_cast %91 : vector<4x16xf32> to vector<4x16x1xf32>
    %93 = tpu.reciprocal %92 {approx = true} : vector<4x16x1xf32> -> vector<4x16x1xf32>
    %94 = vector.broadcast %93 : vector<4x16x1xf32> to vector<4x16x32xf32>
    %95 = arith.mulf %90, %94 : vector<4x16x32xf32>
    "tpu.trace_start"() <{level = 10 : i32, message = "hdk,hqk->hdq"}> : () -> ()
    %cst_36 = arith.constant dense<0.000000e+00> : vector<4x8x16xf32>
    %96 = tpu.matmul %78, %95, %cst_36 {dimension_numbers = #tpu.dot_dimension_numbers<[2], [2], [1], [1], [0, 0, 0, 1, 1, 1], [0], [0]>} : vector<4x8x32xf32>, vector<4x16x32xf32>, vector<4x8x16xf32> -> vector<4x8x16xf32>
    "tpu.trace_stop"() : () -> ()
    %97 = vector.shape_cast %96 : vector<4x8x16xf32> to vector<32x16xf32>
    %98 = tpu.transpose %97, [1, 0] : vector<32x16xf32> -> vector<16x32xf32>
    %c224 = arith.constant 224 : index
    %c0_37 = arith.constant 0 : index
    %99 = vector.load %arg2[%c224, %c0_37] : memref<400x65xf32, #tpu.memory_space<vmem>>, vector<32x32xf32>
    %cst_38 = arith.constant dense<0.000000e+00> : vector<16x32xf32>
    %100 = tpu.matmul %98, %99, %cst_38 {dimension_numbers = #tpu.dot_dimension_numbers<[1], [0], [0], [1], [0, 0, 1, 1], [], []>} : vector<16x32xf32>, vector<32x32xf32>, vector<16x32xf32> -> vector<16x32xf32>
    %c353 = arith.constant 353 : index
    %c0_39 = arith.constant 0 : index
    %101 = vector.load %arg2[%c353, %c0_39] : memref<400x65xf32, #tpu.memory_space<vmem>>, vector<1x32xf32>
    %102 = vector.broadcast %101 : vector<1x32xf32> to vector<16x32xf32>
    %103 = arith.addf %100, %102 : vector<16x32xf32>
    %104 = arith.addf %63, %103 : vector<16x32xf32>
    %cst_40 = arith.constant dense<0.000000e+00> : vector<16x1xf32>
    %105 = tpu.matmul %104, %2, %cst_40 {dimension_numbers = #tpu.dot_dimension_numbers<[1], [0], [0], [1], [0, 0, 1, 1], [], []>} : vector<16x32xf32>, vector<32x1xf32>, vector<16x1xf32> -> vector<16x1xf32>
    %106 = arith.mulf %104, %104 : vector<16x32xf32>
    %cst_41 = arith.constant dense<0.000000e+00> : vector<16x1xf32>
    %107 = tpu.matmul %106, %2, %cst_41 {dimension_numbers = #tpu.dot_dimension_numbers<[1], [0], [0], [1], [0, 0, 1, 1], [], []>} : vector<16x32xf32>, vector<32x1xf32>, vector<16x1xf32> -> vector<16x1xf32>
    %cst_42 = arith.constant 3.125000e-02 : f32
    %108 = vector.broadcast %cst_42 : f32 to vector<16x1xf32>
    %109 = arith.mulf %105, %108 : vector<16x1xf32>
    %cst_43 = arith.constant 3.125000e-02 : f32
    %110 = vector.broadcast %cst_43 : f32 to vector<16x1xf32>
    %111 = arith.mulf %107, %110 : vector<16x1xf32>
    %112 = arith.mulf %109, %109 : vector<16x1xf32>
    %113 = arith.subf %111, %112 : vector<16x1xf32>
    %114 = vector.broadcast %109 : vector<16x1xf32> to vector<16x32xf32>
    %115 = arith.subf %104, %114 : vector<16x32xf32>
    %cst_44 = arith.constant 9.99999974E-6 : f32
    %116 = vector.broadcast %cst_44 : f32 to vector<16x1xf32>
    %117 = arith.addf %113, %116 : vector<16x1xf32>
    %118 = math.rsqrt %117 : vector<16x1xf32>
    %119 = vector.broadcast %118 : vector<16x1xf32> to vector<16x32xf32>
    %120 = arith.mulf %115, %119 : vector<16x32xf32>
    %c358 = arith.constant 358 : index
    %c0_45 = arith.constant 0 : index
    %121 = vector.load %arg2[%c358, %c0_45] : memref<400x65xf32, #tpu.memory_space<vmem>>, vector<1x32xf32>
    %122 = vector.broadcast %121 : vector<1x32xf32> to vector<16x32xf32>
    %123 = arith.mulf %120, %122 : vector<16x32xf32>
    %c359 = arith.constant 359 : index
    %c0_46 = arith.constant 0 : index
    %124 = vector.load %arg2[%c359, %c0_46] : memref<400x65xf32, #tpu.memory_space<vmem>>, vector<1x32xf32>
    %125 = vector.broadcast %124 : vector<1x32xf32> to vector<16x32xf32>
    %126 = arith.addf %123, %125 : vector<16x32xf32>
    %c256 = arith.constant 256 : index
    %c0_47 = arith.constant 0 : index
    %127 = vector.load %arg2[%c256, %c0_47] : memref<400x65xf32, #tpu.memory_space<vmem>>, vector<32x64xf32>
    %cst_48 = arith.constant dense<0.000000e+00> : vector<16x64xf32>
    %128 = tpu.matmul %126, %127, %cst_48 {dimension_numbers = #tpu.dot_dimension_numbers<[1], [0], [0], [1], [0, 0, 1, 1], [], []>} : vector<16x32xf32>, vector<32x64xf32>, vector<16x64xf32> -> vector<16x64xf32>
    %c354 = arith.constant 354 : index
    %c0_49 = arith.constant 0 : index
    %129 = vector.load %arg2[%c354, %c0_49] : memref<400x65xf32, #tpu.memory_space<vmem>>, vector<1x64xf32>
    %130 = vector.broadcast %129 : vector<1x64xf32> to vector<16x64xf32>
    %131 = arith.addf %128, %130 : vector<16x64xf32>
    %cst_50 = arith.constant 0.000000e+00 : f32
    %132 = vector.broadcast %cst_50 : f32 to vector<16x64xf32>
    %133 = arith.maximumf %131, %132 : vector<16x64xf32>
    %c288 = arith.constant 288 : index
    %c0_51 = arith.constant 0 : index
    %134 = vector.load %arg2[%c288, %c0_51] : memref<400x65xf32, #tpu.memory_space<vmem>>, vector<64x32xf32>
    %cst_52 = arith.constant dense<0.000000e+00> : vector<16x32xf32>
    %135 = tpu.matmul %133, %134, %cst_52 {dimension_numbers = #tpu.dot_dimension_numbers<[1], [0], [0], [1], [0, 0, 1, 1], [], []>} : vector<16x64xf32>, vector<64x32xf32>, vector<16x32xf32> -> vector<16x32xf32>
    %c355 = arith.constant 355 : index
    %c0_53 = arith.constant 0 : index
    %136 = vector.load %arg2[%c355, %c0_53] : memref<400x65xf32, #tpu.memory_space<vmem>>, vector<1x32xf32>
    %137 = vector.broadcast %136 : vector<1x32xf32> to vector<16x32xf32>
    %138 = arith.addf %135, %137 : vector<16x32xf32>
    %139 = arith.addf %126, %138 : vector<16x32xf32>
    %cst_54 = arith.constant dense<0.000000e+00> : vector<16x1xf32>
    %140 = tpu.matmul %139, %2, %cst_54 {dimension_numbers = #tpu.dot_dimension_numbers<[1], [0], [0], [1], [0, 0, 1, 1], [], []>} : vector<16x32xf32>, vector<32x1xf32>, vector<16x1xf32> -> vector<16x1xf32>
    %141 = arith.mulf %139, %139 : vector<16x32xf32>
    %cst_55 = arith.constant dense<0.000000e+00> : vector<16x1xf32>
    %142 = tpu.matmul %141, %2, %cst_55 {dimension_numbers = #tpu.dot_dimension_numbers<[1], [0], [0], [1], [0, 0, 1, 1], [], []>} : vector<16x32xf32>, vector<32x1xf32>, vector<16x1xf32> -> vector<16x1xf32>
    %cst_56 = arith.constant 3.125000e-02 : f32
    %143 = vector.broadcast %cst_56 : f32 to vector<16x1xf32>
    %144 = arith.mulf %140, %143 : vector<16x1xf32>
    %cst_57 = arith.constant 3.125000e-02 : f32
    %145 = vector.broadcast %cst_57 : f32 to vector<16x1xf32>
    %146 = arith.mulf %142, %145 : vector<16x1xf32>
    %147 = arith.mulf %144, %144 : vector<16x1xf32>
    %148 = arith.subf %146, %147 : vector<16x1xf32>
    %149 = vector.broadcast %144 : vector<16x1xf32> to vector<16x32xf32>
    %150 = arith.subf %139, %149 : vector<16x32xf32>
    %cst_58 = arith.constant 9.99999974E-6 : f32
    %151 = vector.broadcast %cst_58 : f32 to vector<16x1xf32>
    %152 = arith.addf %148, %151 : vector<16x1xf32>
    %153 = math.rsqrt %152 : vector<16x1xf32>
    %154 = vector.broadcast %153 : vector<16x1xf32> to vector<16x32xf32>
    %155 = arith.mulf %150, %154 : vector<16x32xf32>
    %c360 = arith.constant 360 : index
    %c0_59 = arith.constant 0 : index
    %156 = vector.load %arg2[%c360, %c0_59] : memref<400x65xf32, #tpu.memory_space<vmem>>, vector<1x32xf32>
    %157 = vector.broadcast %156 : vector<1x32xf32> to vector<16x32xf32>
    %158 = arith.mulf %155, %157 : vector<16x32xf32>
    %c361 = arith.constant 361 : index
    %c0_60 = arith.constant 0 : index
    %159 = vector.load %arg2[%c361, %c0_60] : memref<400x65xf32, #tpu.memory_space<vmem>>, vector<1x32xf32>
    %160 = vector.broadcast %159 : vector<1x32xf32> to vector<16x32xf32>
    %161 = arith.addf %158, %160 : vector<16x32xf32>
    %c0_61 = arith.constant 0 : index
    %c0_62 = arith.constant 0 : index
    %162 = vector.load %arg3[%c0_61, %c0_62] : memref<16x32xf32, #tpu.memory_space<vmem>>, vector<16x32xf32>
    tpu.vector_store %arg3[%c0_61, %c0_62], %161 {strides = array<i32>} : memref<16x32xf32, #tpu.memory_space<vmem>>, vector<16x32xf32>,
    return
  }
}

</mosaic_0001>

<llo_original>
// kernel: decoder_layer_forward.1
$region0: #{decoder_layer_forward.1}
  #allocation0 [shape = 'u32[]', space=smem, size = 0x4, offset = 0x4, fixed_abs, tag = 'smem constant byte address 0x4 - core index']
  #allocation1 [shape = 'u32[144,128]{1,0:T(1,128)}', space=vmem, size = 0x12000, scoped, tag = 'internal scratch']
  %s0 = inlined_call_operand.vmem [shape: f32[16,32], index: 0, kind: input, shape index: {}]
  %s1 = inlined_call_operand.vmem [shape: f32[32,32], index: 1, kind: input, shape index: {}]
  %s2 = inlined_call_operand.vmem [shape: f32[400,65], index: 2, kind: input, shape index: {}]
  %s3 = inlined_call_operand.hbm [shape: f32[16,32], index: 3, kind: output, shape index: {}]
  %s4 = sld [smem:[#allocation0]]
  $region22: #{decoder_layer_forward.1} parent=0
    _
  %s6 = ssub.s32 1, %s4
  %s7 = scalar_select 0, %s6, %s4
  $region1: #{decoder_layer_forward.1} parent=0
    #allocation2 [shape = 'u8[8192]{0}', space=vmem, size = 0x2000, scoped, tag = 'output window, operand 0, single buffered']
    #allocation3 [shape = 's32[1]{0}', space=sflag, size = 0x4, scoped, tag = 'scoped memory for decoder_layer_forward.1']
    %8 = vsyncpa [#allocation3], 0
    // Predicated region
    $region2: #{decoder_layer_forward.1} parent=1 // pred_check
      _
    $region3: #{decoder_layer_forward.1} parent=1 // pred_check_branch
      %10 = sbr.rel (0) target = $region5
    $region4: #{decoder_layer_forward.1} parent=1 // pred_region
      _
    $region5: #{decoder_layer_forward.1} parent=1 // pred_fallthru
      _
    // Predicated region
    $region6: #{decoder_layer_forward.1} parent=1 // pred_check
      _
    $region7: #{decoder_layer_forward.1} parent=1 // pred_check_branch
      %12 = sbr.rel (0) target = $region9
    $region8: #{decoder_layer_forward.1} parent=1 // pred_region
      _
    $region9: #{decoder_layer_forward.1} parent=1 // pred_fallthru
      _
    // Predicated region
    $region10: #{decoder_layer_forward.1} parent=1 // pred_check
      _
    $region11: #{decoder_layer_forward.1} parent=1 // pred_check_branch
      %14 = sbr.rel (0) target = $region13
    $region12: #{decoder_layer_forward.1} parent=1 // pred_region
      _
    $region13: #{decoder_layer_forward.1} parent=1 // pred_fallthru
      _
    %v15 = vld [vmem:[%s0] sm:$0xff]
    %v16 = vld [vmem:[%s0 + $0x8] sm:$0xff]
    %v17 = vld [vmem:[%s1] sm:$0xff]
    %v18 = vld [vmem:[%s1 + $0x8] sm:$0xff]
    %v19 = vld [vmem:[%s1 + $0x10] sm:$0xff]
    %v20 = vld [vmem:[%s1 + $0x18] sm:$0xff]
    %v21 = vld [vmem:[%s2 + $0x170] sm:$0xff]
    %v22 = vld [vmem:[%s2 + $0x178] sm:$0xff]
    %v23 = vld [vmem:[%s2 + $0x180] sm:$0xff]
    %v24 = vld [vmem:[%s2 + $0x188] sm:$0xff]
    %v25 = vld [vmem:[%s2] sm:$0xff]
    %v26 = vld [vmem:[%s2 + $0x8] sm:$0xff]
    %v27 = vld [vmem:[%s2 + $0x10] sm:$0xff]
    %v28 = vld [vmem:[%s2 + $0x18] sm:$0xff]
    %v29 = vld [vmem:[%s2 + $0x20] sm:$0xff]
    %v30 = vld [vmem:[%s2 + $0x28] sm:$0xff]
    %v31 = vld [vmem:[%s2 + $0x30] sm:$0xff]
    %v32 = vld [vmem:[%s2 + $0x38] sm:$0xff]
    %v33 = vld [vmem:[%s2 + $0x40] sm:$0xff]
    %v34 = vld [vmem:[%s2 + $0x48] sm:$0xff]
    %v35 = vld [vmem:[%s2 + $0x50] sm:$0xff]
    %v36 = vld [vmem:[%s2 + $0x58] sm:$0xff]
    %38 = vset.pattern.permute.xlu0 64
    %39 = vperm.xlu0 %38, %v25
    %v40 = vpop.permute.xlu0 %39
    %43 = vset.pattern.permute.xlu0 64
    %44 = vperm.xlu0 %43, %v26
    %v45 = vpop.permute.xlu0 %44
    %48 = vset.pattern.permute.xlu0 64
    %49 = vperm.xlu0 %48, %v27
    %v50 = vpop.permute.xlu0 %49
    %53 = vset.pattern.permute.xlu0 64
    %54 = vperm.xlu0 %53, %v28
    %v55 = vpop.permute.xlu0 %54
    %58 = vset.pattern.permute.xlu0 64
    %59 = vperm.xlu0 %58, %v29
    %v60 = vpop.permute.xlu0 %59
    %63 = vset.pattern.permute.xlu0 64
    %64 = vperm.xlu0 %63, %v30
    %v65 = vpop.permute.xlu0 %64
    %68 = vset.pattern.permute.xlu0 64
    %69 = vperm.xlu0 %68, %v31
    %v70 = vpop.permute.xlu0 %69
    %73 = vset.pattern.permute.xlu0 64
    %74 = vperm.xlu0 %73, %v32
    %v75 = vpop.permute.xlu0 %74
    %78 = vset.pattern.permute.xlu0 64
    %79 = vperm.xlu0 %78, %v33
    %v80 = vpop.permute.xlu0 %79
    %83 = vset.pattern.permute.xlu0 64
    %84 = vperm.xlu0 %83, %v34
    %v85 = vpop.permute.xlu0 %84
    %88 = vset.pattern.permute.xlu0 64
    %89 = vperm.xlu0 %88, %v35
    %v90 = vpop.permute.xlu0 %89
    %93 = vset.pattern.permute.xlu0 64
    %94 = vperm.xlu0 %93, %v36
    %v95 = vpop.permute.xlu0 %94
    %vm97 = vcmask 261120
    %v98 = vsel %vm97, %v25, 0
    %v100 = vsel %vm97, %v26, 0
    %v102 = vsel %vm97, %v27, 0
    %v104 = vsel %vm97, %v28, 0
    %v106 = vsel %vm97, %v29, 0
    %v108 = vsel %vm97, %v30, 0
    %v110 = vsel %vm97, %v31, 0
    %v112 = vsel %vm97, %v32, 0
    %v114 = vsel %vm97, %v33, 0
    %v116 = vsel %vm97, %v34, 0
    %v118 = vsel %vm97, %v35, 0
    %v120 = vsel %vm97, %v36, 0
    %v123 = vsel %vm97, %v15, 0
    %v126 = vsel %vm97, %v16, 0
    %128 = vmatprep.subr.mxu0 0.0
    %129 = vmatpush1.xpose.msra.mxu0 0.0
    %130 = vmatprep.subr.mxu0 0.0
    %131 = vmatpush1.xpose.msra.mxu0 0.0
    %132 = vmatprep.subr.mxu0 0.0
    %133 = vmatpush1.xpose.msra.mxu0 0.0
    %134 = vmatprep.subr.mxu0 0.0
    %135 = vmatpush1.xpose.msra.mxu0 0.0
    %136 = vmatprep.subr.mxu0 0.0
    %137 = vmatpush1.xpose.msra.mxu0 0.0
    %138 = vmatprep.subr.mxu0 0.0
    %139 = vmatpush1.xpose.msra.mxu0 0.0
    %140 = vmatprep.subr.mxu0 0.0
    %141 = vmatpush1.xpose.msra.mxu0 0.0
    %142 = vmatprep.subr.mxu0 0.0
    %143 = vmatpush1.xpose.msra.mxu0 0.0
    %144 = vmatprep.subr.mxu0 0.0
    %145 = vmatpush1.xpose.msra.mxu0 0.0
    %146 = vmatprep.subr.mxu0 0.0
    %147 = vmatpush1.xpose.msra.mxu0 0.0
    %148 = vmatprep.subr.mxu0 0.0
    %149 = vmatpush1.xpose.msra.mxu0 0.0
    %150 = vmatprep.subr.mxu0 0.0
    %151 = vmatpush1.xpose.msra.mxu0 0.0
    %152 = vmatprep.subr.mxu0 0.0
    %153 = vmatpush1.xpose.msra.mxu0 0.0
    %154 = vmatprep.subr.mxu0 0.0
    %155 = vmatpush1.xpose.msra.mxu0 0.0
    %156 = vmatprep.subr.mxu0 0.0
    %157 = vmatpush1.xpose.msra.mxu0 %v126
    %158 = vmatprep.subr.mxu0 0.0
    %159 = vmatpush1.xpose.msra.mxu0 %v123
    %160 = vmatprep.subr.mxu0 0.0
    %161 = vmatpush2.xpose.msra.mxu0 0.0
    %162 = vmatprep.subr.mxu0 0.0
    %163 = vmatpush2.xpose.msra.mxu0 0.0
    %164 = vmatprep.subr.mxu0 0.0
    %165 = vmatpush2.xpose.msra.mxu0 0.0
    %166 = vmatprep.subr.mxu0 0.0
    %167 = vmatpush2.xpose.msra.mxu0 0.0
    %168 = vmatprep.subr.mxu0 0.0
    %169 = vmatpush2.xpose.msra.mxu0 0.0
    %170 = vmatprep.subr.mxu0 0.0
    %171 = vmatpush2.xpose.msra.mxu0 0.0
    %172 = vmatprep.subr.mxu0 0.0
    %173 = vmatpush2.xpose.msra.mxu0 0.0
    %174 = vmatprep.subr.mxu0 0.0
    %175 = vmatpush2.xpose.msra.mxu0 0.0
    %176 = vmatprep.subr.mxu0 0.0
    %177 = vmatpush2.xpose.msra.mxu0 0.0
    %178 = vmatprep.subr.mxu0 0.0
    %179 = vmatpush2.xpose.msra.mxu0 0.0
    %180 = vmatprep.subr.mxu0 0.0
    %181 = vmatpush2.xpose.msra.mxu0 0.0
    %182 = vmatprep.subr.mxu0 0.0
    %183 = vmatpush2.xpose.msra.mxu0 0.0
    %184 = vmatprep.subr.mxu0 0.0
    %185 = vmatpush2.xpose.msra.mxu0 0.0
    %186 = vmatprep.subr.mxu0 0.0
    %187 = vmatpush2.xpose.msra.mxu0 0.0
    %188 = vmatprep.subr.mxu0 0.0
    %189 = vmatpush2.xpose.msra.mxu0 0.0
    %190 = vmatprep.subr.mxu0 0.0
    %191 = vmatpush2.xpose.msra.mxu0 0.0
    %192 = vmatprep.mubr.f32.mxu0 0.0
    %193 = vmatmul.mubr.f32.gmra.mxu0 %v98
    %v194 = vpop.f32.mrf.mxu0
    %v195 = vadd.f32 %v40, %v194
    %v196 = vpop.f32.mrf.mxu0
    %197 = vmatprep.mubr.f32.mxu0 0.0
    %198 = vmatmul.mubr.f32.gmra.mxu0 %v100
    %v199 = vpop.f32.mrf.mxu0
    %v200 = vadd.f32 %v45, %v199
    %v201 = vpop.f32.mrf.mxu0
    %202 = vmatprep.mubr.f32.mxu0 0.0
    %203 = vmatmul.mubr.f32.gmra.mxu0 %v102
    %v204 = vpop.f32.mrf.mxu0
    %v205 = vadd.f32 %v50, %v204
    %v206 = vpop.f32.mrf.mxu0
    %207 = vmatprep.mubr.f32.mxu0 0.0
    %208 = vmatmul.mubr.f32.gmra.mxu0 %v104
    %v209 = vpop.f32.mrf.mxu0
    %v210 = vadd.f32 %v55, %v209
    %v211 = vpop.f32.mrf.mxu0
    %212 = vmatprep.mubr.f32.mxu0 0.0
    %213 = vmatmul.mubr.f32.gmra.mxu0 %v106
    %v214 = vpop.f32.mrf.mxu0
    %v215 = vadd.f32 %v60, %v214
    %v216 = vpop.f32.mrf.mxu0
    %217 = vmatprep.mubr.f32.mxu0 0.0
    %218 = vmatmul.mubr.f32.gmra.mxu0 %v108
    %v219 = vpop.f32.mrf.mxu0
    %v220 = vadd.f32 %v65, %v219
    %v221 = vpop.f32.mrf.mxu0
    %222 = vmatprep.mubr.f32.mxu0 0.0
    %223 = vmatmul.mubr.f32.gmra.mxu0 %v110
    %v224 = vpop.f32.mrf.mxu0
    %v225 = vadd.f32 %v70, %v224
    %v226 = vpop.f32.mrf.mxu0
    %227 = vmatprep.mubr.f32.mxu0 0.0
    %228 = vmatmul.mubr.f32.gmra.mxu0 %v112
    %v229 = vpop.f32.mrf.mxu0
    %v230 = vadd.f32 %v75, %v229
    %v231 = vpop.f32.mrf.mxu0
    %232 = vmatprep.mubr.f32.mxu0 0.0
    %233 = vmatmul.mubr.f32.gmra.mxu0 %v114
    %v234 = vpop.f32.mrf.mxu0
    %v235 = vadd.f32 %v80, %v234
    %v236 = vpop.f32.mrf.mxu0
    %237 = vmatprep.mubr.f32.mxu0 0.0
    %238 = vmatmul.mubr.f32.gmra.mxu0 %v116
    %v239 = vpop.f32.mrf.mxu0
    %v240 = vadd.f32 %v85, %v239
    %v241 = vpop.f32.mrf.mxu0
    %242 = vmatprep.mubr.f32.mxu0 0.0
    %243 = vmatmul.mubr.f32.gmra.mxu0 %v118
    %v244 = vpop.f32.mrf.mxu0
    %v245 = vadd.f32 %v90, %v244
    %v246 = vpop.f32.mrf.mxu0
    %247 = vmatprep.mubr.f32.mxu0 0.0
    %248 = vmatmul.mubr.f32.gmra.mxu0 %v120
    %v249 = vpop.f32.mrf.mxu0
    %v250 = vadd.f32 %v95, %v249
    %v251 = vpop.f32.mrf.mxu0
    %252 = vdwg.mxu0
    %253 = vxpose.xlu0.b32.start [1/16] %v195, 128
    %254 = vxpose.xlu0.b32.cont [2/16] 0.0, 128
    %255 = vxpose.xlu0.b32.cont [3/16] 0.0, 128
    %256 = vxpose.xlu0.b32.cont [4/16] 0.0, 128
    %257 = vxpose.xlu0.b32.cont [5/16] 0.0, 128
    %258 = vxpose.xlu0.b32.cont [6/16] 0.0, 128
    %259 = vxpose.xlu0.b32.cont [7/16] 0.0, 128
    %260 = vxpose.xlu0.b32.cont [8/16] 0.0, 128
    %261 = vxpose.xlu0.b32.cont [9/16] 0.0, 128
    %262 = vxpose.xlu0.b32.cont [10/16] 0.0, 128
    %263 = vxpose.xlu0.b32.cont [11/16] 0.0, 128
    %264 = vxpose.xlu0.b32.cont [12/16] 0.0, 128
    %265 = vxpose.xlu0.b32.cont [13/16] 0.0, 128
    %266 = vxpose.xlu0.b32.cont [14/16] 0.0, 128
    %267 = vxpose.xlu0.b32.cont [15/16] 0.0, 128
    %268 = vxpose.xlu0.b32.end [16/16] 0.0, 128
    %v269 = vpop.trf.xlu0
    %v270 = vpop.trf.xlu0
    %v271 = vpop.trf.xlu0
    %v272 = vpop.trf.xlu0
    %v273 = vpop.trf.xlu0
    %v274 = vpop.trf.xlu0
    %v275 = vpop.trf.xlu0
    %v276 = vpop.trf.xlu0
    %v277 = vpop.trf.xlu0
    %v278 = vpop.trf.xlu0
    %v279 = vpop.trf.xlu0
    %v280 = vpop.trf.xlu0
    %v281 = vpop.trf.xlu0
    %v282 = vpop.trf.xlu0
    %v283 = vpop.trf.xlu0
    %v284 = vpop.trf.xlu0
    %285 = vxpose.xlu0.b32.start [1/16] %v200, 128
    %286 = vxpose.xlu0.b32.cont [2/16] 0.0, 128
    %287 = vxpose.xlu0.b32.cont [3/16] 0.0, 128
    %288 = vxpose.xlu0.b32.cont [4/16] 0.0, 128
    %289 = vxpose.xlu0.b32.cont [5/16] 0.0, 128
    %290 = vxpose.xlu0.b32.cont [6/16] 0.0, 128
    %291 = vxpose.xlu0.b32.cont [7/16] 0.0, 128
    %292 = vxpose.xlu0.b32.cont [8/16] 0.0, 128
    %293 = vxpose.xlu0.b32.cont [9/16] 0.0, 128
    %294 = vxpose.xlu0.b32.cont [10/16] 0.0, 128
    %295 = vxpose.xlu0.b32.cont [11/16] 0.0, 128
    %296 = vxpose.xlu0.b32.cont [12/16] 0.0, 128
    %297 = vxpose.xlu0.b32.cont [13/16] 0.0, 128
    %298 = vxpose.xlu0.b32.cont [14/16] 0.0, 128
    %299 = vxpose.xlu0.b32.cont [15/16] 0.0, 128
    %300 = vxpose.xlu0.b32.end [16/16] 0.0, 128
    %v301 = vpop.trf.xlu0
    %v302 = vpop.trf.xlu0
    %v303 = vpop.trf.xlu0
    %v304 = vpop.trf.xlu0
    %v305 = vpop.trf.xlu0
    %v306 = vpop.trf.xlu0
    %v307 = vpop.trf.xlu0
    %v308 = vpop.trf.xlu0
    %v309 = vpop.trf.xlu0
    %v310 = vpop.trf.xlu0
    %v311 = vpop.trf.xlu0
    %v312 = vpop.trf.xlu0
    %v313 = vpop.trf.xlu0
    %v314 = vpop.trf.xlu0
    %v315 = vpop.trf.xlu0
    %v316 = vpop.trf.xlu0
    %317 = vxpose.xlu0.b32.start [1/16] %v205, 128
    %318 = vxpose.xlu0.b32.cont [2/16] 0.0, 128
    %319 = vxpose.xlu0.b32.cont [3/16] 0.0, 128
    %320 = vxpose.xlu0.b32.cont [4/16] 0.0, 128
    %321 = vxpose.xlu0.b32.cont [5/16] 0.0, 128
    %322 = vxpose.xlu0.b32.cont [6/16] 0.0, 128
    %323 = vxpose.xlu0.b32.cont [7/16] 0.0, 128
    %324 = vxpose.xlu0.b32.cont [8/16] 0.0, 128
    %325 = vxpose.xlu0.b32.cont [9/16] 0.0, 128
    %326 = vxpose.xlu0.b32.cont [10/16] 0.0, 128
    %327 = vxpose.xlu0.b32.cont [11/16] 0.0, 128
    %328 = vxpose.xlu0.b32.cont [12/16] 0.0, 128
    %329 = vxpose.xlu0.b32.cont [13/16] 0.0, 128
    %330 = vxpose.xlu0.b32.cont [14/16] 0.0, 128
    %331 = vxpose.xlu0.b32.cont [15/16] 0.0, 128
    %332 = vxpose.xlu0.b32.end [16/16] 0.0, 128
    %v333 = vpop.trf.xlu0
    %v334 = vpop.trf.xlu0
    %v335 = vpop.trf.xlu0
    %v336 = vpop.trf.xlu0
    %v337 = vpop.trf.xlu0
    %v338 = vpop.trf.xlu0
    %v339 = vpop.trf.xlu0
    %v340 = vpop.trf.xlu0
    %v341 = vpop.trf.xlu0
    %v342 = vpop.trf.xlu0
    %v343 = vpop.trf.xlu0
    %v344 = vpop.trf.xlu0
    %v345 = vpop.trf.xlu0
    %v346 = vpop.trf.xlu0
    %v347 = vpop.trf.xlu0
    %v348 = vpop.trf.xlu0
    %349 = vxpose.xlu0.b32.start [1/16] %v210, 128
    %350 = vxpose.xlu0.b32.cont [2/16] 0.0, 128
    %351 = vxpose.xlu0.b32.cont [3/16] 0.0, 128
    %352 = vxpose.xlu0.b32.cont [4/16] 0.0, 128
    %353 = vxpose.xlu0.b32.cont [5/16] 0.0, 128
    %354 = vxpose.xlu0.b32.cont [6/16] 0.0, 128
    %355 = vxpose.xlu0.b32.cont [7/16] 0.0, 128
    %356 = vxpose.xlu0.b32.cont [8/16] 0.0, 128
    %357 = vxpose.xlu0.b32.cont [9/16] 0.0, 128
    %358 = vxpose.xlu0.b32.cont [10/16] 0.0, 128
    %359 = vxpose.xlu0.b32.cont [11/16] 0.0, 128
    %360 = vxpose.xlu0.b32.cont [12/16] 0.0, 128
    %361 = vxpose.xlu0.b32.cont [13/16] 0.0, 128
    %362 = vxpose.xlu0.b32.cont [14/16] 0.0, 128
    %363 = vxpose.xlu0.b32.cont [15/16] 0.0, 128
    %364 = vxpose.xlu0.b32.end [16/16] 0.0, 128
    %v365 = vpop.trf.xlu0
    %v366 = vpop.trf.xlu0
    %v367 = vpop.trf.xlu0
    %v368 = vpop.trf.xlu0
    %v369 = vpop.trf.xlu0
    %v370 = vpop.trf.xlu0
    %v371 = vpop.trf.xlu0
    %v372 = vpop.trf.xlu0
    %v373 = vpop.trf.xlu0
    %v374 = vpop.trf.xlu0
    %v375 = vpop.trf.xlu0
    %v376 = vpop.trf.xlu0
    %v377 = vpop.trf.xlu0
    %v378 = vpop.trf.xlu0
    %v379 = vpop.trf.xlu0
    %v380 = vpop.trf.xlu0
    %vm381 = vcmask 64512
    %v383 = vsel %vm381, %v269, 0
    %v386 = vsel %vm381, %v270, 0
    %388 = vmatprep.subr.mxu0 0.0
    %389 = vmatpush1.msra.mxu0 0.0
    %390 = vmatprep.subr.mxu0 0.0
    %391 = vmatpush1.msra.mxu0 0.0
    %392 = vmatprep.subr.mxu0 0.0
    %393 = vmatpush1.msra.mxu0 0.0
    %394 = vmatprep.subr.mxu0 0.0
    %395 = vmatpush1.msra.mxu0 0.0
    %396 = vmatprep.subr.mxu0 0.0
    %397 = vmatpush1.msra.mxu0 0.0
    %398 = vmatprep.subr.mxu0 0.0
    %399 = vmatpush1.msra.mxu0 0.0
    %400 = vmatprep.subr.mxu0 0.0
    %401 = vmatpush1.msra.mxu0 0.0
    %402 = vmatprep.subr.mxu0 0.0
    %403 = vmatpush1.msra.mxu0 0.0
    %404 = vmatprep.subr.mxu0 0.0
    %405 = vmatpush1.msra.mxu0 0.0
    %406 = vmatprep.subr.mxu0 0.0
    %407 = vmatpush1.msra.mxu0 0.0
    %408 = vmatprep.subr.mxu0 0.0
    %409 = vmatpush1.msra.mxu0 0.0
    %410 = vmatprep.subr.mxu0 0.0
    %411 = vmatpush1.msra.mxu0 0.0
    %412 = vmatprep.subr.mxu0 0.0
    %413 = vmatpush1.msra.mxu0 0.0
    %414 = vmatprep.subr.mxu0 0.0
    %415 = vmatpush1.msra.mxu0 0.0
    %416 = vmatprep.subr.mxu0 0.0
    %417 = vmatpush1.msra.mxu0 0.0
    %418 = vmatprep.subr.mxu0 0.0
    %419 = vmatpush1.msra.mxu0 %v215
    %420 = vmatprep.subr.mxu0 0.0
    %421 = vmatpush2.msra.mxu0 0.0
    %422 = vmatprep.subr.mxu0 0.0
    %423 = vmatpush2.msra.mxu0 0.0
    %424 = vmatprep.subr.mxu0 0.0
    %425 = vmatpush2.msra.mxu0 0.0
    %426 = vmatprep.subr.mxu0 0.0
    %427 = vmatpush2.msra.mxu0 0.0
    %428 = vmatprep.subr.mxu0 0.0
    %429 = vmatpush2.msra.mxu0 0.0
    %430 = vmatprep.subr.mxu0 0.0
    %431 = vmatpush2.msra.mxu0 0.0
    %432 = vmatprep.subr.mxu0 0.0
    %433 = vmatpush2.msra.mxu0 0.0
    %434 = vmatprep.subr.mxu0 0.0
    %435 = vmatpush2.msra.mxu0 0.0
    %436 = vmatprep.subr.mxu0 0.0
    %437 = vmatpush2.msra.mxu0 0.0
    %438 = vmatprep.subr.mxu0 0.0
    %439 = vmatpush2.msra.mxu0 0.0
    %440 = vmatprep.subr.mxu0 0.0
    %441 = vmatpush2.msra.mxu0 0.0
    %442 = vmatprep.subr.mxu0 0.0
    %443 = vmatpush2.msra.mxu0 0.0
    %444 = vmatprep.subr.mxu0 0.0
    %445 = vmatpush2.msra.mxu0 0.0
    %446 = vmatprep.subr.mxu0 0.0
    %447 = vmatpush2.msra.mxu0 0.0
    %448 = vmatprep.subr.mxu0 0.0
    %449 = vmatpush2.msra.mxu0 0.0
    %450 = vmatprep.subr.mxu0 0.0
    %451 = vmatpush2.msra.mxu0 0.0
    %452 = vmatprep.mubr.f32.mxu0 0.0
    %453 = vmatmul.mubr.f32.gmra.mxu0 %v383
    %v454 = vpop.f32.mrf.mxu0
    %v455 = vadd.f32 0.0, %v454
    %v456 = vpop.f32.mrf.mxu0
    %457 = vmatprep.mubr.f32.mxu0 0.0
    %458 = vmatmul.mubr.f32.gmra.mxu0 %v386
    %v459 = vpop.f32.mrf.mxu0
    %v460 = vadd.f32 0.0, %v459
    %v461 = vpop.f32.mrf.mxu0
    %462 = vdwg.mxu0
    %v464 = vsel %vm381, %v301, 0
    %v467 = vsel %vm381, %v302, 0
    %469 = vmatprep.subr.mxu0 0.0
    %470 = vmatpush1.msra.mxu0 0.0
    %471 = vmatprep.subr.mxu0 0.0
    %472 = vmatpush1.msra.mxu0 0.0
    %473 = vmatprep.subr.mxu0 0.0
    %474 = vmatpush1.msra.mxu0 0.0
    %475 = vmatprep.subr.mxu0 0.0
    %476 = vmatpush1.msra.mxu0 0.0
    %477 = vmatprep.subr.mxu0 0.0
    %478 = vmatpush1.msra.mxu0 0.0
    %479 = vmatprep.subr.mxu0 0.0
    %480 = vmatpush1.msra.mxu0 0.0
    %481 = vmatprep.subr.mxu0 0.0
    %482 = vmatpush1.msra.mxu0 0.0
    %483 = vmatprep.subr.mxu0 0.0
    %484 = vmatpush1.msra.mxu0 0.0
    %485 = vmatprep.subr.mxu0 0.0
    %486 = vmatpush1.msra.mxu0 0.0
    %487 = vmatprep.subr.mxu0 0.0
    %488 = vmatpush1.msra.mxu0 0.0
    %489 = vmatprep.subr.mxu0 0.0
    %490 = vmatpush1.msra.mxu0 0.0
    %491 = vmatprep.subr.mxu0 0.0
    %492 = vmatpush1.msra.mxu0 0.0
    %493 = vmatprep.subr.mxu0 0.0
    %494 = vmatpush1.msra.mxu0 0.0
    %495 = vmatprep.subr.mxu0 0.0
    %496 = vmatpush1.msra.mxu0 0.0
    %497 = vmatprep.subr.mxu0 0.0
    %498 = vmatpush1.msra.mxu0 0.0
    %499 = vmatprep.subr.mxu0 0.0
    %500 = vmatpush1.msra.mxu0 %v220
    %501 = vmatprep.subr.mxu0 0.0
    %502 = vmatpush2.msra.mxu0 0.0
    %503 = vmatprep.subr.mxu0 0.0
    %504 = vmatpush2.msra.mxu0 0.0
    %505 = vmatprep.subr.mxu0 0.0
    %506 = vmatpush2.msra.mxu0 0.0
    %507 = vmatprep.subr.mxu0 0.0
    %508 = vmatpush2.msra.mxu0 0.0
    %509 = vmatprep.subr.mxu0 0.0
    %510 = vmatpush2.msra.mxu0 0.0
    %511 = vmatprep.subr.mxu0 0.0
    %512 = vmatpush2.msra.mxu0 0.0
    %513 = vmatprep.subr.mxu0 0.0
    %514 = vmatpush2.msra.mxu0 0.0
    %515 = vmatprep.subr.mxu0 0.0
    %516 = vmatpush2.msra.mxu0 0.0
    %517 = vmatprep.subr.mxu0 0.0
    %518 = vmatpush2.msra.mxu0 0.0
    %519 = vmatprep.subr.mxu0 0.0
    %520 = vmatpush2.msra.mxu0 0.0
    %521 = vmatprep.subr.mxu0 0.0
    %522 = vmatpush2.msra.mxu0 0.0
    %523 = vmatprep.subr.mxu0 0.0
    %524 = vmatpush2.msra.mxu0 0.0
    %525 = vmatprep.subr.mxu0 0.0
    %526 = vmatpush2.msra.mxu0 0.0
    %527 = vmatprep.subr.mxu0 0.0
    %528 = vmatpush2.msra.mxu0 0.0
    %529 = vmatprep.subr.mxu0 0.0
    %530 = vmatpush2.msra.mxu0 0.0
    %531 = vmatprep.subr.mxu0 0.0
    %532 = vmatpush2.msra.mxu0 0.0
    %533 = vmatprep.mubr.f32.mxu0 0.0
    %534 = vmatmul.mubr.f32.gmra.mxu0 %v464
    %v535 = vpop.f32.mrf.mxu0
    %v536 = vadd.f32 0.0, %v535
    %v537 = vpop.f32.mrf.mxu0
    %538 = vmatprep.mubr.f32.mxu0 0.0
    %539 = vmatmul.mubr.f32.gmra.mxu0 %v467
    %v540 = vpop.f32.mrf.mxu0
    %v541 = vadd.f32 0.0, %v540
    %v542 = vpop.f32.mrf.mxu0
    %543 = vdwg.mxu0
    %v545 = vsel %vm381, %v333, 0
    %v548 = vsel %vm381, %v334, 0
    %550 = vmatprep.subr.mxu0 0.0
    %551 = vmatpush1.msra.mxu0 0.0
    %552 = vmatprep.subr.mxu0 0.0
    %553 = vmatpush1.msra.mxu0 0.0
    %554 = vmatprep.subr.mxu0 0.0
    %555 = vmatpush1.msra.mxu0 0.0
    %556 = vmatprep.subr.mxu0 0.0
    %557 = vmatpush1.msra.mxu0 0.0
    %558 = vmatprep.subr.mxu0 0.0
    %559 = vmatpush1.msra.mxu0 0.0
    %560 = vmatprep.subr.mxu0 0.0
    %561 = vmatpush1.msra.mxu0 0.0
    %562 = vmatprep.subr.mxu0 0.0
    %563 = vmatpush1.msra.mxu0 0.0
    %564 = vmatprep.subr.mxu0 0.0
    %565 = vmatpush1.msra.mxu0 0.0
    %566 = vmatprep.subr.mxu0 0.0
    %567 = vmatpush1.msra.mxu0 0.0
    %568 = vmatprep.subr.mxu0 0.0
    %569 = vmatpush1.msra.mxu0 0.0
    %570 = vmatprep.subr.mxu0 0.0
    %571 = vmatpush1.msra.mxu0 0.0
    %572 = vmatprep.subr.mxu0 0.0
    %573 = vmatpush1.msra.mxu0 0.0
    %574 = vmatprep.subr.mxu0 0.0
    %575 = vmatpush1.msra.mxu0 0.0
    %576 = vmatprep.subr.mxu0 0.0
    %577 = vmatpush1.msra.mxu0 0.0
    %578 = vmatprep.subr.mxu0 0.0
    %579 = vmatpush1.msra.mxu0 0.0
    %580 = vmatprep.subr.mxu0 0.0
    %581 = vmatpush1.msra.mxu0 %v225
    %582 = vmatprep.subr.mxu0 0.0
    %583 = vmatpush2.msra.mxu0 0.0
    %584 = vmatprep.subr.mxu0 0.0
    %585 = vmatpush2.msra.mxu0 0.0
    %586 = vmatprep.subr.mxu0 0.0
    %587 = vmatpush2.msra.mxu0 0.0
    %588 = vmatprep.subr.mxu0 0.0
    %589 = vmatpush2.msra.mxu0 0.0
    %590 = vmatprep.subr.mxu0 0.0
    %591 = vmatpush2.msra.mxu0 0.0
    %592 = vmatprep.subr.mxu0 0.0
    %593 = vmatpush2.msra.mxu0 0.0
    %594 = vmatprep.subr.mxu0 0.0
    %595 = vmatpush2.msra.mxu0 0.0
    %596 = vmatprep.subr.mxu0 0.0
    %597 = vmatpush2.msra.mxu0 0.0
    %598 = vmatprep.subr.mxu0 0.0
    %599 = vmatpush2.msra.mxu0 0.0
    %600 = vmatprep.subr.mxu0 0.0
    %601 = vmatpush2.msra.mxu0 0.0
    %602 = vmatprep.subr.mxu0 0.0
    %603 = vmatpush2.msra.mxu0 0.0
    %604 = vmatprep.subr.mxu0 0.0
    %605 = vmatpush2.msra.mxu0 0.0
    %606 = vmatprep.subr.mxu0 0.0
    %607 = vmatpush2.msra.mxu0 0.0
    %608 = vmatprep.subr.mxu0 0.0
    %609 = vmatpush2.msra.mxu0 0.0
    %610 = vmatprep.subr.mxu0 0.0
    %611 = vmatpush2.msra.mxu0 0.0
    %612 = vmatprep.subr.mxu0 0.0
    %613 = vmatpush2.msra.mxu0 0.0
    %614 = vmatprep.mubr.f32.mxu0 0.0
    %615 = vmatmul.mubr.f32.gmra.mxu0 %v545
    %v616 = vpop.f32.mrf.mxu0
    %v617 = vadd.f32 0.0, %v616
    %v618 = vpop.f32.mrf.mxu0
    %619 = vmatprep.mubr.f32.mxu0 0.0
    %620 = vmatmul.mubr.f32.gmra.mxu0 %v548
    %v621 = vpop.f32.mrf.mxu0
    %v622 = vadd.f32 0.0, %v621
    %v623 = vpop.f32.mrf.mxu0
    %624 = vdwg.mxu0
    %v626 = vsel %vm381, %v365, 0
    %v629 = vsel %vm381, %v366, 0
    %631 = vmatprep.subr.mxu0 0.0
    %632 = vmatpush1.msra.mxu0 0.0
    %633 = vmatprep.subr.mxu0 0.0
    %634 = vmatpush1.msra.mxu0 0.0
    %635 = vmatprep.subr.mxu0 0.0
    %636 = vmatpush1.msra.mxu0 0.0
    %637 = vmatprep.subr.mxu0 0.0
    %638 = vmatpush1.msra.mxu0 0.0
    %639 = vmatprep.subr.mxu0 0.0
    %640 = vmatpush1.msra.mxu0 0.0
    %641 = vmatprep.subr.mxu0 0.0
    %642 = vmatpush1.msra.mxu0 0.0
    %643 = vmatprep.subr.mxu0 0.0
    %644 = vmatpush1.msra.mxu0 0.0
    %645 = vmatprep.subr.mxu0 0.0
    %646 = vmatpush1.msra.mxu0 0.0
    %647 = vmatprep.subr.mxu0 0.0
    %648 = vmatpush1.msra.mxu0 0.0
    %649 = vmatprep.subr.mxu0 0.0
    %650 = vmatpush1.msra.mxu0 0.0
    %651 = vmatprep.subr.mxu0 0.0
    %652 = vmatpush1.msra.mxu0 0.0
    %653 = vmatprep.subr.mxu0 0.0
    %654 = vmatpush1.msra.mxu0 0.0
    %655 = vmatprep.subr.mxu0 0.0
    %656 = vmatpush1.msra.mxu0 0.0
    %657 = vmatprep.subr.mxu0 0.0
    %658 = vmatpush1.msra.mxu0 0.0
    %659 = vmatprep.subr.mxu0 0.0
    %660 = vmatpush1.msra.mxu0 0.0
    %661 = vmatprep.subr.mxu0 0.0
    %662 = vmatpush1.msra.mxu0 %v230
    %663 = vmatprep.subr.mxu0 0.0
    %664 = vmatpush2.msra.mxu0 0.0
    %665 = vmatprep.subr.mxu0 0.0
    %666 = vmatpush2.msra.mxu0 0.0
    %667 = vmatprep.subr.mxu0 0.0
    %668 = vmatpush2.msra.mxu0 0.0
    %669 = vmatprep.subr.mxu0 0.0
    %670 = vmatpush2.msra.mxu0 0.0
    %671 = vmatprep.subr.mxu0 0.0
    %672 = vmatpush2.msra.mxu0 0.0
    %673 = vmatprep.subr.mxu0 0.0
    %674 = vmatpush2.msra.mxu0 0.0
    %675 = vmatprep.subr.mxu0 0.0
    %676 = vmatpush2.msra.mxu0 0.0
    %677 = vmatprep.subr.mxu0 0.0
    %678 = vmatpush2.msra.mxu0 0.0
    %679 = vmatprep.subr.mxu0 0.0
    %680 = vmatpush2.msra.mxu0 0.0
    %681 = vmatprep.subr.mxu0 0.0
    %682 = vmatpush2.msra.mxu0 0.0
    %683 = vmatprep.subr.mxu0 0.0
    %684 = vmatpush2.msra.mxu0 0.0
    %685 = vmatprep.subr.mxu0 0.0
    %686 = vmatpush2.msra.mxu0 0.0
    %687 = vmatprep.subr.mxu0 0.0
    %688 = vmatpush2.msra.mxu0 0.0
    %689 = vmatprep.subr.mxu0 0.0
    %690 = vmatpush2.msra.mxu0 0.0
    %691 = vmatprep.subr.mxu0 0.0
    %692 = vmatpush2.msra.mxu0 0.0
    %693 = vmatprep.subr.mxu0 0.0
    %694 = vmatpush2.msra.mxu0 0.0
    %695 = vmatprep.mubr.f32.mxu0 0.0
    %696 = vmatmul.mubr.f32.gmra.mxu0 %v626
    %v697 = vpop.f32.mrf.mxu0
    %v698 = vadd.f32 0.0, %v697
    %v699 = vpop.f32.mrf.mxu0
    %700 = vmatprep.mubr.f32.mxu0 0.0
    %701 = vmatmul.mubr.f32.gmra.mxu0 %v629
    %v702 = vpop.f32.mrf.mxu0
    %v703 = vadd.f32 0.0, %v702
    %v704 = vpop.f32.mrf.mxu0
    %705 = vdwg.mxu0
    %v706 = vmul.f32 %v455, 0.35355338
    %v707 = vmul.f32 %v460, 0.35355338
    %v708 = vmul.f32 %v536, 0.35355338
    %v709 = vmul.f32 %v541, 0.35355338
    %v710 = vmul.f32 %v617, 0.35355338
    %v711 = vmul.f32 %v622, 0.35355338
    %v712 = vmul.f32 %v698, 0.35355338
    %v713 = vmul.f32 %v703, 0.35355338
    %v714 = vadd.f32 %v706, %v21
    %v715 = vadd.f32 %v707, %v22
    %v716 = vadd.f32 %v708, %v21
    %v717 = vadd.f32 %v709, %v22
    %v718 = vadd.f32 %v710, %v21
    %v719 = vadd.f32 %v711, %v22
    %v720 = vadd.f32 %v712, %v21
    %v721 = vadd.f32 %v713, %v22
    %vm722 = vcmask 130048
    %v723 = vsel %vm722, %v714, -inf
    %724 = vmax.xlane.f32.xlu0 %v723
    %v725 = vpop.xlane.xlu0 %724
    %v726 = vsel %vm722, %v715, -inf
    %727 = vmax.xlane.f32.xlu0 %v726
    %v728 = vpop.xlane.xlu0 %727
    %v729 = vsel %vm722, %v716, -inf
    %730 = vmax.xlane.f32.xlu0 %v729
    %v731 = vpop.xlane.xlu0 %730
    %v732 = vsel %vm722, %v717, -inf
    %733 = vmax.xlane.f32.xlu0 %v732
    %v734 = vpop.xlane.xlu0 %733
    %v735 = vsel %vm722, %v718, -inf
    %736 = vmax.xlane.f32.xlu0 %v735
    %v737 = vpop.xlane.xlu0 %736
    %v738 = vsel %vm722, %v719, -inf
    %739 = vmax.xlane.f32.xlu0 %v738
    %v740 = vpop.xlane.xlu0 %739
    %v741 = vsel %vm722, %v720, -inf
    %742 = vmax.xlane.f32.xlu0 %v741
    %v743 = vpop.xlane.xlu0 %742
    %v744 = vsel %vm722, %v721, -inf
    %745 = vmax.xlane.f32.xlu0 %v744
    %v746 = vpop.xlane.xlu0 %745
    %v747 = vsub.f32 %v714, %v725
    %v748 = vsub.f32 %v715, %v728
    %v749 = vsub.f32 %v716, %v731
    %v750 = vsub.f32 %v717, %v734
    %v751 = vsub.f32 %v718, %v737
    %v752 = vsub.f32 %v719, %v740
    %v753 = vsub.f32 %v720, %v743
    %v754 = vsub.f32 %v721, %v746
    %v755 = vmul.f32 %v747, 1.442695
    %v756 = vpow.pop %v755
    %v757 = vmul.f32 %v748, 1.442695
    %v758 = vpow.pop %v757
    %v759 = vmul.f32 %v749, 1.442695
    %v760 = vpow.pop %v759
    %v761 = vmul.f32 %v750, 1.442695
    %v762 = vpow.pop %v761
    %v763 = vmul.f32 %v751, 1.442695
    %v764 = vpow.pop %v763
    %v765 = vmul.f32 %v752, 1.442695
    %v766 = vpow.pop %v765
    %v767 = vmul.f32 %v753, 1.442695
    %v768 = vpow.pop %v767
    %v769 = vmul.f32 %v754, 1.442695
    %v770 = vpow.pop %v769
    %v771 = vsel %vm722, %v756, 0.0
    %772 = vadd.xlane.f32.xlu0 %v771
    %v773 = vpop.xlane.xlu0 %772
    %v774 = vsel %vm722, %v758, 0.0
    %775 = vadd.xlane.f32.xlu0 %v774
    %v776 = vpop.xlane.xlu0 %775
    %v777 = vsel %vm722, %v760, 0.0
    %778 = vadd.xlane.f32.xlu0 %v777
    %v779 = vpop.xlane.xlu0 %778
    %v780 = vsel %vm722, %v762, 0.0
    %781 = vadd.xlane.f32.xlu0 %v780
    %v782 = vpop.xlane.xlu0 %781
    %v783 = vsel %vm722, %v764, 0.0
    %784 = vadd.xlane.f32.xlu0 %v783
    %v785 = vpop.xlane.xlu0 %784
    %v786 = vsel %vm722, %v766, 0.0
    %787 = vadd.xlane.f32.xlu0 %v786
    %v788 = vpop.xlane.xlu0 %787
    %v789 = vsel %vm722, %v768, 0.0
    %790 = vadd.xlane.f32.xlu0 %v789
    %v791 = vpop.xlane.xlu0 %790
    %v792 = vsel %vm722, %v770, 0.0
    %793 = vadd.xlane.f32.xlu0 %v792
    %v794 = vpop.xlane.xlu0 %793
    %v795 = vrcp.pop %v773
    %v796 = vrcp.pop %v776
    %v797 = vrcp.pop %v779
    %v798 = vrcp.pop %v782
    %v799 = vrcp.pop %v785
    %v800 = vrcp.pop %v788
    %v801 = vrcp.pop %v791
    %v802 = vrcp.pop %v794
    %v803 = vmul.f32 %v756, %v795
    %v804 = vmul.f32 %v758, %v796
    %v805 = vmul.f32 %v760, %v797
    %v806 = vmul.f32 %v762, %v798
    %v807 = vmul.f32 %v764, %v799
    %v808 = vmul.f32 %v766, %v800
    %v809 = vmul.f32 %v768, %v801
    %v810 = vmul.f32 %v770, %v802
    %v812 = vsel %vm722, %v235, 0
    %v815 = vsel %vm722, %v803, 0
    %v818 = vsel %vm722, %v804, 0
    %820 = vmatprep.subr.mxu0 0.0
    %821 = vmatpush1.xpose.msra.mxu0 0.0
    %822 = vmatprep.subr.mxu0 0.0
    %823 = vmatpush1.xpose.msra.mxu0 0.0
    %824 = vmatprep.subr.mxu0 0.0
    %825 = vmatpush1.xpose.msra.mxu0 0.0
    %826 = vmatprep.subr.mxu0 0.0
    %827 = vmatpush1.xpose.msra.mxu0 0.0
    %828 = vmatprep.subr.mxu0 0.0
    %829 = vmatpush1.xpose.msra.mxu0 0.0
    %830 = vmatprep.subr.mxu0 0.0
    %831 = vmatpush1.xpose.msra.mxu0 0.0
    %832 = vmatprep.subr.mxu0 0.0
    %833 = vmatpush1.xpose.msra.mxu0 0.0
    %834 = vmatprep.subr.mxu0 0.0
    %835 = vmatpush1.xpose.msra.mxu0 0.0
    %836 = vmatprep.subr.mxu0 0.0
    %837 = vmatpush1.xpose.msra.mxu0 0.0
    %838 = vmatprep.subr.mxu0 0.0
    %839 = vmatpush1.xpose.msra.mxu0 0.0
    %840 = vmatprep.subr.mxu0 0.0
    %841 = vmatpush1.xpose.msra.mxu0 0.0
    %842 = vmatprep.subr.mxu0 0.0
    %843 = vmatpush1.xpose.msra.mxu0 0.0
    %844 = vmatprep.subr.mxu0 0.0
    %845 = vmatpush1.xpose.msra.mxu0 0.0
    %846 = vmatprep.subr.mxu0 0.0
    %847 = vmatpush1.xpose.msra.mxu0 0.0
    %848 = vmatprep.subr.mxu0 0.0
    %849 = vmatpush1.xpose.msra.mxu0 %v818
    %850 = vmatprep.subr.mxu0 0.0
    %851 = vmatpush1.xpose.msra.mxu0 %v815
    %852 = vmatprep.subr.mxu0 0.0
    %853 = vmatpush2.xpose.msra.mxu0 0.0
    %854 = vmatprep.subr.mxu0 0.0
    %855 = vmatpush2.xpose.msra.mxu0 0.0
    %856 = vmatprep.subr.mxu0 0.0
    %857 = vmatpush2.xpose.msra.mxu0 0.0
    %858 = vmatprep.subr.mxu0 0.0
    %859 = vmatpush2.xpose.msra.mxu0 0.0
    %860 = vmatprep.subr.mxu0 0.0
    %861 = vmatpush2.xpose.msra.mxu0 0.0
    %862 = vmatprep.subr.mxu0 0.0
    %863 = vmatpush2.xpose.msra.mxu0 0.0
    %864 = vmatprep.subr.mxu0 0.0
    %865 = vmatpush2.xpose.msra.mxu0 0.0
    %866 = vmatprep.subr.mxu0 0.0
    %867 = vmatpush2.xpose.msra.mxu0 0.0
    %868 = vmatprep.subr.mxu0 0.0
    %869 = vmatpush2.xpose.msra.mxu0 0.0
    %870 = vmatprep.subr.mxu0 0.0
    %871 = vmatpush2.xpose.msra.mxu0 0.0
    %872 = vmatprep.subr.mxu0 0.0
    %873 = vmatpush2.xpose.msra.mxu0 0.0
    %874 = vmatprep.subr.mxu0 0.0
    %875 = vmatpush2.xpose.msra.mxu0 0.0
    %876 = vmatprep.subr.mxu0 0.0
    %877 = vmatpush2.xpose.msra.mxu0 0.0
    %878 = vmatprep.subr.mxu0 0.0
    %879 = vmatpush2.xpose.msra.mxu0 0.0
    %880 = vmatprep.subr.mxu0 0.0
    %881 = vmatpush2.xpose.msra.mxu0 0.0
    %882 = vmatprep.subr.mxu0 0.0
    %883 = vmatpush2.xpose.msra.mxu0 0.0
    %884 = vmatprep.mubr.f32.mxu0 0.0
    %885 = vmatmul.mubr.f32.gmra.mxu0 %v812
    %v886 = vpop.f32.mrf.mxu0
    %v887 = vadd.f32 0.0, %v886
    %v888 = vpop.f32.mrf.mxu0
    %889 = vdwg.mxu0
    %v891 = vsel %vm722, %v240, 0
    %v894 = vsel %vm722, %v805, 0
    %v897 = vsel %vm722, %v806, 0
    %899 = vmatprep.subr.mxu0 0.0
    %900 = vmatpush1.xpose.msra.mxu0 0.0
    %901 = vmatprep.subr.mxu0 0.0
    %902 = vmatpush1.xpose.msra.mxu0 0.0
    %903 = vmatprep.subr.mxu0 0.0
    %904 = vmatpush1.xpose.msra.mxu0 0.0
    %905 = vmatprep.subr.mxu0 0.0
    %906 = vmatpush1.xpose.msra.mxu0 0.0
    %907 = vmatprep.subr.mxu0 0.0
    %908 = vmatpush1.xpose.msra.mxu0 0.0
    %909 = vmatprep.subr.mxu0 0.0
    %910 = vmatpush1.xpose.msra.mxu0 0.0
    %911 = vmatprep.subr.mxu0 0.0
    %912 = vmatpush1.xpose.msra.mxu0 0.0
    %913 = vmatprep.subr.mxu0 0.0
    %914 = vmatpush1.xpose.msra.mxu0 0.0
    %915 = vmatprep.subr.mxu0 0.0
    %916 = vmatpush1.xpose.msra.mxu0 0.0
    %917 = vmatprep.subr.mxu0 0.0
    %918 = vmatpush1.xpose.msra.mxu0 0.0
    %919 = vmatprep.subr.mxu0 0.0
    %920 = vmatpush1.xpose.msra.mxu0 0.0
    %921 = vmatprep.subr.mxu0 0.0
    %922 = vmatpush1.xpose.msra.mxu0 0.0
    %923 = vmatprep.subr.mxu0 0.0
    %924 = vmatpush1.xpose.msra.mxu0 0.0
    %925 = vmatprep.subr.mxu0 0.0
    %926 = vmatpush1.xpose.msra.mxu0 0.0
    %927 = vmatprep.subr.mxu0 0.0
    %928 = vmatpush1.xpose.msra.mxu0 %v897
    %929 = vmatprep.subr.mxu0 0.0
    %930 = vmatpush1.xpose.msra.mxu0 %v894
    %931 = vmatprep.subr.mxu0 0.0
    %932 = vmatpush2.xpose.msra.mxu0 0.0
    %933 = vmatprep.subr.mxu0 0.0
    %934 = vmatpush2.xpose.msra.mxu0 0.0
    %935 = vmatprep.subr.mxu0 0.0
    %936 = vmatpush2.xpose.msra.mxu0 0.0
    %937 = vmatprep.subr.mxu0 0.0
    %938 = vmatpush2.xpose.msra.mxu0 0.0
    %939 = vmatprep.subr.mxu0 0.0
    %940 = vmatpush2.xpose.msra.mxu0 0.0
    %941 = vmatprep.subr.mxu0 0.0
    %942 = vmatpush2.xpose.msra.mxu0 0.0
    %943 = vmatprep.subr.mxu0 0.0
    %944 = vmatpush2.xpose.msra.mxu0 0.0
    %945 = vmatprep.subr.mxu0 0.0
    %946 = vmatpush2.xpose.msra.mxu0 0.0
    %947 = vmatprep.subr.mxu0 0.0
    %948 = vmatpush2.xpose.msra.mxu0 0.0
    %949 = vmatprep.subr.mxu0 0.0
    %950 = vmatpush2.xpose.msra.mxu0 0.0
    %951 = vmatprep.subr.mxu0 0.0
    %952 = vmatpush2.xpose.msra.mxu0 0.0
    %953 = vmatprep.subr.mxu0 0.0
    %954 = vmatpush2.xpose.msra.mxu0 0.0
    %955 = vmatprep.subr.mxu0 0.0
    %956 = vmatpush2.xpose.msra.mxu0 0.0
    %957 = vmatprep.subr.mxu0 0.0
    %958 = vmatpush2.xpose.msra.mxu0 0.0
    %959 = vmatprep.subr.mxu0 0.0
    %960 = vmatpush2.xpose.msra.mxu0 0.0
    %961 = vmatprep.subr.mxu0 0.0
    %962 = vmatpush2.xpose.msra.mxu0 0.0
    %963 = vmatprep.mubr.f32.mxu0 0.0
    %964 = vmatmul.mubr.f32.gmra.mxu0 %v891
    %v965 = vpop.f32.mrf.mxu0
    %v966 = vadd.f32 0.0, %v965
    %v967 = vpop.f32.mrf.mxu0
    %968 = vdwg.mxu0
    %v970 = vsel %vm722, %v245, 0
    %v973 = vsel %vm722, %v807, 0
    %v976 = vsel %vm722, %v808, 0
    %978 = vmatprep.subr.mxu0 0.0
    %979 = vmatpush1.xpose.msra.mxu0 0.0
    %980 = vmatprep.subr.mxu0 0.0
    %981 = vmatpush1.xpose.msra.mxu0 0.0
    %982 = vmatprep.subr.mxu0 0.0
    %983 = vmatpush1.xpose.msra.mxu0 0.0
    %984 = vmatprep.subr.mxu0 0.0
    %985 = vmatpush1.xpose.msra.mxu0 0.0
    %986 = vmatprep.subr.mxu0 0.0
    %987 = vmatpush1.xpose.msra.mxu0 0.0
    %988 = vmatprep.subr.mxu0 0.0
    %989 = vmatpush1.xpose.msra.mxu0 0.0
    %990 = vmatprep.subr.mxu0 0.0
    %991 = vmatpush1.xpose.msra.mxu0 0.0
    %992 = vmatprep.subr.mxu0 0.0
    %993 = vmatpush1.xpose.msra.mxu0 0.0
    %994 = vmatprep.subr.mxu0 0.0
    %995 = vmatpush1.xpose.msra.mxu0 0.0
    %996 = vmatprep.subr.mxu0 0.0
    %997 = vmatpush1.xpose.msra.mxu0 0.0
    %998 = vmatprep.subr.mxu0 0.0
    %999 = vmatpush1.xpose.msra.mxu0 0.0
    %1000 = vmatprep.subr.mxu0 0.0
    %1001 = vmatpush1.xpose.msra.mxu0 0.0
    %1002 = vmatprep.subr.mxu0 0.0
    %1003 = vmatpush1.xpose.msra.mxu0 0.0
    %1004 = vmatprep.subr.mxu0 0.0
    %1005 = vmatpush1.xpose.msra.mxu0 0.0
    %1006 = vmatprep.subr.mxu0 0.0
    %1007 = vmatpush1.xpose.msra.mxu0 %v976
    %1008 = vmatprep.subr.mxu0 0.0
    %1009 = vmatpush1.xpose.msra.mxu0 %v973
    %1010 = vmatprep.subr.mxu0 0.0
    %1011 = vmatpush2.xpose.msra.mxu0 0.0
    %1012 = vmatprep.subr.mxu0 0.0
    %1013 = vmatpush2.xpose.msra.mxu0 0.0
    %1014 = vmatprep.subr.mxu0 0.0
    %1015 = vmatpush2.xpose.msra.mxu0 0.0
    %1016 = vmatprep.subr.mxu0 0.0
    %1017 = vmatpush2.xpose.msra.mxu0 0.0
    %1018 = vmatprep.subr.mxu0 0.0
    %1019 = vmatpush2.xpose.msra.mxu0 0.0
    %1020 = vmatprep.subr.mxu0 0.0
    %1021 = vmatpush2.xpose.msra.mxu0 0.0
    %1022 = vmatprep.subr.mxu0 0.0
    %1023 = vmatpush2.xpose.msra.mxu0 0.0
    %1024 = vmatprep.subr.mxu0 0.0
    %1025 = vmatpush2.xpose.msra.mxu0 0.0
    %1026 = vmatprep.subr.mxu0 0.0
    %1027 = vmatpush2.xpose.msra.mxu0 0.0
    %1028 = vmatprep.subr.mxu0 0.0
    %1029 = vmatpush2.xpose.msra.mxu0 0.0
    %1030 = vmatprep.subr.mxu0 0.0
    %1031 = vmatpush2.xpose.msra.mxu0 0.0
    %1032 = vmatprep.subr.mxu0 0.0
    %1033 = vmatpush2.xpose.msra.mxu0 0.0
    %1034 = vmatprep.subr.mxu0 0.0
    %1035 = vmatpush2.xpose.msra.mxu0 0.0
    %1036 = vmatprep.subr.mxu0 0.0
    %1037 = vmatpush2.xpose.msra.mxu0 0.0
    %1038 = vmatprep.subr.mxu0 0.0
    %1039 = vmatpush2.xpose.msra.mxu0 0.0
    %1040 = vmatprep.subr.mxu0 0.0
    %1041 = vmatpush2.xpose.msra.mxu0 0.0
    %1042 = vmatprep.mubr.f32.mxu0 0.0
    %1043 = vmatmul.mubr.f32.gmra.mxu0 %v970
    %v1044 = vpop.f32.mrf.mxu0
    %v1045 = vadd.f32 0.0, %v1044
    %v1046 = vpop.f32.mrf.mxu0
    %1047 = vdwg.mxu0
    %v1049 = vsel %vm722, %v250, 0
    %v1052 = vsel %vm722, %v809, 0
    %v1055 = vsel %vm722, %v810, 0
    %1057 = vmatprep.subr.mxu0 0.0
    %1058 = vmatpush1.xpose.msra.mxu0 0.0
    %1059 = vmatprep.subr.mxu0 0.0
    %1060 = vmatpush1.xpose.msra.mxu0 0.0
    %1061 = vmatprep.subr.mxu0 0.0
    %1062 = vmatpush1.xpose.msra.mxu0 0.0
    %1063 = vmatprep.subr.mxu0 0.0
    %1064 = vmatpush1.xpose.msra.mxu0 0.0
    %1065 = vmatprep.subr.mxu0 0.0
    %1066 = vmatpush1.xpose.msra.mxu0 0.0
    %1067 = vmatprep.subr.mxu0 0.0
    %1068 = vmatpush1.xpose.msra.mxu0 0.0
    %1069 = vmatprep.subr.mxu0 0.0
    %1070 = vmatpush1.xpose.msra.mxu0 0.0
    %1071 = vmatprep.subr.mxu0 0.0
    %1072 = vmatpush1.xpose.msra.mxu0 0.0
    %1073 = vmatprep.subr.mxu0 0.0
    %1074 = vmatpush1.xpose.msra.mxu0 0.0
    %1075 = vmatprep.subr.mxu0 0.0
    %1076 = vmatpush1.xpose.msra.mxu0 0.0
    %1077 = vmatprep.subr.mxu0 0.0
    %1078 = vmatpush1.xpose.msra.mxu0 0.0
    %1079 = vmatprep.subr.mxu0 0.0
    %1080 = vmatpush1.xpose.msra.mxu0 0.0
    %1081 = vmatprep.subr.mxu0 0.0
    %1082 = vmatpush1.xpose.msra.mxu0 0.0
    %1083 = vmatprep.subr.mxu0 0.0
    %1084 = vmatpush1.xpose.msra.mxu0 0.0
    %1085 = vmatprep.subr.mxu0 0.0
    %1086 = vmatpush1.xpose.msra.mxu0 %v1055
    %1087 = vmatprep.subr.mxu0 0.0
    %1088 = vmatpush1.xpose.msra.mxu0 %v1052
    %1089 = vmatprep.subr.mxu0 0.0
    %1090 = vmatpush2.xpose.msra.mxu0 0.0
    %1091 = vmatprep.subr.mxu0 0.0
    %1092 = vmatpush2.xpose.msra.mxu0 0.0
    %1093 = vmatprep.subr.mxu0 0.0
    %1094 = vmatpush2.xpose.msra.mxu0 0.0
    %1095 = vmatprep.subr.mxu0 0.0
    %1096 = vmatpush2.xpose.msra.mxu0 0.0
    %1097 = vmatprep.subr.mxu0 0.0
    %1098 = vmatpush2.xpose.msra.mxu0 0.0
    %1099 = vmatprep.subr.mxu0 0.0
    %1100 = vmatpush2.xpose.msra.mxu0 0.0
    %1101 = vmatprep.subr.mxu0 0.0
    %1102 = vmatpush2.xpose.msra.mxu0 0.0
    %1103 = vmatprep.subr.mxu0 0.0
    %1104 = vmatpush2.xpose.msra.mxu0 0.0
    %1105 = vmatprep.subr.mxu0 0.0
    %1106 = vmatpush2.xpose.msra.mxu0 0.0
    %1107 = vmatprep.subr.mxu0 0.0
    %1108 = vmatpush2.xpose.msra.mxu0 0.0
    %1109 = vmatprep.subr.mxu0 0.0
    %1110 = vmatpush2.xpose.msra.mxu0 0.0
    %1111 = vmatprep.subr.mxu0 0.0
    %1112 = vmatpush2.xpose.msra.mxu0 0.0
    %1113 = vmatprep.subr.mxu0 0.0
    %1114 = vmatpush2.xpose.msra.mxu0 0.0
    %1115 = vmatprep.subr.mxu0 0.0
    %1116 = vmatpush2.xpose.msra.mxu0 0.0
    %1117 = vmatprep.subr.mxu0 0.0
    %1118 = vmatpush2.xpose.msra.mxu0 0.0
    %1119 = vmatprep.subr.mxu0 0.0
    %1120 = vmatpush2.xpose.msra.mxu0 0.0
    %1121 = vmatprep.mubr.f32.mxu0 0.0
    %1122 = vmatmul.mubr.f32.gmra.mxu0 %v1049
    %v1123 = vpop.f32.mrf.mxu0
    %v1124 = vadd.f32 0.0, %v1123
    %v1125 = vpop.f32.mrf.mxu0
    %1126 = vdwg.mxu0
    %1127 = vxpose.xlu0.b32.start [1/16] %v887, 128
    %1128 = vxpose.xlu0.b32.cont [2/16] %v966, 128
    %1129 = vxpose.xlu0.b32.cont [3/16] %v1045, 128
    %1130 = vxpose.xlu0.b32.cont [4/16] %v1124, 128
    %1131 = vxpose.xlu0.b32.cont [5/16] 0.0, 128
    %1132 = vxpose.xlu0.b32.cont [6/16] 0.0, 128
    %1133 = vxpose.xlu0.b32.cont [7/16] 0.0, 128
    %1134 = vxpose.xlu0.b32.cont [8/16] 0.0, 128
    %1135 = vxpose.xlu0.b32.cont [9/16] 0.0, 128
    %1136 = vxpose.xlu0.b32.cont [10/16] 0.0, 128
    %1137 = vxpose.xlu0.b32.cont [11/16] 0.0, 128
    %1138 = vxpose.xlu0.b32.cont [12/16] 0.0, 128
    %1139 = vxpose.xlu0.b32.cont [13/16] 0.0, 128
    %1140 = vxpose.xlu0.b32.cont [14/16] 0.0, 128
    %1141 = vxpose.xlu0.b32.cont [15/16] 0.0, 128
    %1142 = vxpose.xlu0.b32.end [16/16] 0.0, 128
    %v1143 = vpop.trf.xlu0
    %v1144 = vpop.trf.xlu0
    %v1145 = vpop.trf.xlu0
    %v1146 = vpop.trf.xlu0
    %v1147 = vpop.trf.xlu0
    %v1148 = vpop.trf.xlu0
    %v1149 = vpop.trf.xlu0
    %v1150 = vpop.trf.xlu0
    %v1151 = vpop.trf.xlu0
    %v1152 = vpop.trf.xlu0
    %v1153 = vpop.trf.xlu0
    %v1154 = vpop.trf.xlu0
    %v1155 = vpop.trf.xlu0
    %v1156 = vpop.trf.xlu0
    %v1157 = vpop.trf.xlu0
    %v1158 = vpop.trf.xlu0
    %v1159 = vld [vmem:[%s2 + $0xc0] sm:$0xff]
    %v1160 = vld [vmem:[%s2 + $0xc8] sm:$0xff]
    %v1161 = vld [vmem:[%s2 + $0xd0] sm:$0xff]
    %v1162 = vld [vmem:[%s2 + $0xd8] sm:$0xff]
    %v1163 = vld [vmem:[%s2 + $0x160] sm:$0x1]
    %v1164 = vlaneseq
    %v1165 = vshrl.u32 %v1164, 7
    %v1166 = vsub.s32 0, %v1165
    %v1167 = vrot.slane %v1163, %v1166
    %v1169 = vsel %vm97, %v1143, 0
    %v1172 = vsel %vm97, %v1144, 0
    %1174 = vmatprep.subr.mxu0 0.0
    %1175 = vmatpush1.msra.mxu0 0.0
    %1176 = vmatprep.subr.mxu0 0.0
    %1177 = vmatpush1.msra.mxu0 0.0
    %1178 = vmatprep.subr.mxu0 0.0
    %1179 = vmatpush1.msra.mxu0 0.0
    %1180 = vmatprep.subr.mxu0 0.0
    %1181 = vmatpush1.msra.mxu0 0.0
    %1182 = vmatprep.subr.mxu0 0.0
    %1183 = vmatpush1.msra.mxu0 0.0
    %1184 = vmatprep.subr.mxu0 0.0
    %1185 = vmatpush1.msra.mxu0 0.0
    %1186 = vmatprep.subr.mxu0 0.0
    %1187 = vmatpush1.msra.mxu0 0.0
    %1188 = vmatprep.subr.mxu0 0.0
    %1189 = vmatpush1.msra.mxu0 0.0
    %1190 = vmatprep.subr.mxu0 0.0
    %1191 = vmatpush1.msra.mxu0 0.0
    %1192 = vmatprep.subr.mxu0 0.0
    %1193 = vmatpush1.msra.mxu0 0.0
    %1194 = vmatprep.subr.mxu0 0.0
    %1195 = vmatpush1.msra.mxu0 0.0
    %1196 = vmatprep.subr.mxu0 0.0
    %1197 = vmatpush1.msra.mxu0 0.0
    %1198 = vmatprep.subr.mxu0 0.0
    %1199 = vmatpush1.msra.mxu0 %v1162
    %1200 = vmatprep.subr.mxu0 0.0
    %1201 = vmatpush1.msra.mxu0 %v1161
    %1202 = vmatprep.subr.mxu0 0.0
    %1203 = vmatpush1.msra.mxu0 %v1160
    %1204 = vmatprep.subr.mxu0 0.0
    %1205 = vmatpush1.msra.mxu0 %v1159
    %1206 = vmatprep.subr.mxu0 0.0
    %1207 = vmatpush2.msra.mxu0 0.0
    %1208 = vmatprep.subr.mxu0 0.0
    %1209 = vmatpush2.msra.mxu0 0.0
    %1210 = vmatprep.subr.mxu0 0.0
    %1211 = vmatpush2.msra.mxu0 0.0
    %1212 = vmatprep.subr.mxu0 0.0
    %1213 = vmatpush2.msra.mxu0 0.0
    %1214 = vmatprep.subr.mxu0 0.0
    %1215 = vmatpush2.msra.mxu0 0.0
    %1216 = vmatprep.subr.mxu0 0.0
    %1217 = vmatpush2.msra.mxu0 0.0
    %1218 = vmatprep.subr.mxu0 0.0
    %1219 = vmatpush2.msra.mxu0 0.0
    %1220 = vmatprep.subr.mxu0 0.0
    %1221 = vmatpush2.msra.mxu0 0.0
    %1222 = vmatprep.subr.mxu0 0.0
    %1223 = vmatpush2.msra.mxu0 0.0
    %1224 = vmatprep.subr.mxu0 0.0
    %1225 = vmatpush2.msra.mxu0 0.0
    %1226 = vmatprep.subr.mxu0 0.0
    %1227 = vmatpush2.msra.mxu0 0.0
    %1228 = vmatprep.subr.mxu0 0.0
    %1229 = vmatpush2.msra.mxu0 0.0
    %1230 = vmatprep.subr.mxu0 0.0
    %1231 = vmatpush2.msra.mxu0 0.0
    %1232 = vmatprep.subr.mxu0 0.0
    %1233 = vmatpush2.msra.mxu0 0.0
    %1234 = vmatprep.subr.mxu0 0.0
    %1235 = vmatpush2.msra.mxu0 0.0
    %1236 = vmatprep.subr.mxu0 0.0
    %1237 = vmatpush2.msra.mxu0 0.0
    %1238 = vmatprep.mubr.f32.mxu0 0.0
    %1239 = vmatmul.mubr.f32.gmra.mxu0 %v1169
    %v1240 = vpop.f32.mrf.mxu0
    %v1241 = vadd.f32 %v1167, %v1240
    %v1242 = vpop.f32.mrf.mxu0
    %1243 = vmatprep.mubr.f32.mxu0 0.0
    %1244 = vmatmul.mubr.f32.gmra.mxu0 %v1172
    %v1245 = vpop.f32.mrf.mxu0
    %v1246 = vadd.f32 %v1167, %v1245
    %v1247 = vpop.f32.mrf.mxu0
    %1248 = vdwg.mxu0
    %v1249 = vadd.f32 %v15, %v1241
    %v1250 = vadd.f32 %v16, %v1246
    %v1252 = vsel %vm97, %v1249, 0
    %v1255 = vsel %vm97, %v1250, 0
    %1257 = vmatprep.subr.mxu0 0.0
    %1258 = vmatpush1.msra.mxu0 0.0
    %1259 = vmatprep.subr.mxu0 0.0
    %1260 = vmatpush1.msra.mxu0 0.0
    %1261 = vmatprep.subr.mxu0 0.0
    %1262 = vmatpush1.msra.mxu0 0.0
    %1263 = vmatprep.subr.mxu0 0.0
    %1264 = vmatpush1.msra.mxu0 0.0
    %1265 = vmatprep.subr.mxu0 0.0
    %1266 = vmatpush1.msra.mxu0 0.0
    %1267 = vmatprep.subr.mxu0 0.0
    %1268 = vmatpush1.msra.mxu0 0.0
    %1269 = vmatprep.subr.mxu0 0.0
    %1270 = vmatpush1.msra.mxu0 0.0
    %1271 = vmatprep.subr.mxu0 0.0
    %1272 = vmatpush1.msra.mxu0 0.0
    %1273 = vmatprep.subr.mxu0 0.0
    %1274 = vmatpush1.msra.mxu0 0.0
    %1275 = vmatprep.subr.mxu0 0.0
    %1276 = vmatpush1.msra.mxu0 0.0
    %1277 = vmatprep.subr.mxu0 0.0
    %1278 = vmatpush1.msra.mxu0 0.0
    %1279 = vmatprep.subr.mxu0 0.0
    %1280 = vmatpush1.msra.mxu0 0.0
    %1281 = vmatprep.subr.mxu0 0.0
    %1282 = vmatpush1.msra.mxu0 1.0
    %1283 = vmatprep.subr.mxu0 0.0
    %1284 = vmatpush1.msra.mxu0 1.0
    %1285 = vmatprep.subr.mxu0 0.0
    %1286 = vmatpush1.msra.mxu0 1.0
    %1287 = vmatprep.subr.mxu0 0.0
    %1288 = vmatpush1.msra.mxu0 1.0
    %1289 = vmatprep.subr.mxu0 0.0
    %1290 = vmatpush2.msra.mxu0 0.0
    %1291 = vmatprep.subr.mxu0 0.0
    %1292 = vmatpush2.msra.mxu0 0.0
    %1293 = vmatprep.subr.mxu0 0.0
    %1294 = vmatpush2.msra.mxu0 0.0
    %1295 = vmatprep.subr.mxu0 0.0
    %1296 = vmatpush2.msra.mxu0 0.0
    %1297 = vmatprep.subr.mxu0 0.0
    %1298 = vmatpush2.msra.mxu0 0.0
    %1299 = vmatprep.subr.mxu0 0.0
    %1300 = vmatpush2.msra.mxu0 0.0
    %1301 = vmatprep.subr.mxu0 0.0
    %1302 = vmatpush2.msra.mxu0 0.0
    %1303 = vmatprep.subr.mxu0 0.0
    %1304 = vmatpush2.msra.mxu0 0.0
    %1305 = vmatprep.subr.mxu0 0.0
    %1306 = vmatpush2.msra.mxu0 0.0
    %1307 = vmatprep.subr.mxu0 0.0
    %1308 = vmatpush2.msra.mxu0 0.0
    %1309 = vmatprep.subr.mxu0 0.0
    %1310 = vmatpush2.msra.mxu0 0.0
    %1311 = vmatprep.subr.mxu0 0.0
    %1312 = vmatpush2.msra.mxu0 0.0
    %1313 = vmatprep.subr.mxu0 0.0
    %1314 = vmatpush2.msra.mxu0 0.0
    %1315 = vmatprep.subr.mxu0 0.0
    %1316 = vmatpush2.msra.mxu0 0.0
    %1317 = vmatprep.subr.mxu0 0.0
    %1318 = vmatpush2.msra.mxu0 0.0
    %1319 = vmatprep.subr.mxu0 0.0
    %1320 = vmatpush2.msra.mxu0 0.0
    %1321 = vmatprep.mubr.f32.mxu0 0.0
    %1322 = vmatmul.mubr.f32.gmra.mxu0 %v1252
    %v1323 = vpop.f32.mrf.mxu0
    %v1324 = vadd.f32 0.0, %v1323
    %v1325 = vpop.f32.mrf.mxu0
    %1326 = vmatprep.mubr.f32.mxu0 0.0
    %1327 = vmatmul.mubr.f32.gmra.mxu0 %v1255
    %v1328 = vpop.f32.mrf.mxu0
    %v1329 = vadd.f32 0.0, %v1328
    %v1330 = vpop.f32.mrf.mxu0
    %1331 = vdwg.mxu0
    %v1332 = vmul.f32 %v1249, %v1249
    %v1333 = vmul.f32 %v1250, %v1250
    %v1335 = vsel %vm97, %v1332, 0
    %v1338 = vsel %vm97, %v1333, 0
    %1340 = vmatprep.subr.mxu0 0.0
    %1341 = vmatpush1.msra.mxu0 0.0
    %1342 = vmatprep.subr.mxu0 0.0
    %1343 = vmatpush1.msra.mxu0 0.0
    %1344 = vmatprep.subr.mxu0 0.0
    %1345 = vmatpush1.msra.mxu0 0.0
    %1346 = vmatprep.subr.mxu0 0.0
    %1347 = vmatpush1.msra.mxu0 0.0
    %1348 = vmatprep.subr.mxu0 0.0
    %1349 = vmatpush1.msra.mxu0 0.0
    %1350 = vmatprep.subr.mxu0 0.0
    %1351 = vmatpush1.msra.mxu0 0.0
    %1352 = vmatprep.subr.mxu0 0.0
    %1353 = vmatpush1.msra.mxu0 0.0
    %1354 = vmatprep.subr.mxu0 0.0
    %1355 = vmatpush1.msra.mxu0 0.0
    %1356 = vmatprep.subr.mxu0 0.0
    %1357 = vmatpush1.msra.mxu0 0.0
    %1358 = vmatprep.subr.mxu0 0.0
    %1359 = vmatpush1.msra.mxu0 0.0
    %1360 = vmatprep.subr.mxu0 0.0
    %1361 = vmatpush1.msra.mxu0 0.0
    %1362 = vmatprep.subr.mxu0 0.0
    %1363 = vmatpush1.msra.mxu0 0.0
    %1364 = vmatprep.subr.mxu0 0.0
    %1365 = vmatpush1.msra.mxu0 1.0
    %1366 = vmatprep.subr.mxu0 0.0
    %1367 = vmatpush1.msra.mxu0 1.0
    %1368 = vmatprep.subr.mxu0 0.0
    %1369 = vmatpush1.msra.mxu0 1.0
    %1370 = vmatprep.subr.mxu0 0.0
    %1371 = vmatpush1.msra.mxu0 1.0
    %1372 = vmatprep.subr.mxu0 0.0
    %1373 = vmatpush2.msra.mxu0 0.0
    %1374 = vmatprep.subr.mxu0 0.0
    %1375 = vmatpush2.msra.mxu0 0.0
    %1376 = vmatprep.subr.mxu0 0.0
    %1377 = vmatpush2.msra.mxu0 0.0
    %1378 = vmatprep.subr.mxu0 0.0
    %1379 = vmatpush2.msra.mxu0 0.0
    %1380 = vmatprep.subr.mxu0 0.0
    %1381 = vmatpush2.msra.mxu0 0.0
    %1382 = vmatprep.subr.mxu0 0.0
    %1383 = vmatpush2.msra.mxu0 0.0
    %1384 = vmatprep.subr.mxu0 0.0
    %1385 = vmatpush2.msra.mxu0 0.0
    %1386 = vmatprep.subr.mxu0 0.0
    %1387 = vmatpush2.msra.mxu0 0.0
    %1388 = vmatprep.subr.mxu0 0.0
    %1389 = vmatpush2.msra.mxu0 0.0
    %1390 = vmatprep.subr.mxu0 0.0
    %1391 = vmatpush2.msra.mxu0 0.0
    %1392 = vmatprep.subr.mxu0 0.0
    %1393 = vmatpush2.msra.mxu0 0.0
    %1394 = vmatprep.subr.mxu0 0.0
    %1395 = vmatpush2.msra.mxu0 0.0
    %1396 = vmatprep.subr.mxu0 0.0
    %1397 = vmatpush2.msra.mxu0 0.0
    %1398 = vmatprep.subr.mxu0 0.0
    %1399 = vmatpush2.msra.mxu0 0.0
    %1400 = vmatprep.subr.mxu0 0.0
    %1401 = vmatpush2.msra.mxu0 0.0
    %1402 = vmatprep.subr.mxu0 0.0
    %1403 = vmatpush2.msra.mxu0 0.0
    %1404 = vmatprep.mubr.f32.mxu0 0.0
    %1405 = vmatmul.mubr.f32.gmra.mxu0 %v1335
    %v1406 = vpop.f32.mrf.mxu0
    %v1407 = vadd.f32 0.0, %v1406
    %v1408 = vpop.f32.mrf.mxu0
    %1409 = vmatprep.mubr.f32.mxu0 0.0
    %1410 = vmatmul.mubr.f32.gmra.mxu0 %v1338
    %v1411 = vpop.f32.mrf.mxu0
    %v1412 = vadd.f32 0.0, %v1411
    %v1413 = vpop.f32.mrf.mxu0
    %1414 = vdwg.mxu0
    %v1415 = vmul.f32 %v1324, 0.03125
    %v1416 = vmul.f32 %v1329, 0.03125
    %v1417 = vmul.f32 %v1407, 0.03125
    %v1418 = vmul.f32 %v1412, 0.03125
    %v1419 = vmul.f32 %v1415, %v1415
    %v1420 = vmul.f32 %v1416, %v1416
    %v1421 = vsub.f32 %v1417, %v1419
    %v1422 = vsub.f32 %v1418, %v1420
    %1424 = vset.pattern.permute.xlu0 0
    %1425 = vperm.xlu0 %1424, %v1415
    %v1426 = vpop.permute.xlu0 %1425
    %1429 = vset.pattern.permute.xlu0 0
    %1430 = vperm.xlu0 %1429, %v1416
    %v1431 = vpop.permute.xlu0 %1430
    %v1433 = vsub.f32 %v1249, %v1426
    %v1434 = vsub.f32 %v1250, %v1431
    %v1435 = vadd.f32 %v1421, 1e-05
    %v1436 = vadd.f32 %v1422, 1e-05
    %v1437 = vrsqrt.pop %v1435
    %v1438 = vrsqrt.pop %v1436
    %1440 = vset.pattern.permute.xlu0 0
    %1441 = vperm.xlu0 %1440, %v1437
    %v1442 = vpop.permute.xlu0 %1441
    %1445 = vset.pattern.permute.xlu0 0
    %1446 = vperm.xlu0 %1445, %v1438
    %v1447 = vpop.permute.xlu0 %1446
    %v1449 = vmul.f32 %v1433, %v1442
    %v1450 = vmul.f32 %v1434, %v1447
    %v1451 = vld [vmem:[%s2 + $0x164] sm:$0x1]
    %v1452 = vlaneseq
    %v1453 = vshrl.u32 %v1452, 7
    %v1454 = vsub.s32 0, %v1453
    %v1455 = vrot.slane %v1451, %v1454
    %v1456 = vmul.f32 %v1449, %v1455
    %v1457 = vmul.f32 %v1450, %v1455
    %v1458 = vld [vmem:[%s2 + $0x165] sm:$0x1]
    %v1459 = vlaneseq
    %v1460 = vshrl.u32 %v1459, 7
    %v1461 = vsub.s32 0, %v1460
    %v1462 = vrot.slane %v1458, %v1461
    %v1463 = vadd.f32 %v1456, %v1462
    %v1464 = vadd.f32 %v1457, %v1462
    %v1465 = vld [vmem:[%s2 + $0x60] sm:$0xff]
    %v1466 = vld [vmem:[%s2 + $0x68] sm:$0xff]
    %v1467 = vld [vmem:[%s2 + $0x70] sm:$0xff]
    %v1468 = vld [vmem:[%s2 + $0x78] sm:$0xff]
    %1470 = vset.pattern.permute.xlu0 64
    %1471 = vperm.xlu0 %1470, %v1465
    %v1472 = vpop.permute.xlu0 %1471
    %1475 = vset.pattern.permute.xlu0 64
    %1476 = vperm.xlu0 %1475, %v1466
    %v1477 = vpop.permute.xlu0 %1476
    %1480 = vset.pattern.permute.xlu0 64
    %1481 = vperm.xlu0 %1480, %v1467
    %v1482 = vpop.permute.xlu0 %1481
    %1485 = vset.pattern.permute.xlu0 64
    %1486 = vperm.xlu0 %1485, %v1468
    %v1487 = vpop.permute.xlu0 %1486
    %v1489 = vsel %vm97, %v1465, 0
    %v1491 = vsel %vm97, %v1466, 0
    %v1493 = vsel %vm97, %v1467, 0
    %v1495 = vsel %vm97, %v1468, 0
    %v1498 = vsel %vm97, %v1463, 0
    %v1501 = vsel %vm97, %v1464, 0
    %1503 = vmatprep.subr.mxu0 0.0
    %1504 = vmatpush1.xpose.msra.mxu0 0.0
    %1505 = vmatprep.subr.mxu0 0.0
    %1506 = vmatpush1.xpose.msra.mxu0 0.0
    %1507 = vmatprep.subr.mxu0 0.0
    %1508 = vmatpush1.xpose.msra.mxu0 0.0
    %1509 = vmatprep.subr.mxu0 0.0
    %1510 = vmatpush1.xpose.msra.mxu0 0.0
    %1511 = vmatprep.subr.mxu0 0.0
    %1512 = vmatpush1.xpose.msra.mxu0 0.0
    %1513 = vmatprep.subr.mxu0 0.0
    %1514 = vmatpush1.xpose.msra.mxu0 0.0
    %1515 = vmatprep.subr.mxu0 0.0
    %1516 = vmatpush1.xpose.msra.mxu0 0.0
    %1517 = vmatprep.subr.mxu0 0.0
    %1518 = vmatpush1.xpose.msra.mxu0 0.0
    %1519 = vmatprep.subr.mxu0 0.0
    %1520 = vmatpush1.xpose.msra.mxu0 0.0
    %1521 = vmatprep.subr.mxu0 0.0
    %1522 = vmatpush1.xpose.msra.mxu0 0.0
    %1523 = vmatprep.subr.mxu0 0.0
    %1524 = vmatpush1.xpose.msra.mxu0 0.0
    %1525 = vmatprep.subr.mxu0 0.0
    %1526 = vmatpush1.xpose.msra.mxu0 0.0
    %1527 = vmatprep.subr.mxu0 0.0
    %1528 = vmatpush1.xpose.msra.mxu0 0.0
    %1529 = vmatprep.subr.mxu0 0.0
    %1530 = vmatpush1.xpose.msra.mxu0 0.0
    %1531 = vmatprep.subr.mxu0 0.0
    %1532 = vmatpush1.xpose.msra.mxu0 %v1501
    %1533 = vmatprep.subr.mxu0 0.0
    %1534 = vmatpush1.xpose.msra.mxu0 %v1498
    %1535 = vmatprep.subr.mxu0 0.0
    %1536 = vmatpush2.xpose.msra.mxu0 0.0
    %1537 = vmatprep.subr.mxu0 0.0
    %1538 = vmatpush2.xpose.msra.mxu0 0.0
    %1539 = vmatprep.subr.mxu0 0.0
    %1540 = vmatpush2.xpose.msra.mxu0 0.0
    %1541 = vmatprep.subr.mxu0 0.0
    %1542 = vmatpush2.xpose.msra.mxu0 0.0
    %1543 = vmatprep.subr.mxu0 0.0
    %1544 = vmatpush2.xpose.msra.mxu0 0.0
    %1545 = vmatprep.subr.mxu0 0.0
    %1546 = vmatpush2.xpose.msra.mxu0 0.0
    %1547 = vmatprep.subr.mxu0 0.0
    %1548 = vmatpush2.xpose.msra.mxu0 0.0
    %1549 = vmatprep.subr.mxu0 0.0
    %1550 = vmatpush2.xpose.msra.mxu0 0.0
    %1551 = vmatprep.subr.mxu0 0.0
    %1552 = vmatpush2.xpose.msra.mxu0 0.0
    %1553 = vmatprep.subr.mxu0 0.0
    %1554 = vmatpush2.xpose.msra.mxu0 0.0
    %1555 = vmatprep.subr.mxu0 0.0
    %1556 = vmatpush2.xpose.msra.mxu0 0.0
    %1557 = vmatprep.subr.mxu0 0.0
    %1558 = vmatpush2.xpose.msra.mxu0 0.0
    %1559 = vmatprep.subr.mxu0 0.0
    %1560 = vmatpush2.xpose.msra.mxu0 0.0
    %1561 = vmatprep.subr.mxu0 0.0
    %1562 = vmatpush2.xpose.msra.mxu0 0.0
    %1563 = vmatprep.subr.mxu0 0.0
    %1564 = vmatpush2.xpose.msra.mxu0 0.0
    %1565 = vmatprep.subr.mxu0 0.0
    %1566 = vmatpush2.xpose.msra.mxu0 0.0
    %1567 = vmatprep.mubr.f32.mxu0 0.0
    %1568 = vmatmul.mubr.f32.gmra.mxu0 %v1489
    %v1569 = vpop.f32.mrf.mxu0
    %v1570 = vadd.f32 %v1472, %v1569
    %v1571 = vpop.f32.mrf.mxu0
    %1572 = vmatprep.mubr.f32.mxu0 0.0
    %1573 = vmatmul.mubr.f32.gmra.mxu0 %v1491
    %v1574 = vpop.f32.mrf.mxu0
    %v1575 = vadd.f32 %v1477, %v1574
    %v1576 = vpop.f32.mrf.mxu0
    %1577 = vmatprep.mubr.f32.mxu0 0.0
    %1578 = vmatmul.mubr.f32.gmra.mxu0 %v1493
    %v1579 = vpop.f32.mrf.mxu0
    %v1580 = vadd.f32 %v1482, %v1579
    %v1581 = vpop.f32.mrf.mxu0
    %1582 = vmatprep.mubr.f32.mxu0 0.0
    %1583 = vmatmul.mubr.f32.gmra.mxu0 %v1495
    %v1584 = vpop.f32.mrf.mxu0
    %v1585 = vadd.f32 %v1487, %v1584
    %v1586 = vpop.f32.mrf.mxu0
    %1587 = vdwg.mxu0
    %v1588 = vld [vmem:[%s2 + $0x80] sm:$0xff]
    %v1589 = vld [vmem:[%s2 + $0x88] sm:$0xff]
    %v1590 = vld [vmem:[%s2 + $0x90] sm:$0xff]
    %v1591 = vld [vmem:[%s2 + $0x98] sm:$0xff]
    %v1592 = vld [vmem:[%s2 + $0xa0] sm:$0xff]
    %v1593 = vld [vmem:[%s2 + $0xa8] sm:$0xff]
    %v1594 = vld [vmem:[%s2 + $0xb0] sm:$0xff]
    %v1595 = vld [vmem:[%s2 + $0xb8] sm:$0xff]
    %1597 = vset.pattern.permute.xlu0 64
    %1598 = vperm.xlu0 %1597, %v1588
    %v1599 = vpop.permute.xlu0 %1598
    %1602 = vset.pattern.permute.xlu0 64
    %1603 = vperm.xlu0 %1602, %v1589
    %v1604 = vpop.permute.xlu0 %1603
    %1607 = vset.pattern.permute.xlu0 64
    %1608 = vperm.xlu0 %1607, %v1590
    %v1609 = vpop.permute.xlu0 %1608
    %1612 = vset.pattern.permute.xlu0 64
    %1613 = vperm.xlu0 %1612, %v1591
    %v1614 = vpop.permute.xlu0 %1613
    %1617 = vset.pattern.permute.xlu0 64
    %1618 = vperm.xlu0 %1617, %v1592
    %v1619 = vpop.permute.xlu0 %1618
    %1622 = vset.pattern.permute.xlu0 64
    %1623 = vperm.xlu0 %1622, %v1593
    %v1624 = vpop.permute.xlu0 %1623
    %1627 = vset.pattern.permute.xlu0 64
    %1628 = vperm.xlu0 %1627, %v1594
    %v1629 = vpop.permute.xlu0 %1628
    %1632 = vset.pattern.permute.xlu0 64
    %1633 = vperm.xlu0 %1632, %v1595
    %v1634 = vpop.permute.xlu0 %1633
    %v1636 = vsel %vm97, %v1588, 0
    %v1638 = vsel %vm97, %v1589, 0
    %v1640 = vsel %vm97, %v1590, 0
    %v1642 = vsel %vm97, %v1591, 0
    %v1644 = vsel %vm97, %v1592, 0
    %v1646 = vsel %vm97, %v1593, 0
    %v1648 = vsel %vm97, %v1594, 0
    %v1650 = vsel %vm97, %v1595, 0
    %v1653 = vsel %vm97, %v17, 0
    %v1656 = vsel %vm97, %v18, 0
    %v1659 = vsel %vm97, %v19, 0
    %v1662 = vsel %vm97, %v20, 0
    %1664 = vmatprep.subr.mxu0 0.0
    %1665 = vmatpush1.xpose.msra.mxu0 0.0
    %1666 = vmatprep.subr.mxu0 0.0
    %1667 = vmatpush1.xpose.msra.mxu0 0.0
    %1668 = vmatprep.subr.mxu0 0.0
    %1669 = vmatpush1.xpose.msra.mxu0 0.0
    %1670 = vmatprep.subr.mxu0 0.0
    %1671 = vmatpush1.xpose.msra.mxu0 0.0
    %1672 = vmatprep.subr.mxu0 0.0
    %1673 = vmatpush1.xpose.msra.mxu0 0.0
    %1674 = vmatprep.subr.mxu0 0.0
    %1675 = vmatpush1.xpose.msra.mxu0 0.0
    %1676 = vmatprep.subr.mxu0 0.0
    %1677 = vmatpush1.xpose.msra.mxu0 0.0
    %1678 = vmatprep.subr.mxu0 0.0
    %1679 = vmatpush1.xpose.msra.mxu0 0.0
    %1680 = vmatprep.subr.mxu0 0.0
    %1681 = vmatpush1.xpose.msra.mxu0 0.0
    %1682 = vmatprep.subr.mxu0 0.0
    %1683 = vmatpush1.xpose.msra.mxu0 0.0
    %1684 = vmatprep.subr.mxu0 0.0
    %1685 = vmatpush1.xpose.msra.mxu0 0.0
    %1686 = vmatprep.subr.mxu0 0.0
    %1687 = vmatpush1.xpose.msra.mxu0 0.0
    %1688 = vmatprep.subr.mxu0 0.0
    %1689 = vmatpush1.xpose.msra.mxu0 %v1662
    %1690 = vmatprep.subr.mxu0 0.0
    %1691 = vmatpush1.xpose.msra.mxu0 %v1659
    %1692 = vmatprep.subr.mxu0 0.0
    %1693 = vmatpush1.xpose.msra.mxu0 %v1656
    %1694 = vmatprep.subr.mxu0 0.0
    %1695 = vmatpush1.xpose.msra.mxu0 %v1653
    %1696 = vmatprep.subr.mxu0 0.0
    %1697 = vmatpush2.xpose.msra.mxu0 0.0
    %1698 = vmatprep.subr.mxu0 0.0
    %1699 = vmatpush2.xpose.msra.mxu0 0.0
    %1700 = vmatprep.subr.mxu0 0.0
    %1701 = vmatpush2.xpose.msra.mxu0 0.0
    %1702 = vmatprep.subr.mxu0 0.0
    %1703 = vmatpush2.xpose.msra.mxu0 0.0
    %1704 = vmatprep.subr.mxu0 0.0
    %1705 = vmatpush2.xpose.msra.mxu0 0.0
    %1706 = vmatprep.subr.mxu0 0.0
    %1707 = vmatpush2.xpose.msra.mxu0 0.0
    %1708 = vmatprep.subr.mxu0 0.0
    %1709 = vmatpush2.xpose.msra.mxu0 0.0
    %1710 = vmatprep.subr.mxu0 0.0
    %1711 = vmatpush2.xpose.msra.mxu0 0.0
    %1712 = vmatprep.subr.mxu0 0.0
    %1713 = vmatpush2.xpose.msra.mxu0 0.0
    %1714 = vmatprep.subr.mxu0 0.0
    %1715 = vmatpush2.xpose.msra.mxu0 0.0
    %1716 = vmatprep.subr.mxu0 0.0
    %1717 = vmatpush2.xpose.msra.mxu0 0.0
    %1718 = vmatprep.subr.mxu0 0.0
    %1719 = vmatpush2.xpose.msra.mxu0 0.0
    %1720 = vmatprep.subr.mxu0 0.0
    %1721 = vmatpush2.xpose.msra.mxu0 0.0
    %1722 = vmatprep.subr.mxu0 0.0
    %1723 = vmatpush2.xpose.msra.mxu0 0.0
    %1724 = vmatprep.subr.mxu0 0.0
    %1725 = vmatpush2.xpose.msra.mxu0 0.0
    %1726 = vmatprep.subr.mxu0 0.0
    %1727 = vmatpush2.xpose.msra.mxu0 0.0
    %1728 = vmatprep.mubr.f32.mxu0 0.0
    %1729 = vmatmul.mubr.f32.gmra.mxu0 %v1636
    %v1730 = vpop.f32.mrf.mxu0
    %v1731 = vadd.f32 %v1599, %v1730
    %v1732 = vpop.f32.mrf.mxu0
    %1733 = vmatprep.mubr.f32.mxu0 0.0
    %1734 = vmatmul.mubr.f32.gmra.mxu0 %v1638
    %v1735 = vpop.f32.mrf.mxu0
    %v1736 = vadd.f32 %v1604, %v1735
    %v1737 = vpop.f32.mrf.mxu0
    %1738 = vmatprep.mubr.f32.mxu0 0.0
    %1739 = vmatmul.mubr.f32.gmra.mxu0 %v1640
    %v1740 = vpop.f32.mrf.mxu0
    %v1741 = vadd.f32 %v1609, %v1740
    %v1742 = vpop.f32.mrf.mxu0
    %1743 = vmatprep.mubr.f32.mxu0 0.0
    %1744 = vmatmul.mubr.f32.gmra.mxu0 %v1642
    %v1745 = vpop.f32.mrf.mxu0
    %v1746 = vadd.f32 %v1614, %v1745
    %v1747 = vpop.f32.mrf.mxu0
    %1748 = vmatprep.mubr.f32.mxu0 0.0
    %1749 = vmatmul.mubr.f32.gmra.mxu0 %v1644
    %v1750 = vpop.f32.mrf.mxu0
    %v1751 = vadd.f32 %v1619, %v1750
    %v1752 = vpop.f32.mrf.mxu0
    %1753 = vmatprep.mubr.f32.mxu0 0.0
    %1754 = vmatmul.mubr.f32.gmra.mxu0 %v1646
    %v1755 = vpop.f32.mrf.mxu0
    %v1756 = vadd.f32 %v1624, %v1755
    %v1757 = vpop.f32.mrf.mxu0
    %1758 = vmatprep.mubr.f32.mxu0 0.0
    %1759 = vmatmul.mubr.f32.gmra.mxu0 %v1648
    %v1760 = vpop.f32.mrf.mxu0
    %v1761 = vadd.f32 %v1629, %v1760
    %v1762 = vpop.f32.mrf.mxu0
    %1763 = vmatprep.mubr.f32.mxu0 0.0
    %1764 = vmatmul.mubr.f32.gmra.mxu0 %v1650
    %v1765 = vpop.f32.mrf.mxu0
    %v1766 = vadd.f32 %v1634, %v1765
    %v1767 = vpop.f32.mrf.mxu0
    %1768 = vdwg.mxu0
    %1769 = vxpose.xlu0.b32.start [1/16] %v1570, 128
    %1770 = vxpose.xlu0.b32.cont [2/16] 0.0, 128
    %1771 = vxpose.xlu0.b32.cont [3/16] 0.0, 128
    %1772 = vxpose.xlu0.b32.cont [4/16] 0.0, 128
    %1773 = vxpose.xlu0.b32.cont [5/16] 0.0, 128
    %1774 = vxpose.xlu0.b32.cont [6/16] 0.0, 128
    %1775 = vxpose.xlu0.b32.cont [7/16] 0.0, 128
    %1776 = vxpose.xlu0.b32.cont [8/16] 0.0, 128
    %1777 = vxpose.xlu0.b32.cont [9/16] 0.0, 128
    %1778 = vxpose.xlu0.b32.cont [10/16] 0.0, 128
    %1779 = vxpose.xlu0.b32.cont [11/16] 0.0, 128
    %1780 = vxpose.xlu0.b32.cont [12/16] 0.0, 128
    %1781 = vxpose.xlu0.b32.cont [13/16] 0.0, 128
    %1782 = vxpose.xlu0.b32.cont [14/16] 0.0, 128
    %1783 = vxpose.xlu0.b32.cont [15/16] 0.0, 128
    %1784 = vxpose.xlu0.b32.end [16/16] 0.0, 128
    %v1785 = vpop.trf.xlu0
    %v1786 = vpop.trf.xlu0
    %v1787 = vpop.trf.xlu0
    %v1788 = vpop.trf.xlu0
    %v1789 = vpop.trf.xlu0
    %v1790 = vpop.trf.xlu0
    %v1791 = vpop.trf.xlu0
    %v1792 = vpop.trf.xlu0
    %v1793 = vpop.trf.xlu0
    %v1794 = vpop.trf.xlu0
    %v1795 = vpop.trf.xlu0
    %v1796 = vpop.trf.xlu0
    %v1797 = vpop.trf.xlu0
    %v1798 = vpop.trf.xlu0
    %v1799 = vpop.trf.xlu0
    %v1800 = vpop.trf.xlu0
    %1801 = vxpose.xlu0.b32.start [1/16] %v1575, 128
    %1802 = vxpose.xlu0.b32.cont [2/16] 0.0, 128
    %1803 = vxpose.xlu0.b32.cont [3/16] 0.0, 128
    %1804 = vxpose.xlu0.b32.cont [4/16] 0.0, 128
    %1805 = vxpose.xlu0.b32.cont [5/16] 0.0, 128
    %1806 = vxpose.xlu0.b32.cont [6/16] 0.0, 128
    %1807 = vxpose.xlu0.b32.cont [7/16] 0.0, 128
    %1808 = vxpose.xlu0.b32.cont [8/16] 0.0, 128
    %1809 = vxpose.xlu0.b32.cont [9/16] 0.0, 128
    %1810 = vxpose.xlu0.b32.cont [10/16] 0.0, 128
    %1811 = vxpose.xlu0.b32.cont [11/16] 0.0, 128
    %1812 = vxpose.xlu0.b32.cont [12/16] 0.0, 128
    %1813 = vxpose.xlu0.b32.cont [13/16] 0.0, 128
    %1814 = vxpose.xlu0.b32.cont [14/16] 0.0, 128
    %1815 = vxpose.xlu0.b32.cont [15/16] 0.0, 128
    %1816 = vxpose.xlu0.b32.end [16/16] 0.0, 128
    %v1817 = vpop.trf.xlu0
    %v1818 = vpop.trf.xlu0
    %v1819 = vpop.trf.xlu0
    %v1820 = vpop.trf.xlu0
    %v1821 = vpop.trf.xlu0
    %v1822 = vpop.trf.xlu0
    %v1823 = vpop.trf.xlu0
    %v1824 = vpop.trf.xlu0
    %v1825 = vpop.trf.xlu0
    %v1826 = vpop.trf.xlu0
    %v1827 = vpop.trf.xlu0
    %v1828 = vpop.trf.xlu0
    %v1829 = vpop.trf.xlu0
    %v1830 = vpop.trf.xlu0
    %v1831 = vpop.trf.xlu0
    %v1832 = vpop.trf.xlu0
    %1833 = vxpose.xlu0.b32.start [1/16] %v1580, 128
    %1834 = vxpose.xlu0.b32.cont [2/16] 0.0, 128
    %1835 = vxpose.xlu0.b32.cont [3/16] 0.0, 128
    %1836 = vxpose.xlu0.b32.cont [4/16] 0.0, 128
    %1837 = vxpose.xlu0.b32.cont [5/16] 0.0, 128
    %1838 = vxpose.xlu0.b32.cont [6/16] 0.0, 128
    %1839 = vxpose.xlu0.b32.cont [7/16] 0.0, 128
    %1840 = vxpose.xlu0.b32.cont [8/16] 0.0, 128
    %1841 = vxpose.xlu0.b32.cont [9/16] 0.0, 128
    %1842 = vxpose.xlu0.b32.cont [10/16] 0.0, 128
    %1843 = vxpose.xlu0.b32.cont [11/16] 0.0, 128
    %1844 = vxpose.xlu0.b32.cont [12/16] 0.0, 128
    %1845 = vxpose.xlu0.b32.cont [13/16] 0.0, 128
    %1846 = vxpose.xlu0.b32.cont [14/16] 0.0, 128
    %1847 = vxpose.xlu0.b32.cont [15/16] 0.0, 128
    %1848 = vxpose.xlu0.b32.end [16/16] 0.0, 128
    %v1849 = vpop.trf.xlu0
    %v1850 = vpop.trf.xlu0
    %v1851 = vpop.trf.xlu0
    %v1852 = vpop.trf.xlu0
    %v1853 = vpop.trf.xlu0
    %v1854 = vpop.trf.xlu0
    %v1855 = vpop.trf.xlu0
    %v1856 = vpop.trf.xlu0
    %v1857 = vpop.trf.xlu0
    %v1858 = vpop.trf.xlu0
    %v1859 = vpop.trf.xlu0
    %v1860 = vpop.trf.xlu0
    %v1861 = vpop.trf.xlu0
    %v1862 = vpop.trf.xlu0
    %v1863 = vpop.trf.xlu0
    %v1864 = vpop.trf.xlu0
    %1865 = vxpose.xlu0.b32.start [1/16] %v1585, 128
    %1866 = vxpose.xlu0.b32.cont [2/16] 0.0, 128
    %1867 = vxpose.xlu0.b32.cont [3/16] 0.0, 128
    %1868 = vxpose.xlu0.b32.cont [4/16] 0.0, 128
    %1869 = vxpose.xlu0.b32.cont [5/16] 0.0, 128
    %1870 = vxpose.xlu0.b32.cont [6/16] 0.0, 128
    %1871 = vxpose.xlu0.b32.cont [7/16] 0.0, 128
    %1872 = vxpose.xlu0.b32.cont [8/16] 0.0, 128
    %1873 = vxpose.xlu0.b32.cont [9/16] 0.0, 128
    %1874 = vxpose.xlu0.b32.cont [10/16] 0.0, 128
    %1875 = vxpose.xlu0.b32.cont [11/16] 0.0, 128
    %1876 = vxpose.xlu0.b32.cont [12/16] 0.0, 128
    %1877 = vxpose.xlu0.b32.cont [13/16] 0.0, 128
    %1878 = vxpose.xlu0.b32.cont [14/16] 0.0, 128
    %1879 = vxpose.xlu0.b32.cont [15/16] 0.0, 128
    %1880 = vxpose.xlu0.b32.end [16/16] 0.0, 128
    %v1881 = vpop.trf.xlu0
    %v1882 = vpop.trf.xlu0
    %v1883 = vpop.trf.xlu0
    %v1884 = vpop.trf.xlu0
    %v1885 = vpop.trf.xlu0
    %v1886 = vpop.trf.xlu0
    %v1887 = vpop.trf.xlu0
    %v1888 = vpop.trf.xlu0
    %v1889 = vpop.trf.xlu0
    %v1890 = vpop.trf.xlu0
    %v1891 = vpop.trf.xlu0
    %v1892 = vpop.trf.xlu0
    %v1893 = vpop.trf.xlu0
    %v1894 = vpop.trf.xlu0
    %v1895 = vpop.trf.xlu0
    %v1896 = vpop.trf.xlu0
    %v1898 = vsel %vm381, %v1785, 0
    %v1901 = vsel %vm381, %v1786, 0
    %1903 = vmatprep.subr.mxu0 0.0
    %1904 = vmatpush1.msra.mxu0 0.0
    %1905 = vmatprep.subr.mxu0 0.0
    %1906 = vmatpush1.msra.mxu0 0.0
    %1907 = vmatprep.subr.mxu0 0.0
    %1908 = vmatpush1.msra.mxu0 0.0
    %1909 = vmatprep.subr.mxu0 0.0
    %1910 = vmatpush1.msra.mxu0 0.0
    %1911 = vmatprep.subr.mxu0 0.0
    %1912 = vmatpush1.msra.mxu0 0.0
    %1913 = vmatprep.subr.mxu0 0.0
    %1914 = vmatpush1.msra.mxu0 0.0
    %1915 = vmatprep.subr.mxu0 0.0
    %1916 = vmatpush1.msra.mxu0 0.0
    %1917 = vmatprep.subr.mxu0 0.0
    %1918 = vmatpush1.msra.mxu0 0.0
    %1919 = vmatprep.subr.mxu0 0.0
    %1920 = vmatpush1.msra.mxu0 0.0
    %1921 = vmatprep.subr.mxu0 0.0
    %1922 = vmatpush1.msra.mxu0 0.0
    %1923 = vmatprep.subr.mxu0 0.0
    %1924 = vmatpush1.msra.mxu0 0.0
    %1925 = vmatprep.subr.mxu0 0.0
    %1926 = vmatpush1.msra.mxu0 0.0
    %1927 = vmatprep.subr.mxu0 0.0
    %1928 = vmatpush1.msra.mxu0 0.0
    %1929 = vmatprep.subr.mxu0 0.0
    %1930 = vmatpush1.msra.mxu0 0.0
    %1931 = vmatprep.subr.mxu0 0.0
    %1932 = vmatpush1.msra.mxu0 0.0
    %1933 = vmatprep.subr.mxu0 0.0
    %1934 = vmatpush1.msra.mxu0 %v1731
    %1935 = vmatprep.subr.mxu0 0.0
    %1936 = vmatpush2.msra.mxu0 0.0
    %1937 = vmatprep.subr.mxu0 0.0
    %1938 = vmatpush2.msra.mxu0 0.0
    %1939 = vmatprep.subr.mxu0 0.0
    %1940 = vmatpush2.msra.mxu0 0.0
    %1941 = vmatprep.subr.mxu0 0.0
    %1942 = vmatpush2.msra.mxu0 0.0
    %1943 = vmatprep.subr.mxu0 0.0
    %1944 = vmatpush2.msra.mxu0 0.0
    %1945 = vmatprep.subr.mxu0 0.0
    %1946 = vmatpush2.msra.mxu0 0.0
    %1947 = vmatprep.subr.mxu0 0.0
    %1948 = vmatpush2.msra.mxu0 0.0
    %1949 = vmatprep.subr.mxu0 0.0
    %1950 = vmatpush2.msra.mxu0 0.0
    %1951 = vmatprep.subr.mxu0 0.0
    %1952 = vmatpush2.msra.mxu0 0.0
    %1953 = vmatprep.subr.mxu0 0.0
    %1954 = vmatpush2.msra.mxu0 0.0
    %1955 = vmatprep.subr.mxu0 0.0
    %1956 = vmatpush2.msra.mxu0 0.0
    %1957 = vmatprep.subr.mxu0 0.0
    %1958 = vmatpush2.msra.mxu0 0.0
    %1959 = vmatprep.subr.mxu0 0.0
    %1960 = vmatpush2.msra.mxu0 0.0
    %1961 = vmatprep.subr.mxu0 0.0
    %1962 = vmatpush2.msra.mxu0 0.0
    %1963 = vmatprep.subr.mxu0 0.0
    %1964 = vmatpush2.msra.mxu0 0.0
    %1965 = vmatprep.subr.mxu0 0.0
    %1966 = vmatpush2.msra.mxu0 0.0
    %1967 = vmatprep.mubr.f32.mxu0 0.0
    %1968 = vmatmul.mubr.f32.gmra.mxu0 %v1898
    %v1969 = vpop.f32.mrf.mxu0
    %v1970 = vadd.f32 0.0, %v1969
    %v1971 = vpop.f32.mrf.mxu0
    %1972 = vmatprep.mubr.f32.mxu0 0.0
    %1973 = vmatmul.mubr.f32.gmra.mxu0 %v1901
    %v1974 = vpop.f32.mrf.mxu0
    %v1975 = vadd.f32 0.0, %v1974
    %v1976 = vpop.f32.mrf.mxu0
    %1977 = vdwg.mxu0
    %v1979 = vsel %vm381, %v1817, 0
    %v1982 = vsel %vm381, %v1818, 0
    %1984 = vmatprep.subr.mxu0 0.0
    %1985 = vmatpush1.msra.mxu0 0.0
    %1986 = vmatprep.subr.mxu0 0.0
    %1987 = vmatpush1.msra.mxu0 0.0
    %1988 = vmatprep.subr.mxu0 0.0
    %1989 = vmatpush1.msra.mxu0 0.0
    %1990 = vmatprep.subr.mxu0 0.0
    %1991 = vmatpush1.msra.mxu0 0.0
    %1992 = vmatprep.subr.mxu0 0.0
    %1993 = vmatpush1.msra.mxu0 0.0
    %1994 = vmatprep.subr.mxu0 0.0
    %1995 = vmatpush1.msra.mxu0 0.0
    %1996 = vmatprep.subr.mxu0 0.0
    %1997 = vmatpush1.msra.mxu0 0.0
    %1998 = vmatprep.subr.mxu0 0.0
    %1999 = vmatpush1.msra.mxu0 0.0
    %2000 = vmatprep.subr.mxu0 0.0
    %2001 = vmatpush1.msra.mxu0 0.0
    %2002 = vmatprep.subr.mxu0 0.0
    %2003 = vmatpush1.msra.mxu0 0.0
    %2004 = vmatprep.subr.mxu0 0.0
    %2005 = vmatpush1.msra.mxu0 0.0
    %2006 = vmatprep.subr.mxu0 0.0
    %2007 = vmatpush1.msra.mxu0 0.0
    %2008 = vmatprep.subr.mxu0 0.0
    %2009 = vmatpush1.msra.mxu0 0.0
    %2010 = vmatprep.subr.mxu0 0.0
    %2011 = vmatpush1.msra.mxu0 0.0
    %2012 = vmatprep.subr.mxu0 0.0
    %2013 = vmatpush1.msra.mxu0 0.0
    %2014 = vmatprep.subr.mxu0 0.0
    %2015 = vmatpush1.msra.mxu0 %v1736
    %2016 = vmatprep.subr.mxu0 0.0
    %2017 = vmatpush2.msra.mxu0 0.0
    %2018 = vmatprep.subr.mxu0 0.0
    %2019 = vmatpush2.msra.mxu0 0.0
    %2020 = vmatprep.subr.mxu0 0.0
    %2021 = vmatpush2.msra.mxu0 0.0
    %2022 = vmatprep.subr.mxu0 0.0
    %2023 = vmatpush2.msra.mxu0 0.0
    %2024 = vmatprep.subr.mxu0 0.0
    %2025 = vmatpush2.msra.mxu0 0.0
    %2026 = vmatprep.subr.mxu0 0.0
    %2027 = vmatpush2.msra.mxu0 0.0
    %2028 = vmatprep.subr.mxu0 0.0
    %2029 = vmatpush2.msra.mxu0 0.0
    %2030 = vmatprep.subr.mxu0 0.0
    %2031 = vmatpush2.msra.mxu0 0.0
    %2032 = vmatprep.subr.mxu0 0.0
    %2033 = vmatpush2.msra.mxu0 0.0
    %2034 = vmatprep.subr.mxu0 0.0
    %2035 = vmatpush2.msra.mxu0 0.0
    %2036 = vmatprep.subr.mxu0 0.0
    %2037 = vmatpush2.msra.mxu0 0.0
    %2038 = vmatprep.subr.mxu0 0.0
    %2039 = vmatpush2.msra.mxu0 0.0
    %2040 = vmatprep.subr.mxu0 0.0
    %2041 = vmatpush2.msra.mxu0 0.0
    %2042 = vmatprep.subr.mxu0 0.0
    %2043 = vmatpush2.msra.mxu0 0.0
    %2044 = vmatprep.subr.mxu0 0.0
    %2045 = vmatpush2.msra.mxu0 0.0
    %2046 = vmatprep.subr.mxu0 0.0
    %2047 = vmatpush2.msra.mxu0 0.0
    %2048 = vmatprep.mubr.f32.mxu0 0.0
    %2049 = vmatmul.mubr.f32.gmra.mxu0 %v1979
    %v2050 = vpop.f32.mrf.mxu0
    %v2051 = vadd.f32 0.0, %v2050
    %v2052 = vpop.f32.mrf.mxu0
    %2053 = vmatprep.mubr.f32.mxu0 0.0
    %2054 = vmatmul.mubr.f32.gmra.mxu0 %v1982
    %v2055 = vpop.f32.mrf.mxu0
    %v2056 = vadd.f32 0.0, %v2055
    %v2057 = vpop.f32.mrf.mxu0
    %2058 = vdwg.mxu0
    %v2060 = vsel %vm381, %v1849, 0
    %v2063 = vsel %vm381, %v1850, 0
    %2065 = vmatprep.subr.mxu0 0.0
    %2066 = vmatpush1.msra.mxu0 0.0
    %2067 = vmatprep.subr.mxu0 0.0
    %2068 = vmatpush1.msra.mxu0 0.0
    %2069 = vmatprep.subr.mxu0 0.0
    %2070 = vmatpush1.msra.mxu0 0.0
    %2071 = vmatprep.subr.mxu0 0.0
    %2072 = vmatpush1.msra.mxu0 0.0
    %2073 = vmatprep.subr.mxu0 0.0
    %2074 = vmatpush1.msra.mxu0 0.0
    %2075 = vmatprep.subr.mxu0 0.0
    %2076 = vmatpush1.msra.mxu0 0.0
    %2077 = vmatprep.subr.mxu0 0.0
    %2078 = vmatpush1.msra.mxu0 0.0
    %2079 = vmatprep.subr.mxu0 0.0
    %2080 = vmatpush1.msra.mxu0 0.0
    %2081 = vmatprep.subr.mxu0 0.0
    %2082 = vmatpush1.msra.mxu0 0.0
    %2083 = vmatprep.subr.mxu0 0.0
    %2084 = vmatpush1.msra.mxu0 0.0
    %2085 = vmatprep.subr.mxu0 0.0
    %2086 = vmatpush1.msra.mxu0 0.0
    %2087 = vmatprep.subr.mxu0 0.0
    %2088 = vmatpush1.msra.mxu0 0.0
    %2089 = vmatprep.subr.mxu0 0.0
    %2090 = vmatpush1.msra.mxu0 0.0
    %2091 = vmatprep.subr.mxu0 0.0
    %2092 = vmatpush1.msra.mxu0 0.0
    %2093 = vmatprep.subr.mxu0 0.0
    %2094 = vmatpush1.msra.mxu0 0.0
    %2095 = vmatprep.subr.mxu0 0.0
    %2096 = vmatpush1.msra.mxu0 %v1741
    %2097 = vmatprep.subr.mxu0 0.0
    %2098 = vmatpush2.msra.mxu0 0.0
    %2099 = vmatprep.subr.mxu0 0.0
    %2100 = vmatpush2.msra.mxu0 0.0
    %2101 = vmatprep.subr.mxu0 0.0
    %2102 = vmatpush2.msra.mxu0 0.0
    %2103 = vmatprep.subr.mxu0 0.0
    %2104 = vmatpush2.msra.mxu0 0.0
    %2105 = vmatprep.subr.mxu0 0.0
    %2106 = vmatpush2.msra.mxu0 0.0
    %2107 = vmatprep.subr.mxu0 0.0
    %2108 = vmatpush2.msra.mxu0 0.0
    %2109 = vmatprep.subr.mxu0 0.0
    %2110 = vmatpush2.msra.mxu0 0.0
    %2111 = vmatprep.subr.mxu0 0.0
    %2112 = vmatpush2.msra.mxu0 0.0
    %2113 = vmatprep.subr.mxu0 0.0
    %2114 = vmatpush2.msra.mxu0 0.0
    %2115 = vmatprep.subr.mxu0 0.0
    %2116 = vmatpush2.msra.mxu0 0.0
    %2117 = vmatprep.subr.mxu0 0.0
    %2118 = vmatpush2.msra.mxu0 0.0
    %2119 = vmatprep.subr.mxu0 0.0
    %2120 = vmatpush2.msra.mxu0 0.0
    %2121 = vmatprep.subr.mxu0 0.0
    %2122 = vmatpush2.msra.mxu0 0.0
    %2123 = vmatprep.subr.mxu0 0.0
    %2124 = vmatpush2.msra.mxu0 0.0
    %2125 = vmatprep.subr.mxu0 0.0
    %2126 = vmatpush2.msra.mxu0 0.0
    %2127 = vmatprep.subr.mxu0 0.0
    %2128 = vmatpush2.msra.mxu0 0.0
    %2129 = vmatprep.mubr.f32.mxu0 0.0
    %2130 = vmatmul.mubr.f32.gmra.mxu0 %v2060
    %v2131 = vpop.f32.mrf.mxu0
    %v2132 = vadd.f32 0.0, %v2131
    %v2133 = vpop.f32.mrf.mxu0
    %2134 = vmatprep.mubr.f32.mxu0 0.0
    %2135 = vmatmul.mubr.f32.gmra.mxu0 %v2063
    %v2136 = vpop.f32.mrf.mxu0
    %v2137 = vadd.f32 0.0, %v2136
    %v2138 = vpop.f32.mrf.mxu0
    %2139 = vdwg.mxu0
    %v2141 = vsel %vm381, %v1881, 0
    %v2144 = vsel %vm381, %v1882, 0
    %2146 = vmatprep.subr.mxu0 0.0
    %2147 = vmatpush1.msra.mxu0 0.0
    %2148 = vmatprep.subr.mxu0 0.0
    %2149 = vmatpush1.msra.mxu0 0.0
    %2150 = vmatprep.subr.mxu0 0.0
    %2151 = vmatpush1.msra.mxu0 0.0
    %2152 = vmatprep.subr.mxu0 0.0
    %2153 = vmatpush1.msra.mxu0 0.0
    %2154 = vmatprep.subr.mxu0 0.0
    %2155 = vmatpush1.msra.mxu0 0.0
    %2156 = vmatprep.subr.mxu0 0.0
    %2157 = vmatpush1.msra.mxu0 0.0
    %2158 = vmatprep.subr.mxu0 0.0
    %2159 = vmatpush1.msra.mxu0 0.0
    %2160 = vmatprep.subr.mxu0 0.0
    %2161 = vmatpush1.msra.mxu0 0.0
    %2162 = vmatprep.subr.mxu0 0.0
    %2163 = vmatpush1.msra.mxu0 0.0
    %2164 = vmatprep.subr.mxu0 0.0
    %2165 = vmatpush1.msra.mxu0 0.0
    %2166 = vmatprep.subr.mxu0 0.0
    %2167 = vmatpush1.msra.mxu0 0.0
    %2168 = vmatprep.subr.mxu0 0.0
    %2169 = vmatpush1.msra.mxu0 0.0
    %2170 = vmatprep.subr.mxu0 0.0
    %2171 = vmatpush1.msra.mxu0 0.0
    %2172 = vmatprep.subr.mxu0 0.0
    %2173 = vmatpush1.msra.mxu0 0.0
    %2174 = vmatprep.subr.mxu0 0.0
    %2175 = vmatpush1.msra.mxu0 0.0
    %2176 = vmatprep.subr.mxu0 0.0
    %2177 = vmatpush1.msra.mxu0 %v1746
    %2178 = vmatprep.subr.mxu0 0.0
    %2179 = vmatpush2.msra.mxu0 0.0
    %2180 = vmatprep.subr.mxu0 0.0
    %2181 = vmatpush2.msra.mxu0 0.0
    %2182 = vmatprep.subr.mxu0 0.0
    %2183 = vmatpush2.msra.mxu0 0.0
    %2184 = vmatprep.subr.mxu0 0.0
    %2185 = vmatpush2.msra.mxu0 0.0
    %2186 = vmatprep.subr.mxu0 0.0
    %2187 = vmatpush2.msra.mxu0 0.0
    %2188 = vmatprep.subr.mxu0 0.0
    %2189 = vmatpush2.msra.mxu0 0.0
    %2190 = vmatprep.subr.mxu0 0.0
    %2191 = vmatpush2.msra.mxu0 0.0
    %2192 = vmatprep.subr.mxu0 0.0
    %2193 = vmatpush2.msra.mxu0 0.0
    %2194 = vmatprep.subr.mxu0 0.0
    %2195 = vmatpush2.msra.mxu0 0.0
    %2196 = vmatprep.subr.mxu0 0.0
    %2197 = vmatpush2.msra.mxu0 0.0
    %2198 = vmatprep.subr.mxu0 0.0
    %2199 = vmatpush2.msra.mxu0 0.0
    %2200 = vmatprep.subr.mxu0 0.0
    %2201 = vmatpush2.msra.mxu0 0.0
    %2202 = vmatprep.subr.mxu0 0.0
    %2203 = vmatpush2.msra.mxu0 0.0
    %2204 = vmatprep.subr.mxu0 0.0
    %2205 = vmatpush2.msra.mxu0 0.0
    %2206 = vmatprep.subr.mxu0 0.0
    %2207 = vmatpush2.msra.mxu0 0.0
    %2208 = vmatprep.subr.mxu0 0.0
    %2209 = vmatpush2.msra.mxu0 0.0
    %2210 = vmatprep.mubr.f32.mxu0 0.0
    %2211 = vmatmul.mubr.f32.gmra.mxu0 %v2141
    %v2212 = vpop.f32.mrf.mxu0
    %v2213 = vadd.f32 0.0, %v2212
    %v2214 = vpop.f32.mrf.mxu0
    %2215 = vmatprep.mubr.f32.mxu0 0.0
    %2216 = vmatmul.mubr.f32.gmra.mxu0 %v2144
    %v2217 = vpop.f32.mrf.mxu0
    %v2218 = vadd.f32 0.0, %v2217
    %v2219 = vpop.f32.mrf.mxu0
    %2220 = vdwg.mxu0
    %v2221 = vmul.f32 %v1970, 0.35355338
    %v2222 = vmul.f32 %v1975, 0.35355338
    %v2223 = vmul.f32 %v2051, 0.35355338
    %v2224 = vmul.f32 %v2056, 0.35355338
    %v2225 = vmul.f32 %v2132, 0.35355338
    %v2226 = vmul.f32 %v2137, 0.35355338
    %v2227 = vmul.f32 %v2213, 0.35355338
    %v2228 = vmul.f32 %v2218, 0.35355338
    %v2229 = vadd.f32 %v2221, %v23
    %v2230 = vadd.f32 %v2222, %v24
    %v2231 = vadd.f32 %v2223, %v23
    %v2232 = vadd.f32 %v2224, %v24
    %v2233 = vadd.f32 %v2225, %v23
    %v2234 = vadd.f32 %v2226, %v24
    %v2235 = vadd.f32 %v2227, %v23
    %v2236 = vadd.f32 %v2228, %v24
    %v2237 = vsel %vm97, %v2229, -inf
    %2238 = vmax.xlane.f32.xlu0 %v2237
    %v2239 = vpop.xlane.xlu0 %2238
    %v2240 = vsel %vm97, %v2230, -inf
    %2241 = vmax.xlane.f32.xlu0 %v2240
    %v2242 = vpop.xlane.xlu0 %2241
    %v2243 = vsel %vm97, %v2231, -inf
    %2244 = vmax.xlane.f32.xlu0 %v2243
    %v2245 = vpop.xlane.xlu0 %2244
    %v2246 = vsel %vm97, %v2232, -inf
    %2247 = vmax.xlane.f32.xlu0 %v2246
    %v2248 = vpop.xlane.xlu0 %2247
    %v2249 = vsel %vm97, %v2233, -inf
    %2250 = vmax.xlane.f32.xlu0 %v2249
    %v2251 = vpop.xlane.xlu0 %2250
    %v2252 = vsel %vm97, %v2234, -inf
    %2253 = vmax.xlane.f32.xlu0 %v2252
    %v2254 = vpop.xlane.xlu0 %2253
    %v2255 = vsel %vm97, %v2235, -inf
    %2256 = vmax.xlane.f32.xlu0 %v2255
    %v2257 = vpop.xlane.xlu0 %2256
    %v2258 = vsel %vm97, %v2236, -inf
    %2259 = vmax.xlane.f32.xlu0 %v2258
    %v2260 = vpop.xlane.xlu0 %2259
    %v2261 = vsub.f32 %v2229, %v2239
    %v2262 = vsub.f32 %v2230, %v2242
    %v2263 = vsub.f32 %v2231, %v2245
    %v2264 = vsub.f32 %v2232, %v2248
    %v2265 = vsub.f32 %v2233, %v2251
    %v2266 = vsub.f32 %v2234, %v2254
    %v2267 = vsub.f32 %v2235, %v2257
    %v2268 = vsub.f32 %v2236, %v2260
    %v2269 = vmul.f32 %v2261, 1.442695
    %v2270 = vpow.pop %v2269
    %v2271 = vmul.f32 %v2262, 1.442695
    %v2272 = vpow.pop %v2271
    %v2273 = vmul.f32 %v2263, 1.442695
    %v2274 = vpow.pop %v2273
    %v2275 = vmul.f32 %v2264, 1.442695
    %v2276 = vpow.pop %v2275
    %v2277 = vmul.f32 %v2265, 1.442695
    %v2278 = vpow.pop %v2277
    %v2279 = vmul.f32 %v2266, 1.442695
    %v2280 = vpow.pop %v2279
    %v2281 = vmul.f32 %v2267, 1.442695
    %v2282 = vpow.pop %v2281
    %v2283 = vmul.f32 %v2268, 1.442695
    %v2284 = vpow.pop %v2283
    %v2285 = vsel %vm97, %v2270, 0.0
    %2286 = vadd.xlane.f32.xlu0 %v2285
    %v2287 = vpop.xlane.xlu0 %2286
    %v2288 = vsel %vm97, %v2272, 0.0
    %2289 = vadd.xlane.f32.xlu0 %v2288
    %v2290 = vpop.xlane.xlu0 %2289
    %v2291 = vsel %vm97, %v2274, 0.0
    %2292 = vadd.xlane.f32.xlu0 %v2291
    %v2293 = vpop.xlane.xlu0 %2292
    %v2294 = vsel %vm97, %v2276, 0.0
    %2295 = vadd.xlane.f32.xlu0 %v2294
    %v2296 = vpop.xlane.xlu0 %2295
    %v2297 = vsel %vm97, %v2278, 0.0
    %2298 = vadd.xlane.f32.xlu0 %v2297
    %v2299 = vpop.xlane.xlu0 %2298
    %v2300 = vsel %vm97, %v2280, 0.0
    %2301 = vadd.xlane.f32.xlu0 %v2300
    %v2302 = vpop.xlane.xlu0 %2301
    %v2303 = vsel %vm97, %v2282, 0.0
    %2304 = vadd.xlane.f32.xlu0 %v2303
    %v2305 = vpop.xlane.xlu0 %2304
    %v2306 = vsel %vm97, %v2284, 0.0
    %2307 = vadd.xlane.f32.xlu0 %v2306
    %v2308 = vpop.xlane.xlu0 %2307
    %v2309 = vrcp.pop %v2287
    %v2310 = vrcp.pop %v2290
    %v2311 = vrcp.pop %v2293
    %v2312 = vrcp.pop %v2296
    %v2313 = vrcp.pop %v2299
    %v2314 = vrcp.pop %v2302
    %v2315 = vrcp.pop %v2305
    %v2316 = vrcp.pop %v2308
    %v2317 = vmul.f32 %v2270, %v2309
    %v2318 = vmul.f32 %v2272, %v2310
    %v2319 = vmul.f32 %v2274, %v2311
    %v2320 = vmul.f32 %v2276, %v2312
    %v2321 = vmul.f32 %v2278, %v2313
    %v2322 = vmul.f32 %v2280, %v2314
    %v2323 = vmul.f32 %v2282, %v2315
    %v2324 = vmul.f32 %v2284, %v2316
    %v2326 = vsel %vm97, %v1751, 0
    %v2329 = vsel %vm97, %v2317, 0
    %v2332 = vsel %vm97, %v2318, 0
    %2334 = vmatprep.subr.mxu0 0.0
    %2335 = vmatpush1.xpose.msra.mxu0 0.0
    %2336 = vmatprep.subr.mxu0 0.0
    %2337 = vmatpush1.xpose.msra.mxu0 0.0
    %2338 = vmatprep.subr.mxu0 0.0
    %2339 = vmatpush1.xpose.msra.mxu0 0.0
    %2340 = vmatprep.subr.mxu0 0.0
    %2341 = vmatpush1.xpose.msra.mxu0 0.0
    %2342 = vmatprep.subr.mxu0 0.0
    %2343 = vmatpush1.xpose.msra.mxu0 0.0
    %2344 = vmatprep.subr.mxu0 0.0
    %2345 = vmatpush1.xpose.msra.mxu0 0.0
    %2346 = vmatprep.subr.mxu0 0.0
    %2347 = vmatpush1.xpose.msra.mxu0 0.0
    %2348 = vmatprep.subr.mxu0 0.0
    %2349 = vmatpush1.xpose.msra.mxu0 0.0
    %2350 = vmatprep.subr.mxu0 0.0
    %2351 = vmatpush1.xpose.msra.mxu0 0.0
    %2352 = vmatprep.subr.mxu0 0.0
    %2353 = vmatpush1.xpose.msra.mxu0 0.0
    %2354 = vmatprep.subr.mxu0 0.0
    %2355 = vmatpush1.xpose.msra.mxu0 0.0
    %2356 = vmatprep.subr.mxu0 0.0
    %2357 = vmatpush1.xpose.msra.mxu0 0.0
    %2358 = vmatprep.subr.mxu0 0.0
    %2359 = vmatpush1.xpose.msra.mxu0 0.0
    %2360 = vmatprep.subr.mxu0 0.0
    %2361 = vmatpush1.xpose.msra.mxu0 0.0
    %2362 = vmatprep.subr.mxu0 0.0
    %2363 = vmatpush1.xpose.msra.mxu0 %v2332
    %2364 = vmatprep.subr.mxu0 0.0
    %2365 = vmatpush1.xpose.msra.mxu0 %v2329
    %2366 = vmatprep.subr.mxu0 0.0
    %2367 = vmatpush2.xpose.msra.mxu0 0.0
    %2368 = vmatprep.subr.mxu0 0.0
    %2369 = vmatpush2.xpose.msra.mxu0 0.0
    %2370 = vmatprep.subr.mxu0 0.0
    %2371 = vmatpush2.xpose.msra.mxu0 0.0
    %2372 = vmatprep.subr.mxu0 0.0
    %2373 = vmatpush2.xpose.msra.mxu0 0.0
    %2374 = vmatprep.subr.mxu0 0.0
    %2375 = vmatpush2.xpose.msra.mxu0 0.0
    %2376 = vmatprep.subr.mxu0 0.0
    %2377 = vmatpush2.xpose.msra.mxu0 0.0
    %2378 = vmatprep.subr.mxu0 0.0
    %2379 = vmatpush2.xpose.msra.mxu0 0.0
    %2380 = vmatprep.subr.mxu0 0.0
    %2381 = vmatpush2.xpose.msra.mxu0 0.0
    %2382 = vmatprep.subr.mxu0 0.0
    %2383 = vmatpush2.xpose.msra.mxu0 0.0
    %2384 = vmatprep.subr.mxu0 0.0
    %2385 = vmatpush2.xpose.msra.mxu0 0.0
    %2386 = vmatprep.subr.mxu0 0.0
    %2387 = vmatpush2.xpose.msra.mxu0 0.0
    %2388 = vmatprep.subr.mxu0 0.0
    %2389 = vmatpush2.xpose.msra.mxu0 0.0
    %2390 = vmatprep.subr.mxu0 0.0
    %2391 = vmatpush2.xpose.msra.mxu0 0.0
    %2392 = vmatprep.subr.mxu0 0.0
    %2393 = vmatpush2.xpose.msra.mxu0 0.0
    %2394 = vmatprep.subr.mxu0 0.0
    %2395 = vmatpush2.xpose.msra.mxu0 0.0
    %2396 = vmatprep.subr.mxu0 0.0
    %2397 = vmatpush2.xpose.msra.mxu0 0.0
    %2398 = vmatprep.mubr.f32.mxu0 0.0
    %2399 = vmatmul.mubr.f32.gmra.mxu0 %v2326
    %v2400 = vpop.f32.mrf.mxu0
    %v2401 = vadd.f32 0.0, %v2400
    %v2402 = vpop.f32.mrf.mxu0
    %2403 = vdwg.mxu0
    %v2405 = vsel %vm97, %v1756, 0
    %v2408 = vsel %vm97, %v2319, 0
    %v2411 = vsel %vm97, %v2320, 0
    %2413 = vmatprep.subr.mxu0 0.0
    %2414 = vmatpush1.xpose.msra.mxu0 0.0
    %2415 = vmatprep.subr.mxu0 0.0
    %2416 = vmatpush1.xpose.msra.mxu0 0.0
    %2417 = vmatprep.subr.mxu0 0.0
    %2418 = vmatpush1.xpose.msra.mxu0 0.0
    %2419 = vmatprep.subr.mxu0 0.0
    %2420 = vmatpush1.xpose.msra.mxu0 0.0
    %2421 = vmatprep.subr.mxu0 0.0
    %2422 = vmatpush1.xpose.msra.mxu0 0.0
    %2423 = vmatprep.subr.mxu0 0.0
    %2424 = vmatpush1.xpose.msra.mxu0 0.0
    %2425 = vmatprep.subr.mxu0 0.0
    %2426 = vmatpush1.xpose.msra.mxu0 0.0
    %2427 = vmatprep.subr.mxu0 0.0
    %2428 = vmatpush1.xpose.msra.mxu0 0.0
    %2429 = vmatprep.subr.mxu0 0.0
    %2430 = vmatpush1.xpose.msra.mxu0 0.0
    %2431 = vmatprep.subr.mxu0 0.0
    %2432 = vmatpush1.xpose.msra.mxu0 0.0
    %2433 = vmatprep.subr.mxu0 0.0
    %2434 = vmatpush1.xpose.msra.mxu0 0.0
    %2435 = vmatprep.subr.mxu0 0.0
    %2436 = vmatpush1.xpose.msra.mxu0 0.0
    %2437 = vmatprep.subr.mxu0 0.0
    %2438 = vmatpush1.xpose.msra.mxu0 0.0
    %2439 = vmatprep.subr.mxu0 0.0
    %2440 = vmatpush1.xpose.msra.mxu0 0.0
    %2441 = vmatprep.subr.mxu0 0.0
    %2442 = vmatpush1.xpose.msra.mxu0 %v2411
    %2443 = vmatprep.subr.mxu0 0.0
    %2444 = vmatpush1.xpose.msra.mxu0 %v2408
    %2445 = vmatprep.subr.mxu0 0.0
    %2446 = vmatpush2.xpose.msra.mxu0 0.0
    %2447 = vmatprep.subr.mxu0 0.0
    %2448 = vmatpush2.xpose.msra.mxu0 0.0
    %2449 = vmatprep.subr.mxu0 0.0
    %2450 = vmatpush2.xpose.msra.mxu0 0.0
    %2451 = vmatprep.subr.mxu0 0.0
    %2452 = vmatpush2.xpose.msra.mxu0 0.0
    %2453 = vmatprep.subr.mxu0 0.0
    %2454 = vmatpush2.xpose.msra.mxu0 0.0
    %2455 = vmatprep.subr.mxu0 0.0
    %2456 = vmatpush2.xpose.msra.mxu0 0.0
    %2457 = vmatprep.subr.mxu0 0.0
    %2458 = vmatpush2.xpose.msra.mxu0 0.0
    %2459 = vmatprep.subr.mxu0 0.0
    %2460 = vmatpush2.xpose.msra.mxu0 0.0
    %2461 = vmatprep.subr.mxu0 0.0
    %2462 = vmatpush2.xpose.msra.mxu0 0.0
    %2463 = vmatprep.subr.mxu0 0.0
    %2464 = vmatpush2.xpose.msra.mxu0 0.0
    %2465 = vmatprep.subr.mxu0 0.0
    %2466 = vmatpush2.xpose.msra.mxu0 0.0
    %2467 = vmatprep.subr.mxu0 0.0
    %2468 = vmatpush2.xpose.msra.mxu0 0.0
    %2469 = vmatprep.subr.mxu0 0.0
    %2470 = vmatpush2.xpose.msra.mxu0 0.0
    %2471 = vmatprep.subr.mxu0 0.0
    %2472 = vmatpush2.xpose.msra.mxu0 0.0
    %2473 = vmatprep.subr.mxu0 0.0
    %2474 = vmatpush2.xpose.msra.mxu0 0.0
    %2475 = vmatprep.subr.mxu0 0.0
    %2476 = vmatpush2.xpose.msra.mxu0 0.0
    %2477 = vmatprep.mubr.f32.mxu0 0.0
    %2478 = vmatmul.mubr.f32.gmra.mxu0 %v2405
    %v2479 = vpop.f32.mrf.mxu0
    %v2480 = vadd.f32 0.0, %v2479
    %v2481 = vpop.f32.mrf.mxu0
    %2482 = vdwg.mxu0
    %v2484 = vsel %vm97, %v1761, 0
    %v2487 = vsel %vm97, %v2321, 0
    %v2490 = vsel %vm97, %v2322, 0
    %2492 = vmatprep.subr.mxu0 0.0
    %2493 = vmatpush1.xpose.msra.mxu0 0.0
    %2494 = vmatprep.subr.mxu0 0.0
    %2495 = vmatpush1.xpose.msra.mxu0 0.0
    %2496 = vmatprep.subr.mxu0 0.0
    %2497 = vmatpush1.xpose.msra.mxu0 0.0
    %2498 = vmatprep.subr.mxu0 0.0
    %2499 = vmatpush1.xpose.msra.mxu0 0.0
    %2500 = vmatprep.subr.mxu0 0.0
    %2501 = vmatpush1.xpose.msra.mxu0 0.0
    %2502 = vmatprep.subr.mxu0 0.0
    %2503 = vmatpush1.xpose.msra.mxu0 0.0
    %2504 = vmatprep.subr.mxu0 0.0
    %2505 = vmatpush1.xpose.msra.mxu0 0.0
    %2506 = vmatprep.subr.mxu0 0.0
    %2507 = vmatpush1.xpose.msra.mxu0 0.0
    %2508 = vmatprep.subr.mxu0 0.0
    %2509 = vmatpush1.xpose.msra.mxu0 0.0
    %2510 = vmatprep.subr.mxu0 0.0
    %2511 = vmatpush1.xpose.msra.mxu0 0.0
    %2512 = vmatprep.subr.mxu0 0.0
    %2513 = vmatpush1.xpose.msra.mxu0 0.0
    %2514 = vmatprep.subr.mxu0 0.0
    %2515 = vmatpush1.xpose.msra.mxu0 0.0
    %2516 = vmatprep.subr.mxu0 0.0
    %2517 = vmatpush1.xpose.msra.mxu0 0.0
    %2518 = vmatprep.subr.mxu0 0.0
    %2519 = vmatpush1.xpose.msra.mxu0 0.0
    %2520 = vmatprep.subr.mxu0 0.0
    %2521 = vmatpush1.xpose.msra.mxu0 %v2490
    %2522 = vmatprep.subr.mxu0 0.0
    %2523 = vmatpush1.xpose.msra.mxu0 %v2487
    %2524 = vmatprep.subr.mxu0 0.0
    %2525 = vmatpush2.xpose.msra.mxu0 0.0
    %2526 = vmatprep.subr.mxu0 0.0
    %2527 = vmatpush2.xpose.msra.mxu0 0.0
    %2528 = vmatprep.subr.mxu0 0.0
    %2529 = vmatpush2.xpose.msra.mxu0 0.0
    %2530 = vmatprep.subr.mxu0 0.0
    %2531 = vmatpush2.xpose.msra.mxu0 0.0
    %2532 = vmatprep.subr.mxu0 0.0
    %2533 = vmatpush2.xpose.msra.mxu0 0.0
    %2534 = vmatprep.subr.mxu0 0.0
    %2535 = vmatpush2.xpose.msra.mxu0 0.0
    %2536 = vmatprep.subr.mxu0 0.0
    %2537 = vmatpush2.xpose.msra.mxu0 0.0
    %2538 = vmatprep.subr.mxu0 0.0
    %2539 = vmatpush2.xpose.msra.mxu0 0.0
    %2540 = vmatprep.subr.mxu0 0.0
    %2541 = vmatpush2.xpose.msra.mxu0 0.0
    %2542 = vmatprep.subr.mxu0 0.0
    %2543 = vmatpush2.xpose.msra.mxu0 0.0
    %2544 = vmatprep.subr.mxu0 0.0
    %2545 = vmatpush2.xpose.msra.mxu0 0.0
    %2546 = vmatprep.subr.mxu0 0.0
    %2547 = vmatpush2.xpose.msra.mxu0 0.0
    %2548 = vmatprep.subr.mxu0 0.0
    %2549 = vmatpush2.xpose.msra.mxu0 0.0
    %2550 = vmatprep.subr.mxu0 0.0
    %2551 = vmatpush2.xpose.msra.mxu0 0.0
    %2552 = vmatprep.subr.mxu0 0.0
    %2553 = vmatpush2.xpose.msra.mxu0 0.0
    %2554 = vmatprep.subr.mxu0 0.0
    %2555 = vmatpush2.xpose.msra.mxu0 0.0
    %2556 = vmatprep.mubr.f32.mxu0 0.0
    %2557 = vmatmul.mubr.f32.gmra.mxu0 %v2484
    %v2558 = vpop.f32.mrf.mxu0
    %v2559 = vadd.f32 0.0, %v2558
    %v2560 = vpop.f32.mrf.mxu0
    %2561 = vdwg.mxu0
    %v2563 = vsel %vm97, %v1766, 0
    %v2566 = vsel %vm97, %v2323, 0
    %v2569 = vsel %vm97, %v2324, 0
    %2571 = vmatprep.subr.mxu0 0.0
    %2572 = vmatpush1.xpose.msra.mxu0 0.0
    %2573 = vmatprep.subr.mxu0 0.0
    %2574 = vmatpush1.xpose.msra.mxu0 0.0
    %2575 = vmatprep.subr.mxu0 0.0
    %2576 = vmatpush1.xpose.msra.mxu0 0.0
    %2577 = vmatprep.subr.mxu0 0.0
    %2578 = vmatpush1.xpose.msra.mxu0 0.0
    %2579 = vmatprep.subr.mxu0 0.0
    %2580 = vmatpush1.xpose.msra.mxu0 0.0
    %2581 = vmatprep.subr.mxu0 0.0
    %2582 = vmatpush1.xpose.msra.mxu0 0.0
    %2583 = vmatprep.subr.mxu0 0.0
    %2584 = vmatpush1.xpose.msra.mxu0 0.0
    %2585 = vmatprep.subr.mxu0 0.0
    %2586 = vmatpush1.xpose.msra.mxu0 0.0
    %2587 = vmatprep.subr.mxu0 0.0
    %2588 = vmatpush1.xpose.msra.mxu0 0.0
    %2589 = vmatprep.subr.mxu0 0.0
    %2590 = vmatpush1.xpose.msra.mxu0 0.0
    %2591 = vmatprep.subr.mxu0 0.0
    %2592 = vmatpush1.xpose.msra.mxu0 0.0
    %2593 = vmatprep.subr.mxu0 0.0
    %2594 = vmatpush1.xpose.msra.mxu0 0.0
    %2595 = vmatprep.subr.mxu0 0.0
    %2596 = vmatpush1.xpose.msra.mxu0 0.0
    %2597 = vmatprep.subr.mxu0 0.0
    %2598 = vmatpush1.xpose.msra.mxu0 0.0
    %2599 = vmatprep.subr.mxu0 0.0
    %2600 = vmatpush1.xpose.msra.mxu0 %v2569
    %2601 = vmatprep.subr.mxu0 0.0
    %2602 = vmatpush1.xpose.msra.mxu0 %v2566
    %2603 = vmatprep.subr.mxu0 0.0
    %2604 = vmatpush2.xpose.msra.mxu0 0.0
    %2605 = vmatprep.subr.mxu0 0.0
    %2606 = vmatpush2.xpose.msra.mxu0 0.0
    %2607 = vmatprep.subr.mxu0 0.0
    %2608 = vmatpush2.xpose.msra.mxu0 0.0
    %2609 = vmatprep.subr.mxu0 0.0
    %2610 = vmatpush2.xpose.msra.mxu0 0.0
    %2611 = vmatprep.subr.mxu0 0.0
    %2612 = vmatpush2.xpose.msra.mxu0 0.0
    %2613 = vmatprep.subr.mxu0 0.0
    %2614 = vmatpush2.xpose.msra.mxu0 0.0
    %2615 = vmatprep.subr.mxu0 0.0
    %2616 = vmatpush2.xpose.msra.mxu0 0.0
    %2617 = vmatprep.subr.mxu0 0.0
    %2618 = vmatpush2.xpose.msra.mxu0 0.0
    %2619 = vmatprep.subr.mxu0 0.0
    %2620 = vmatpush2.xpose.msra.mxu0 0.0
    %2621 = vmatprep.subr.mxu0 0.0
    %2622 = vmatpush2.xpose.msra.mxu0 0.0
    %2623 = vmatprep.subr.mxu0 0.0
    %2624 = vmatpush2.xpose.msra.mxu0 0.0
    %2625 = vmatprep.subr.mxu0 0.0
    %2626 = vmatpush2.xpose.msra.mxu0 0.0
    %2627 = vmatprep.subr.mxu0 0.0
    %2628 = vmatpush2.xpose.msra.mxu0 0.0
    %2629 = vmatprep.subr.mxu0 0.0
    %2630 = vmatpush2.xpose.msra.mxu0 0.0
    %2631 = vmatprep.subr.mxu0 0.0
    %2632 = vmatpush2.xpose.msra.mxu0 0.0
    %2633 = vmatprep.subr.mxu0 0.0
    %2634 = vmatpush2.xpose.msra.mxu0 0.0
    %2635 = vmatprep.mubr.f32.mxu0 0.0
    %2636 = vmatmul.mubr.f32.gmra.mxu0 %v2563
    %v2637 = vpop.f32.mrf.mxu0
    %v2638 = vadd.f32 0.0, %v2637
    %v2639 = vpop.f32.mrf.mxu0
    %2640 = vdwg.mxu0
    %2641 = vxpose.xlu0.b32.start [1/16] %v2401, 128
    %2642 = vxpose.xlu0.b32.cont [2/16] %v2480, 128
    %2643 = vxpose.xlu0.b32.cont [3/16] %v2559, 128
    %2644 = vxpose.xlu0.b32.cont [4/16] %v2638, 128
    %2645 = vxpose.xlu0.b32.cont [5/16] 0.0, 128
    %2646 = vxpose.xlu0.b32.cont [6/16] 0.0, 128
    %2647 = vxpose.xlu0.b32.cont [7/16] 0.0, 128
    %2648 = vxpose.xlu0.b32.cont [8/16] 0.0, 128
    %2649 = vxpose.xlu0.b32.cont [9/16] 0.0, 128
    %2650 = vxpose.xlu0.b32.cont [10/16] 0.0, 128
    %2651 = vxpose.xlu0.b32.cont [11/16] 0.0, 128
    %2652 = vxpose.xlu0.b32.cont [12/16] 0.0, 128
    %2653 = vxpose.xlu0.b32.cont [13/16] 0.0, 128
    %2654 = vxpose.xlu0.b32.cont [14/16] 0.0, 128
    %2655 = vxpose.xlu0.b32.cont [15/16] 0.0, 128
    %2656 = vxpose.xlu0.b32.end [16/16] 0.0, 128
    %v2657 = vpop.trf.xlu0
    %v2658 = vpop.trf.xlu0
    %v2659 = vpop.trf.xlu0
    %v2660 = vpop.trf.xlu0
    %v2661 = vpop.trf.xlu0
    %v2662 = vpop.trf.xlu0
    %v2663 = vpop.trf.xlu0
    %v2664 = vpop.trf.xlu0
    %v2665 = vpop.trf.xlu0
    %v2666 = vpop.trf.xlu0
    %v2667 = vpop.trf.xlu0
    %v2668 = vpop.trf.xlu0
    %v2669 = vpop.trf.xlu0
    %v2670 = vpop.trf.xlu0
    %v2671 = vpop.trf.xlu0
    %v2672 = vpop.trf.xlu0
    %v2673 = vld [vmem:[%s2 + $0xe0] sm:$0xff]
    %v2674 = vld [vmem:[%s2 + $0xe8] sm:$0xff]
    %v2675 = vld [vmem:[%s2 + $0xf0] sm:$0xff]
    %v2676 = vld [vmem:[%s2 + $0xf8] sm:$0xff]
    %v2677 = vld [vmem:[%s2 + $0x161] sm:$0x1]
    %v2678 = vlaneseq
    %v2679 = vshrl.u32 %v2678, 7
    %v2680 = vsub.s32 0, %v2679
    %v2681 = vrot.slane %v2677, %v2680
    %v2683 = vsel %vm97, %v2657, 0
    %v2686 = vsel %vm97, %v2658, 0
    %2688 = vmatprep.subr.mxu0 0.0
    %2689 = vmatpush1.msra.mxu0 0.0
    %2690 = vmatprep.subr.mxu0 0.0
    %2691 = vmatpush1.msra.mxu0 0.0
    %2692 = vmatprep.subr.mxu0 0.0
    %2693 = vmatpush1.msra.mxu0 0.0
    %2694 = vmatprep.subr.mxu0 0.0
    %2695 = vmatpush1.msra.mxu0 0.0
    %2696 = vmatprep.subr.mxu0 0.0
    %2697 = vmatpush1.msra.mxu0 0.0
    %2698 = vmatprep.subr.mxu0 0.0
    %2699 = vmatpush1.msra.mxu0 0.0
    %2700 = vmatprep.subr.mxu0 0.0
    %2701 = vmatpush1.msra.mxu0 0.0
    %2702 = vmatprep.subr.mxu0 0.0
    %2703 = vmatpush1.msra.mxu0 0.0
    %2704 = vmatprep.subr.mxu0 0.0
    %2705 = vmatpush1.msra.mxu0 0.0
    %2706 = vmatprep.subr.mxu0 0.0
    %2707 = vmatpush1.msra.mxu0 0.0
    %2708 = vmatprep.subr.mxu0 0.0
    %2709 = vmatpush1.msra.mxu0 0.0
    %2710 = vmatprep.subr.mxu0 0.0
    %2711 = vmatpush1.msra.mxu0 0.0
    %2712 = vmatprep.subr.mxu0 0.0
    %2713 = vmatpush1.msra.mxu0 %v2676
    %2714 = vmatprep.subr.mxu0 0.0
    %2715 = vmatpush1.msra.mxu0 %v2675
    %2716 = vmatprep.subr.mxu0 0.0
    %2717 = vmatpush1.msra.mxu0 %v2674
    %2718 = vmatprep.subr.mxu0 0.0
    %2719 = vmatpush1.msra.mxu0 %v2673
    %2720 = vmatprep.subr.mxu0 0.0
    %2721 = vmatpush2.msra.mxu0 0.0
    %2722 = vmatprep.subr.mxu0 0.0
    %2723 = vmatpush2.msra.mxu0 0.0
    %2724 = vmatprep.subr.mxu0 0.0
    %2725 = vmatpush2.msra.mxu0 0.0
    %2726 = vmatprep.subr.mxu0 0.0
    %2727 = vmatpush2.msra.mxu0 0.0
    %2728 = vmatprep.subr.mxu0 0.0
    %2729 = vmatpush2.msra.mxu0 0.0
    %2730 = vmatprep.subr.mxu0 0.0
    %2731 = vmatpush2.msra.mxu0 0.0
    %2732 = vmatprep.subr.mxu0 0.0
    %2733 = vmatpush2.msra.mxu0 0.0
    %2734 = vmatprep.subr.mxu0 0.0
    %2735 = vmatpush2.msra.mxu0 0.0
    %2736 = vmatprep.subr.mxu0 0.0
    %2737 = vmatpush2.msra.mxu0 0.0
    %2738 = vmatprep.subr.mxu0 0.0
    %2739 = vmatpush2.msra.mxu0 0.0
    %2740 = vmatprep.subr.mxu0 0.0
    %2741 = vmatpush2.msra.mxu0 0.0
    %2742 = vmatprep.subr.mxu0 0.0
    %2743 = vmatpush2.msra.mxu0 0.0
    %2744 = vmatprep.subr.mxu0 0.0
    %2745 = vmatpush2.msra.mxu0 0.0
    %2746 = vmatprep.subr.mxu0 0.0
    %2747 = vmatpush2.msra.mxu0 0.0
    %2748 = vmatprep.subr.mxu0 0.0
    %2749 = vmatpush2.msra.mxu0 0.0
    %2750 = vmatprep.subr.mxu0 0.0
    %2751 = vmatpush2.msra.mxu0 0.0
    %2752 = vmatprep.mubr.f32.mxu0 0.0
    %2753 = vmatmul.mubr.f32.gmra.mxu0 %v2683
    %v2754 = vpop.f32.mrf.mxu0
    %v2755 = vadd.f32 %v2681, %v2754
    %v2756 = vpop.f32.mrf.mxu0
    %2757 = vmatprep.mubr.f32.mxu0 0.0
    %2758 = vmatmul.mubr.f32.gmra.mxu0 %v2686
    %v2759 = vpop.f32.mrf.mxu0
    %v2760 = vadd.f32 %v2681, %v2759
    %v2761 = vpop.f32.mrf.mxu0
    %2762 = vdwg.mxu0
    %v2763 = vadd.f32 %v1463, %v2755
    %v2764 = vadd.f32 %v1464, %v2760
    %v2766 = vsel %vm97, %v2763, 0
    %v2769 = vsel %vm97, %v2764, 0
    %2771 = vmatprep.subr.mxu0 0.0
    %2772 = vmatpush1.msra.mxu0 0.0
    %2773 = vmatprep.subr.mxu0 0.0
    %2774 = vmatpush1.msra.mxu0 0.0
    %2775 = vmatprep.subr.mxu0 0.0
    %2776 = vmatpush1.msra.mxu0 0.0
    %2777 = vmatprep.subr.mxu0 0.0
    %2778 = vmatpush1.msra.mxu0 0.0
    %2779 = vmatprep.subr.mxu0 0.0
    %2780 = vmatpush1.msra.mxu0 0.0
    %2781 = vmatprep.subr.mxu0 0.0
    %2782 = vmatpush1.msra.mxu0 0.0
    %2783 = vmatprep.subr.mxu0 0.0
    %2784 = vmatpush1.msra.mxu0 0.0
    %2785 = vmatprep.subr.mxu0 0.0
    %2786 = vmatpush1.msra.mxu0 0.0
    %2787 = vmatprep.subr.mxu0 0.0
    %2788 = vmatpush1.msra.mxu0 0.0
    %2789 = vmatprep.subr.mxu0 0.0
    %2790 = vmatpush1.msra.mxu0 0.0
    %2791 = vmatprep.subr.mxu0 0.0
    %2792 = vmatpush1.msra.mxu0 0.0
    %2793 = vmatprep.subr.mxu0 0.0
    %2794 = vmatpush1.msra.mxu0 0.0
    %2795 = vmatprep.subr.mxu0 0.0
    %2796 = vmatpush1.msra.mxu0 1.0
    %2797 = vmatprep.subr.mxu0 0.0
    %2798 = vmatpush1.msra.mxu0 1.0
    %2799 = vmatprep.subr.mxu0 0.0
    %2800 = vmatpush1.msra.mxu0 1.0
    %2801 = vmatprep.subr.mxu0 0.0
    %2802 = vmatpush1.msra.mxu0 1.0
    %2803 = vmatprep.subr.mxu0 0.0
    %2804 = vmatpush2.msra.mxu0 0.0
    %2805 = vmatprep.subr.mxu0 0.0
    %2806 = vmatpush2.msra.mxu0 0.0
    %2807 = vmatprep.subr.mxu0 0.0
    %2808 = vmatpush2.msra.mxu0 0.0
    %2809 = vmatprep.subr.mxu0 0.0
    %2810 = vmatpush2.msra.mxu0 0.0
    %2811 = vmatprep.subr.mxu0 0.0
    %2812 = vmatpush2.msra.mxu0 0.0
    %2813 = vmatprep.subr.mxu0 0.0
    %2814 = vmatpush2.msra.mxu0 0.0
    %2815 = vmatprep.subr.mxu0 0.0
    %2816 = vmatpush2.msra.mxu0 0.0
    %2817 = vmatprep.subr.mxu0 0.0
    %2818 = vmatpush2.msra.mxu0 0.0
    %2819 = vmatprep.subr.mxu0 0.0
    %2820 = vmatpush2.msra.mxu0 0.0
    %2821 = vmatprep.subr.mxu0 0.0
    %2822 = vmatpush2.msra.mxu0 0.0
    %2823 = vmatprep.subr.mxu0 0.0
    %2824 = vmatpush2.msra.mxu0 0.0
    %2825 = vmatprep.subr.mxu0 0.0
    %2826 = vmatpush2.msra.mxu0 0.0
    %2827 = vmatprep.subr.mxu0 0.0
    %2828 = vmatpush2.msra.mxu0 0.0
    %2829 = vmatprep.subr.mxu0 0.0
    %2830 = vmatpush2.msra.mxu0 0.0
    %2831 = vmatprep.subr.mxu0 0.0
    %2832 = vmatpush2.msra.mxu0 0.0
    %2833 = vmatprep.subr.mxu0 0.0
    %2834 = vmatpush2.msra.mxu0 0.0
    %2835 = vmatprep.mubr.f32.mxu0 0.0
    %2836 = vmatmul.mubr.f32.gmra.mxu0 %v2766
    %v2837 = vpop.f32.mrf.mxu0
    %v2838 = vadd.f32 0.0, %v2837
    %v2839 = vpop.f32.mrf.mxu0
    %2840 = vmatprep.mubr.f32.mxu0 0.0
    %2841 = vmatmul.mubr.f32.gmra.mxu0 %v2769
    %v2842 = vpop.f32.mrf.mxu0
    %v2843 = vadd.f32 0.0, %v2842
    %v2844 = vpop.f32.mrf.mxu0
    %2845 = vdwg.mxu0
    %v2846 = vmul.f32 %v2763, %v2763
    %v2847 = vmul.f32 %v2764, %v2764
    %v2849 = vsel %vm97, %v2846, 0
    %v2852 = vsel %vm97, %v2847, 0
    %2854 = vmatprep.subr.mxu0 0.0
    %2855 = vmatpush1.msra.mxu0 0.0
    %2856 = vmatprep.subr.mxu0 0.0
    %2857 = vmatpush1.msra.mxu0 0.0
    %2858 = vmatprep.subr.mxu0 0.0
    %2859 = vmatpush1.msra.mxu0 0.0
    %2860 = vmatprep.subr.mxu0 0.0
    %2861 = vmatpush1.msra.mxu0 0.0
    %2862 = vmatprep.subr.mxu0 0.0
    %2863 = vmatpush1.msra.mxu0 0.0
    %2864 = vmatprep.subr.mxu0 0.0
    %2865 = vmatpush1.msra.mxu0 0.0
    %2866 = vmatprep.subr.mxu0 0.0
    %2867 = vmatpush1.msra.mxu0 0.0
    %2868 = vmatprep.subr.mxu0 0.0
    %2869 = vmatpush1.msra.mxu0 0.0
    %2870 = vmatprep.subr.mxu0 0.0
    %2871 = vmatpush1.msra.mxu0 0.0
    %2872 = vmatprep.subr.mxu0 0.0
    %2873 = vmatpush1.msra.mxu0 0.0
    %2874 = vmatprep.subr.mxu0 0.0
    %2875 = vmatpush1.msra.mxu0 0.0
    %2876 = vmatprep.subr.mxu0 0.0
    %2877 = vmatpush1.msra.mxu0 0.0
    %2878 = vmatprep.subr.mxu0 0.0
    %2879 = vmatpush1.msra.mxu0 1.0
    %2880 = vmatprep.subr.mxu0 0.0
    %2881 = vmatpush1.msra.mxu0 1.0
    %2882 = vmatprep.subr.mxu0 0.0
    %2883 = vmatpush1.msra.mxu0 1.0
    %2884 = vmatprep.subr.mxu0 0.0
    %2885 = vmatpush1.msra.mxu0 1.0
    %2886 = vmatprep.subr.mxu0 0.0
    %2887 = vmatpush2.msra.mxu0 0.0
    %2888 = vmatprep.subr.mxu0 0.0
    %2889 = vmatpush2.msra.mxu0 0.0
    %2890 = vmatprep.subr.mxu0 0.0
    %2891 = vmatpush2.msra.mxu0 0.0
    %2892 = vmatprep.subr.mxu0 0.0
    %2893 = vmatpush2.msra.mxu0 0.0
    %2894 = vmatprep.subr.mxu0 0.0
    %2895 = vmatpush2.msra.mxu0 0.0
    %2896 = vmatprep.subr.mxu0 0.0
    %2897 = vmatpush2.msra.mxu0 0.0
    %2898 = vmatprep.subr.mxu0 0.0
    %2899 = vmatpush2.msra.mxu0 0.0
    %2900 = vmatprep.subr.mxu0 0.0
    %2901 = vmatpush2.msra.mxu0 0.0
    %2902 = vmatprep.subr.mxu0 0.0
    %2903 = vmatpush2.msra.mxu0 0.0
    %2904 = vmatprep.subr.mxu0 0.0
    %2905 = vmatpush2.msra.mxu0 0.0
    %2906 = vmatprep.subr.mxu0 0.0
    %2907 = vmatpush2.msra.mxu0 0.0
    %2908 = vmatprep.subr.mxu0 0.0
    %2909 = vmatpush2.msra.mxu0 0.0
    %2910 = vmatprep.subr.mxu0 0.0
    %2911 = vmatpush2.msra.mxu0 0.0
    %2912 = vmatprep.subr.mxu0 0.0
    %2913 = vmatpush2.msra.mxu0 0.0
    %2914 = vmatprep.subr.mxu0 0.0
    %2915 = vmatpush2.msra.mxu0 0.0
    %2916 = vmatprep.subr.mxu0 0.0
    %2917 = vmatpush2.msra.mxu0 0.0
    %2918 = vmatprep.mubr.f32.mxu0 0.0
    %2919 = vmatmul.mubr.f32.gmra.mxu0 %v2849
    %v2920 = vpop.f32.mrf.mxu0
    %v2921 = vadd.f32 0.0, %v2920
    %v2922 = vpop.f32.mrf.mxu0
    %2923 = vmatprep.mubr.f32.mxu0 0.0
    %2924 = vmatmul.mubr.f32.gmra.mxu0 %v2852
    %v2925 = vpop.f32.mrf.mxu0
    %v2926 = vadd.f32 0.0, %v2925
    %v2927 = vpop.f32.mrf.mxu0
    %2928 = vdwg.mxu0
    %v2929 = vmul.f32 %v2838, 0.03125
    %v2930 = vmul.f32 %v2843, 0.03125
    %v2931 = vmul.f32 %v2921, 0.03125
    %v2932 = vmul.f32 %v2926, 0.03125
    %v2933 = vmul.f32 %v2929, %v2929
    %v2934 = vmul.f32 %v2930, %v2930
    %v2935 = vsub.f32 %v2931, %v2933
    %v2936 = vsub.f32 %v2932, %v2934
    %2938 = vset.pattern.permute.xlu0 0
    %2939 = vperm.xlu0 %2938, %v2929
    %v2940 = vpop.permute.xlu0 %2939
    %2943 = vset.pattern.permute.xlu0 0
    %2944 = vperm.xlu0 %2943, %v2930
    %v2945 = vpop.permute.xlu0 %2944
    %v2947 = vsub.f32 %v2763, %v2940
    %v2948 = vsub.f32 %v2764, %v2945
    %v2949 = vadd.f32 %v2935, 1e-05
    %v2950 = vadd.f32 %v2936, 1e-05
    %v2951 = vrsqrt.pop %v2949
    %v2952 = vrsqrt.pop %v2950
    %2954 = vset.pattern.permute.xlu0 0
    %2955 = vperm.xlu0 %2954, %v2951
    %v2956 = vpop.permute.xlu0 %2955
    %2959 = vset.pattern.permute.xlu0 0
    %2960 = vperm.xlu0 %2959, %v2952
    %v2961 = vpop.permute.xlu0 %2960
    %v2963 = vmul.f32 %v2947, %v2956
    %v2964 = vmul.f32 %v2948, %v2961
    %v2965 = vld [vmem:[%s2 + $0x166] sm:$0x1]
    %v2966 = vlaneseq
    %v2967 = vshrl.u32 %v2966, 7
    %v2968 = vsub.s32 0, %v2967
    %v2969 = vrot.slane %v2965, %v2968
    %v2970 = vmul.f32 %v2963, %v2969
    %v2971 = vmul.f32 %v2964, %v2969
    %v2972 = vld [vmem:[%s2 + $0x167] sm:$0x1]
    %v2973 = vlaneseq
    %v2974 = vshrl.u32 %v2973, 7
    %v2975 = vsub.s32 0, %v2974
    %v2976 = vrot.slane %v2972, %v2975
    %v2977 = vadd.f32 %v2970, %v2976
    %v2978 = vadd.f32 %v2971, %v2976
    %v2979 = vld [vmem:[%s2 + $0x100] sm:$0xff]
    %v2980 = vld [vmem:[%s2 + $0x108] sm:$0xff]
    %v2981 = vld [vmem:[%s2 + $0x110] sm:$0xff]
    %v2982 = vld [vmem:[%s2 + $0x118] sm:$0xff]
    %v2983 = vld [vmem:[%s2 + $0x162] sm:$0x1]
    %v2984 = vlaneseq
    %v2985 = vshrl.u32 %v2984, 7
    %v2986 = vsub.s32 0, %v2985
    %v2987 = vrot.slane %v2983, %v2986
    %v2989 = vsel %vm97, %v2977, 0
    %v2992 = vsel %vm97, %v2978, 0
    %2994 = vmatprep.subr.mxu0 0.0
    %2995 = vmatpush1.msra.mxu0 0.0
    %2996 = vmatprep.subr.mxu0 0.0
    %2997 = vmatpush1.msra.mxu0 0.0
    %2998 = vmatprep.subr.mxu0 0.0
    %2999 = vmatpush1.msra.mxu0 0.0
    %3000 = vmatprep.subr.mxu0 0.0
    %3001 = vmatpush1.msra.mxu0 0.0
    %3002 = vmatprep.subr.mxu0 0.0
    %3003 = vmatpush1.msra.mxu0 0.0
    %3004 = vmatprep.subr.mxu0 0.0
    %3005 = vmatpush1.msra.mxu0 0.0
    %3006 = vmatprep.subr.mxu0 0.0
    %3007 = vmatpush1.msra.mxu0 0.0
    %3008 = vmatprep.subr.mxu0 0.0
    %3009 = vmatpush1.msra.mxu0 0.0
    %3010 = vmatprep.subr.mxu0 0.0
    %3011 = vmatpush1.msra.mxu0 0.0
    %3012 = vmatprep.subr.mxu0 0.0
    %3013 = vmatpush1.msra.mxu0 0.0
    %3014 = vmatprep.subr.mxu0 0.0
    %3015 = vmatpush1.msra.mxu0 0.0
    %3016 = vmatprep.subr.mxu0 0.0
    %3017 = vmatpush1.msra.mxu0 0.0
    %3018 = vmatprep.subr.mxu0 0.0
    %3019 = vmatpush1.msra.mxu0 %v2982
    %3020 = vmatprep.subr.mxu0 0.0
    %3021 = vmatpush1.msra.mxu0 %v2981
    %3022 = vmatprep.subr.mxu0 0.0
    %3023 = vmatpush1.msra.mxu0 %v2980
    %3024 = vmatprep.subr.mxu0 0.0
    %3025 = vmatpush1.msra.mxu0 %v2979
    %3026 = vmatprep.subr.mxu0 0.0
    %3027 = vmatpush2.msra.mxu0 0.0
    %3028 = vmatprep.subr.mxu0 0.0
    %3029 = vmatpush2.msra.mxu0 0.0
    %3030 = vmatprep.subr.mxu0 0.0
    %3031 = vmatpush2.msra.mxu0 0.0
    %3032 = vmatprep.subr.mxu0 0.0
    %3033 = vmatpush2.msra.mxu0 0.0
    %3034 = vmatprep.subr.mxu0 0.0
    %3035 = vmatpush2.msra.mxu0 0.0
    %3036 = vmatprep.subr.mxu0 0.0
    %3037 = vmatpush2.msra.mxu0 0.0
    %3038 = vmatprep.subr.mxu0 0.0
    %3039 = vmatpush2.msra.mxu0 0.0
    %3040 = vmatprep.subr.mxu0 0.0
    %3041 = vmatpush2.msra.mxu0 0.0
    %3042 = vmatprep.subr.mxu0 0.0
    %3043 = vmatpush2.msra.mxu0 0.0
    %3044 = vmatprep.subr.mxu0 0.0
    %3045 = vmatpush2.msra.mxu0 0.0
    %3046 = vmatprep.subr.mxu0 0.0
    %3047 = vmatpush2.msra.mxu0 0.0
    %3048 = vmatprep.subr.mxu0 0.0
    %3049 = vmatpush2.msra.mxu0 0.0
    %3050 = vmatprep.subr.mxu0 0.0
    %3051 = vmatpush2.msra.mxu0 0.0
    %3052 = vmatprep.subr.mxu0 0.0
    %3053 = vmatpush2.msra.mxu0 0.0
    %3054 = vmatprep.subr.mxu0 0.0
    %3055 = vmatpush2.msra.mxu0 0.0
    %3056 = vmatprep.subr.mxu0 0.0
    %3057 = vmatpush2.msra.mxu0 0.0
    %3058 = vmatprep.mubr.f32.mxu0 0.0
    %3059 = vmatmul.mubr.f32.gmra.mxu0 %v2989
    %v3060 = vpop.f32.mrf.mxu0
    %v3061 = vadd.f32 %v2987, %v3060
    %v3062 = vpop.f32.mrf.mxu0
    %3063 = vmatprep.mubr.f32.mxu0 0.0
    %3064 = vmatmul.mubr.f32.gmra.mxu0 %v2992
    %v3065 = vpop.f32.mrf.mxu0
    %v3066 = vadd.f32 %v2987, %v3065
    %v3067 = vpop.f32.mrf.mxu0
    %3068 = vdwg.mxu0
    %v3069 = vmax.f32 %v3061, 0.0
    %v3070 = vmax.f32 %v3066, 0.0
    %v3071 = vld [vmem:[%s2 + $0x120] sm:$0xff]
    %v3072 = vld [vmem:[%s2 + $0x128] sm:$0xff]
    %v3073 = vld [vmem:[%s2 + $0x130] sm:$0xff]
    %v3074 = vld [vmem:[%s2 + $0x138] sm:$0xff]
    %v3075 = vld [vmem:[%s2 + $0x140] sm:$0xff]
    %v3076 = vld [vmem:[%s2 + $0x148] sm:$0xff]
    %v3077 = vld [vmem:[%s2 + $0x150] sm:$0xff]
    %v3078 = vld [vmem:[%s2 + $0x158] sm:$0xff]
    %v3079 = vld [vmem:[%s2 + $0x163] sm:$0x1]
    %v3080 = vlaneseq
    %v3081 = vshrl.u32 %v3080, 7
    %v3082 = vsub.s32 0, %v3081
    %v3083 = vrot.slane %v3079, %v3082
    %vm3084 = vcmask 523264
    %v3086 = vsel %vm3084, %v3069, 0
    %v3089 = vsel %vm3084, %v3070, 0
    %3091 = vmatprep.subr.mxu0 0.0
    %3092 = vmatpush1.msra.mxu0 0.0
    %3093 = vmatprep.subr.mxu0 0.0
    %3094 = vmatpush1.msra.mxu0 0.0
    %3095 = vmatprep.subr.mxu0 0.0
    %3096 = vmatpush1.msra.mxu0 0.0
    %3097 = vmatprep.subr.mxu0 0.0
    %3098 = vmatpush1.msra.mxu0 0.0
    %3099 = vmatprep.subr.mxu0 0.0
    %3100 = vmatpush1.msra.mxu0 0.0
    %3101 = vmatprep.subr.mxu0 0.0
    %3102 = vmatpush1.msra.mxu0 0.0
    %3103 = vmatprep.subr.mxu0 0.0
    %3104 = vmatpush1.msra.mxu0 0.0
    %3105 = vmatprep.subr.mxu0 0.0
    %3106 = vmatpush1.msra.mxu0 0.0
    %3107 = vmatprep.subr.mxu0 0.0
    %3108 = vmatpush1.msra.mxu0 %v3078
    %3109 = vmatprep.subr.mxu0 0.0
    %3110 = vmatpush1.msra.mxu0 %v3077
    %3111 = vmatprep.subr.mxu0 0.0
    %3112 = vmatpush1.msra.mxu0 %v3076
    %3113 = vmatprep.subr.mxu0 0.0
    %3114 = vmatpush1.msra.mxu0 %v3075
    %3115 = vmatprep.subr.mxu0 0.0
    %3116 = vmatpush1.msra.mxu0 %v3074
    %3117 = vmatprep.subr.mxu0 0.0
    %3118 = vmatpush1.msra.mxu0 %v3073
    %3119 = vmatprep.subr.mxu0 0.0
    %3120 = vmatpush1.msra.mxu0 %v3072
    %3121 = vmatprep.subr.mxu0 0.0
    %3122 = vmatpush1.msra.mxu0 %v3071
    %3123 = vmatprep.subr.mxu0 0.0
    %3124 = vmatpush2.msra.mxu0 0.0
    %3125 = vmatprep.subr.mxu0 0.0
    %3126 = vmatpush2.msra.mxu0 0.0
    %3127 = vmatprep.subr.mxu0 0.0
    %3128 = vmatpush2.msra.mxu0 0.0
    %3129 = vmatprep.subr.mxu0 0.0
    %3130 = vmatpush2.msra.mxu0 0.0
    %3131 = vmatprep.subr.mxu0 0.0
    %3132 = vmatpush2.msra.mxu0 0.0
    %3133 = vmatprep.subr.mxu0 0.0
    %3134 = vmatpush2.msra.mxu0 0.0
    %3135 = vmatprep.subr.mxu0 0.0
    %3136 = vmatpush2.msra.mxu0 0.0
    %3137 = vmatprep.subr.mxu0 0.0
    %3138 = vmatpush2.msra.mxu0 0.0
    %3139 = vmatprep.subr.mxu0 0.0
    %3140 = vmatpush2.msra.mxu0 0.0
    %3141 = vmatprep.subr.mxu0 0.0
    %3142 = vmatpush2.msra.mxu0 0.0
    %3143 = vmatprep.subr.mxu0 0.0
    %3144 = vmatpush2.msra.mxu0 0.0
    %3145 = vmatprep.subr.mxu0 0.0
    %3146 = vmatpush2.msra.mxu0 0.0
    %3147 = vmatprep.subr.mxu0 0.0
    %3148 = vmatpush2.msra.mxu0 0.0
    %3149 = vmatprep.subr.mxu0 0.0
    %3150 = vmatpush2.msra.mxu0 0.0
    %3151 = vmatprep.subr.mxu0 0.0
    %3152 = vmatpush2.msra.mxu0 0.0
    %3153 = vmatprep.subr.mxu0 0.0
    %3154 = vmatpush2.msra.mxu0 0.0
    %3155 = vmatprep.mubr.f32.mxu0 0.0
    %3156 = vmatmul.mubr.f32.gmra.mxu0 %v3086
    %v3157 = vpop.f32.mrf.mxu0
    %v3158 = vadd.f32 %v3083, %v3157
    %v3159 = vpop.f32.mrf.mxu0
    %3160 = vmatprep.mubr.f32.mxu0 0.0
    %3161 = vmatmul.mubr.f32.gmra.mxu0 %v3089
    %v3162 = vpop.f32.mrf.mxu0
    %v3163 = vadd.f32 %v3083, %v3162
    %v3164 = vpop.f32.mrf.mxu0
    %3165 = vdwg.mxu0
    %v3166 = vadd.f32 %v2977, %v3158
    %v3167 = vadd.f32 %v2978, %v3163
    %v3169 = vsel %vm97, %v3166, 0
    %v3172 = vsel %vm97, %v3167, 0
    %3174 = vmatprep.subr.mxu0 0.0
    %3175 = vmatpush1.msra.mxu0 0.0
    %3176 = vmatprep.subr.mxu0 0.0
    %3177 = vmatpush1.msra.mxu0 0.0
    %3178 = vmatprep.subr.mxu0 0.0
    %3179 = vmatpush1.msra.mxu0 0.0
    %3180 = vmatprep.subr.mxu0 0.0
    %3181 = vmatpush1.msra.mxu0 0.0
    %3182 = vmatprep.subr.mxu0 0.0
    %3183 = vmatpush1.msra.mxu0 0.0
    %3184 = vmatprep.subr.mxu0 0.0
    %3185 = vmatpush1.msra.mxu0 0.0
    %3186 = vmatprep.subr.mxu0 0.0
    %3187 = vmatpush1.msra.mxu0 0.0
    %3188 = vmatprep.subr.mxu0 0.0
    %3189 = vmatpush1.msra.mxu0 0.0
    %3190 = vmatprep.subr.mxu0 0.0
    %3191 = vmatpush1.msra.mxu0 0.0
    %3192 = vmatprep.subr.mxu0 0.0
    %3193 = vmatpush1.msra.mxu0 0.0
    %3194 = vmatprep.subr.mxu0 0.0
    %3195 = vmatpush1.msra.mxu0 0.0
    %3196 = vmatprep.subr.mxu0 0.0
    %3197 = vmatpush1.msra.mxu0 0.0
    %3198 = vmatprep.subr.mxu0 0.0
    %3199 = vmatpush1.msra.mxu0 1.0
    %3200 = vmatprep.subr.mxu0 0.0
    %3201 = vmatpush1.msra.mxu0 1.0
    %3202 = vmatprep.subr.mxu0 0.0
    %3203 = vmatpush1.msra.mxu0 1.0
    %3204 = vmatprep.subr.mxu0 0.0
    %3205 = vmatpush1.msra.mxu0 1.0
    %3206 = vmatprep.subr.mxu0 0.0
    %3207 = vmatpush2.msra.mxu0 0.0
    %3208 = vmatprep.subr.mxu0 0.0
    %3209 = vmatpush2.msra.mxu0 0.0
    %3210 = vmatprep.subr.mxu0 0.0
    %3211 = vmatpush2.msra.mxu0 0.0
    %3212 = vmatprep.subr.mxu0 0.0
    %3213 = vmatpush2.msra.mxu0 0.0
    %3214 = vmatprep.subr.mxu0 0.0
    %3215 = vmatpush2.msra.mxu0 0.0
    %3216 = vmatprep.subr.mxu0 0.0
    %3217 = vmatpush2.msra.mxu0 0.0
    %3218 = vmatprep.subr.mxu0 0.0
    %3219 = vmatpush2.msra.mxu0 0.0
    %3220 = vmatprep.subr.mxu0 0.0
    %3221 = vmatpush2.msra.mxu0 0.0
    %3222 = vmatprep.subr.mxu0 0.0
    %3223 = vmatpush2.msra.mxu0 0.0
    %3224 = vmatprep.subr.mxu0 0.0
    %3225 = vmatpush2.msra.mxu0 0.0
    %3226 = vmatprep.subr.mxu0 0.0
    %3227 = vmatpush2.msra.mxu0 0.0
    %3228 = vmatprep.subr.mxu0 0.0
    %3229 = vmatpush2.msra.mxu0 0.0
    %3230 = vmatprep.subr.mxu0 0.0
    %3231 = vmatpush2.msra.mxu0 0.0
    %3232 = vmatprep.subr.mxu0 0.0
    %3233 = vmatpush2.msra.mxu0 0.0
    %3234 = vmatprep.subr.mxu0 0.0
    %3235 = vmatpush2.msra.mxu0 0.0
    %3236 = vmatprep.subr.mxu0 0.0
    %3237 = vmatpush2.msra.mxu0 0.0
    %3238 = vmatprep.mubr.f32.mxu0 0.0
    %3239 = vmatmul.mubr.f32.gmra.mxu0 %v3169
    %v3240 = vpop.f32.mrf.mxu0
    %v3241 = vadd.f32 0.0, %v3240
    %v3242 = vpop.f32.mrf.mxu0
    %3243 = vmatprep.mubr.f32.mxu0 0.0
    %3244 = vmatmul.mubr.f32.gmra.mxu0 %v3172
    %v3245 = vpop.f32.mrf.mxu0
    %v3246 = vadd.f32 0.0, %v3245
    %v3247 = vpop.f32.mrf.mxu0
    %3248 = vdwg.mxu0
    %v3249 = vmul.f32 %v3166, %v3166
    %v3250 = vmul.f32 %v3167, %v3167
    %v3252 = vsel %vm97, %v3249, 0
    %v3255 = vsel %vm97, %v3250, 0
    %3257 = vmatprep.subr.mxu0 0.0
    %3258 = vmatpush1.msra.mxu0 0.0
    %3259 = vmatprep.subr.mxu0 0.0
    %3260 = vmatpush1.msra.mxu0 0.0
    %3261 = vmatprep.subr.mxu0 0.0
    %3262 = vmatpush1.msra.mxu0 0.0
    %3263 = vmatprep.subr.mxu0 0.0
    %3264 = vmatpush1.msra.mxu0 0.0
    %3265 = vmatprep.subr.mxu0 0.0
    %3266 = vmatpush1.msra.mxu0 0.0
    %3267 = vmatprep.subr.mxu0 0.0
    %3268 = vmatpush1.msra.mxu0 0.0
    %3269 = vmatprep.subr.mxu0 0.0
    %3270 = vmatpush1.msra.mxu0 0.0
    %3271 = vmatprep.subr.mxu0 0.0
    %3272 = vmatpush1.msra.mxu0 0.0
    %3273 = vmatprep.subr.mxu0 0.0
    %3274 = vmatpush1.msra.mxu0 0.0
    %3275 = vmatprep.subr.mxu0 0.0
    %3276 = vmatpush1.msra.mxu0 0.0
    %3277 = vmatprep.subr.mxu0 0.0
    %3278 = vmatpush1.msra.mxu0 0.0
    %3279 = vmatprep.subr.mxu0 0.0
    %3280 = vmatpush1.msra.mxu0 0.0
    %3281 = vmatprep.subr.mxu0 0.0
    %3282 = vmatpush1.msra.mxu0 1.0
    %3283 = vmatprep.subr.mxu0 0.0
    %3284 = vmatpush1.msra.mxu0 1.0
    %3285 = vmatprep.subr.mxu0 0.0
    %3286 = vmatpush1.msra.mxu0 1.0
    %3287 = vmatprep.subr.mxu0 0.0
    %3288 = vmatpush1.msra.mxu0 1.0
    %3289 = vmatprep.subr.mxu0 0.0
    %3290 = vmatpush2.msra.mxu0 0.0
    %3291 = vmatprep.subr.mxu0 0.0
    %3292 = vmatpush2.msra.mxu0 0.0
    %3293 = vmatprep.subr.mxu0 0.0
    %3294 = vmatpush2.msra.mxu0 0.0
    %3295 = vmatprep.subr.mxu0 0.0
    %3296 = vmatpush2.msra.mxu0 0.0
    %3297 = vmatprep.subr.mxu0 0.0
    %3298 = vmatpush2.msra.mxu0 0.0
    %3299 = vmatprep.subr.mxu0 0.0
    %3300 = vmatpush2.msra.mxu0 0.0
    %3301 = vmatprep.subr.mxu0 0.0
    %3302 = vmatpush2.msra.mxu0 0.0
    %3303 = vmatprep.subr.mxu0 0.0
    %3304 = vmatpush2.msra.mxu0 0.0
    %3305 = vmatprep.subr.mxu0 0.0
    %3306 = vmatpush2.msra.mxu0 0.0
    %3307 = vmatprep.subr.mxu0 0.0
    %3308 = vmatpush2.msra.mxu0 0.0
    %3309 = vmatprep.subr.mxu0 0.0
    %3310 = vmatpush2.msra.mxu0 0.0
    %3311 = vmatprep.subr.mxu0 0.0
    %3312 = vmatpush2.msra.mxu0 0.0
    %3313 = vmatprep.subr.mxu0 0.0
    %3314 = vmatpush2.msra.mxu0 0.0
    %3315 = vmatprep.subr.mxu0 0.0
    %3316 = vmatpush2.msra.mxu0 0.0
    %3317 = vmatprep.subr.mxu0 0.0
    %3318 = vmatpush2.msra.mxu0 0.0
    %3319 = vmatprep.subr.mxu0 0.0
    %3320 = vmatpush2.msra.mxu0 0.0
    %3321 = vmatprep.mubr.f32.mxu0 0.0
    %3322 = vmatmul.mubr.f32.gmra.mxu0 %v3252
    %v3323 = vpop.f32.mrf.mxu0
    %v3324 = vadd.f32 0.0, %v3323
    %v3325 = vpop.f32.mrf.mxu0
    %3326 = vmatprep.mubr.f32.mxu0 0.0
    %3327 = vmatmul.mubr.f32.gmra.mxu0 %v3255
    %v3328 = vpop.f32.mrf.mxu0
    %v3329 = vadd.f32 0.0, %v3328
    %v3330 = vpop.f32.mrf.mxu0
    %3331 = vdwg.mxu0
    %v3332 = vmul.f32 %v3241, 0.03125
    %v3333 = vmul.f32 %v3246, 0.03125
    %v3334 = vmul.f32 %v3324, 0.03125
    %v3335 = vmul.f32 %v3329, 0.03125
    %v3336 = vmul.f32 %v3332, %v3332
    %v3337 = vmul.f32 %v3333, %v3333
    %v3338 = vsub.f32 %v3334, %v3336
    %v3339 = vsub.f32 %v3335, %v3337
    %3341 = vset.pattern.permute.xlu0 0
    %3342 = vperm.xlu0 %3341, %v3332
    %v3343 = vpop.permute.xlu0 %3342
    %3346 = vset.pattern.permute.xlu0 0
    %3347 = vperm.xlu0 %3346, %v3333
    %v3348 = vpop.permute.xlu0 %3347
    %v3350 = vsub.f32 %v3166, %v3343
    %v3351 = vsub.f32 %v3167, %v3348
    %v3352 = vadd.f32 %v3338, 1e-05
    %v3353 = vadd.f32 %v3339, 1e-05
    %v3354 = vrsqrt.pop %v3352
    %v3355 = vrsqrt.pop %v3353
    %3357 = vset.pattern.permute.xlu0 0
    %3358 = vperm.xlu0 %3357, %v3354
    %v3359 = vpop.permute.xlu0 %3358
    %3362 = vset.pattern.permute.xlu0 0
    %3363 = vperm.xlu0 %3362, %v3355
    %v3364 = vpop.permute.xlu0 %3363
    %v3366 = vmul.f32 %v3350, %v3359
    %v3367 = vmul.f32 %v3351, %v3364
    %v3368 = vld [vmem:[%s2 + $0x168] sm:$0x1]
    %v3369 = vlaneseq
    %v3370 = vshrl.u32 %v3369, 7
    %v3371 = vsub.s32 0, %v3370
    %v3372 = vrot.slane %v3368, %v3371
    %v3373 = vmul.f32 %v3366, %v3372
    %v3374 = vmul.f32 %v3367, %v3372
    %v3375 = vld [vmem:[%s2 + $0x169] sm:$0x1]
    %v3376 = vlaneseq
    %v3377 = vshrl.u32 %v3376, 7
    %v3378 = vsub.s32 0, %v3377
    %v3379 = vrot.slane %v3375, %v3378
    %v3380 = vadd.f32 %v3373, %v3379
    %v3381 = vadd.f32 %v3374, %v3379
    %3382 = vst.msk [vmem:[#allocation2] sm:$0xff] %vm97, %v3380
    %3383 = vst.msk [vmem:[#allocation2 + $0x8] sm:$0xff] %vm97, %v3381
    // Predicated region
    $region14: #{decoder_layer_forward.1} parent=1 // pred_check
      _
    $region15: #{decoder_layer_forward.1} parent=1 // pred_check_branch
      %3385 = sbr.rel (0) target = $region17
    $region16: #{decoder_layer_forward.1} parent=1 // pred_region
      %s3387 = ssub.s32 256, 256
      %3388 = vsyncadd [#allocation3], %s3387
      %s3389 = sshll.u32 [#allocation2], 4
      %s3390 = int_to_ptr.vmem [resolvable:$true] %s3389
      %3395 = dma.vmem_to_hbm [thread:$0]  %s3390, 256, %s3, [#allocation3], 128, 128, 8
    $region17: #{decoder_layer_forward.1} parent=1 // pred_fallthru
      _
    // Predicated region
    $region18: #{decoder_layer_forward.1} parent=1 // pred_check
      _
    $region19: #{decoder_layer_forward.1} parent=1 // pred_check_branch
      %3397 = sbr.rel (0) target = $region21
    $region20: #{decoder_layer_forward.1} parent=1 // pred_region
      %3398 = dma.done [#allocation3], 256
    $region21: #{decoder_layer_forward.1} parent=1 // pred_fallthru
      _
    %3399 = vsyncpa [#allocation3], 1

</llo_original>
